<compile_context>
chip_gen: v7x
topology: tpu7x:2x2x1
jax: 0.10.0
libtpu: 0.0.40
codegen_flags: <defaults>
</compile_context>

<pallas_src>
import numpy as np

import jax
import jax.numpy as jnp
from jax.experimental import pallas as pl
from jax.experimental.pallas import tpu as pltpu


# ----------------------------------------------------------------------------
# Wrapper-side layout helpers (cheap XLA ops on KB-sized tensors).
# ----------------------------------------------------------------------------
def _phase_decompose(a_nthwc):
    """(N, T, H, W, C) -> (N, 4*T, H//2+1, W//2+1, C).

    Parity phases of the zero-padded (pad=1) slabs, packed as (2h%2+w%2)*T + t,
    so a stride-2 3x3 tap (kh, kw) is the contiguous slice
      phases[n, p*T:(p+1)*T, kh//2:kh//2+Ho, kw//2:kw//2+Wo, :],
    p = 2*(kh%2) + (kw%2).
    """
    N, T, H, W, C = a_nthwc.shape
    # TODO(synk): PyTorch Conv3d(stride=2, pad=1) also supports odd H/W; this
    # space-to-depth path requires them to be even.
    assert H % 2 == 0 and W % 2 == 0
    Hh, Wh = H // 2 + 1, W // 2 + 1
    xp = jnp.pad(a_nthwc, ((0, 0), (0, 0), (1, 1), (1, 1), (0, 0)))
    xr = xp.reshape(N, T, Hh, 2, Wh, 2, C)
    # (N, ph, pw, T, Hh, Wh, C) -> (N, 4*T, Hh, Wh, C)
    return jnp.transpose(xr, (0, 3, 5, 1, 2, 4, 6)).reshape(N, 4 * T, Hh, Wh, C)


def _boundary_mask(T, Ho, Wo):
    """Static (M, 9) f32 mask: tap k of the stride-1 3x3 conv is valid for
    flattened output row m (zero-padding boundary handling)."""
    m = np.arange(T * Ho * Wo)
    hh = (m // Wo) % Ho
    ww = m % Wo
    cols = []
    for kh in range(3):
        for kw in range(3):
            dh, dw = kh - 1, kw - 1
            cols.append(((hh + dh >= 0) & (hh + dh < Ho) &
                         (ww + dw >= 0) & (ww + dw < Wo)).astype(np.float32))
    return jnp.asarray(np.stack(cols, axis=1))


# ----------------------------------------------------------------------------
# Fused block kernel:
#   Conv3d(k=(1,3,3), s=(1,2,2), p=(0,1,1)) + bias + InstanceNorm3d + LeakyReLU
#   (and, for the last block, the final stride-1 Conv3d(C -> 1) as well).
# ----------------------------------------------------------------------------
def _make_block_kernel(T, Ho, Wo, Cin, Cout, fuse_final=False):
    M = T * Ho * Wo          # matmul M dimension == InstanceNorm reduction set
    P = Wo + 1               # row padding for the fused final conv

    def conv_norm_lrelu(x_ref, w_ref, b_ref, col_ref):
        # im2col: write the 9 contiguous taps once into a (M, 9*Cin) VMEM
        # scratch, then a single MXU matmul with K = 9*Cin.
        for kh in range(3):
            for kw in range(3):
                p = 2 * (kh % 2) + (kw % 2)          # parity phase
                oh, ow = kh // 2, kw // 2            # offset inside the phase
                k = kh * 3 + kw
                tap = x_ref[0, p * T:(p + 1) * T, oh:oh + Ho, ow:ow + Wo, :]
                col_ref[:, k * Cin:(k + 1) * Cin] = tap.reshape(M, Cin)
        acc = jnp.dot(col_ref[...], w_ref[...],
                      preferred_element_type=jnp.float32)
        acc = acc + b_ref[...]                       # (M, Cout)
        # InstanceNorm3d(affine=False, eps=1e-5): per-channel stats over all
        # T*Ho*Wo rows of this sample, one pass (sum / sum-of-squares) in f32.
        s1 = jnp.sum(acc, axis=0, keepdims=True)
        s2 = jnp.sum(acc * acc, axis=0, keepdims=True)
        mean = s1 * (1.0 / M)
        var = s2 * (1.0 / M) - mean * mean
        y = (acc - mean) * jax.lax.rsqrt(var + 1e-5)
        return jnp.where(y >= 0.0, y, 0.2 * y)       # LeakyReLU(0.2)

    if not fuse_final:
        def kernel(x_ref, w_ref, b_ref, o_ref, col_ref):
            y = conv_norm_lrelu(x_ref, w_ref, b_ref, col_ref)
            o_ref[0] = y.astype(o_ref.dtype)
        return kernel

    def kernel(x_ref, w_ref, b_ref, wf_ref, bf_ref, mask_ref,
               o_ref, of_ref, col_ref, row_ref, col2_ref):
        y = conv_norm_lrelu(x_ref, w_ref, b_ref, col_ref)
        o_ref[0] = y.astype(o_ref.dtype)

        # ---- fused final Conv3d(Cout -> 1, k=(1,3,3), s=1, p=(0,1,1)) ----
        # Stride-1 taps are constant row-shifts of the flattened (t*h*w, C)
        # activation; boundary taps are zeroed with a precomputed mask.  The
        # 1-wide contraction runs on the VPU (multiply + lane reduction), not
        # as a 1-column MXU pass.
        row_ref[...] = jnp.zeros_like(row_ref)
        row_ref[P:P + M, :] = y
        for kh in range(3):
            for kw in range(3):
                k = kh * 3 + kw
                off = P + (kh - 1) * Wo + (kw - 1)
                tap = row_ref[off:off + M, :]                 # (M, Cout)
                col2_ref[:, k * Cout:(k + 1) * Cout] = tap * mask_ref[:, k:k + 1]
        fin = jnp.sum(col2_ref[...] * wf_ref[...], axis=1, keepdims=True)
        of_ref[0] = (fin + bf_ref[...]).astype(of_ref.dtype)

    return kernel


def _run_block(phases, w, b, final_params=None):
    """One discriminator block on phase-decomposed input.

    phases : (N, 4*T, Hh, Wh, Cin) with Hh = Ho+1, Wh = Wo+1
    w, b   : (3, 3, Cin, Cout), (Cout,)
    final_params : (wf (3,3,Cout,1), bf (1,)) -> also emit the final conv.
    """
    N, FT, Hh, Wh, Cin = phases.shape
    T = FT // 4
    Ho, Wo = Hh - 1, Wh - 1
    Cout = w.shape[-1]
    M = T * Ho * Wo

    w2 = w.reshape(9 * Cin, Cout)
    b2 = b.reshape(1, Cout)

    x_spec = pl.BlockSpec((1, 4 * T, Hh, Wh, Cin), lambda n: (n, 0, 0, 0, 0))
    w_spec = pl.BlockSpec((9 * Cin, Cout), lambda n: (0, 0))
    b_spec = pl.BlockSpec((1, Cout), lambda n: (0, 0))
    o_spec = pl.BlockSpec((1, M, Cout), lambda n: (n, 0, 0))
    cparams = pltpu.CompilerParams(dimension_semantics=("parallel",))

    if final_params is None:
        kernel = _make_block_kernel(T, Ho, Wo, Cin, Cout, fuse_final=False)
        return pl.pallas_call(
            kernel,
            out_shape=jax.ShapeDtypeStruct((N, M, Cout), jnp.float32),
            grid_spec=pltpu.PrefetchScalarGridSpec(
                num_scalar_prefetch=0,
                grid=(N,),
                in_specs=[x_spec, w_spec, b_spec],
                out_specs=o_spec,
                scratch_shapes=[pltpu.VMEM((M, 9 * Cin), jnp.float32)]),
            compiler_params=cparams,
        )(phases, w2, b2)

    wf, bf = final_params
    wf2 = wf.reshape(9 * Cout, 1).T          # (1, 9*Cout)
    bf2 = bf.reshape(1, 1)
    mask = _boundary_mask(T, Ho, Wo)         # (M, 9) static constant
    P = Wo + 1
    kernel = _make_block_kernel(T, Ho, Wo, Cin, Cout, fuse_final=True)
    return pl.pallas_call(
        kernel,
        out_shape=(jax.ShapeDtypeStruct((N, M, Cout), jnp.float32),
                   jax.ShapeDtypeStruct((N, M, 1), jnp.float32)),
        grid_spec=pltpu.PrefetchScalarGridSpec(
            num_scalar_prefetch=0,
            grid=(N,),
            in_specs=[x_spec, w_spec, b_spec,
                      pl.BlockSpec((1, 9 * Cout), lambda n: (0, 0)),
                      pl.BlockSpec((1, 1), lambda n: (0, 0)),
                      pl.BlockSpec((M, 9), lambda n: (0, 0))],
            out_specs=[o_spec, pl.BlockSpec((1, M, 1), lambda n: (n, 0, 0))],
            scratch_shapes=[pltpu.VMEM((M, 9 * Cin), jnp.float32),
                            pltpu.VMEM((M + 2 * P, Cout), jnp.float32),
                            pltpu.VMEM((M, 9 * Cout), jnp.float32)]),
        compiler_params=cparams,
    )(phases, w2, b2, wf2, bf2, mask)


# ----------------------------------------------------------------------------
# LocalDiscriminator forward (returns predict[1:], one output per block).
# ----------------------------------------------------------------------------
def local_discriminator_forward(x_ncdhw, params, n_layers):
    """params = [(w_hwio(3,3,Cin,Cout), b(Cout,))]*n_layers + [(wf, bf)] final."""
    # TODO(synk): only the 'instance' norm option is implemented; the 'batch'
    # (BatchNorm3d, affine + running statistics) variant is not translated.
    # TODO(synk): D_n_layers == 0 (final conv only) is not supported here.
    assert n_layers >= 1
    N, C, T, H, W = x_ncdhw.shape
    cur = jnp.transpose(x_ncdhw, (0, 2, 3, 4, 1))         # (N, T, H, W, C)
    outputs = []
    fin = None
    Ho = Wo = None
    for li in range(n_layers):
        w, b = params[li]
        Cout = w.shape[-1]
        Ho, Wo = cur.shape[2] // 2, cur.shape[3] // 2
        phases = _phase_decompose(cur)
        if li == n_layers - 1:
            y, fin = _run_block(phases, w, b, final_params=params[-1])
        else:
            y = _run_block(phases, w, b)
        y5 = y.reshape(N, T, Ho, Wo, Cout)
        outputs.append(jnp.transpose(y5, (0, 4, 1, 2, 3)))  # NCDHW
        cur = y5
    outputs.append(jnp.transpose(fin.reshape(N, T, Ho, Wo, 1), (0, 4, 1, 2, 3)))
    return outputs


# ----------------------------------------------------------------------------
# Pure-JAX reference (used only for the correctness check in __main__).
# ----------------------------------------------------------------------------
def _ref_conv(x_ncdhw, w_hwio, b, stride):
    N, C, T, H, W = x_ncdhw.shape
    x2 = jnp.transpose(x_ncdhw, (0, 2, 1, 3, 4)).reshape(N * T, C, H, W)
    w_oihw = jnp.transpose(w_hwio, (3, 2, 0, 1))
    y = jax.lax.conv_general_dilated(
        x2, w_oihw, window_strides=(stride, stride),
        padding=((1, 1), (1, 1)),
        dimension_numbers=("NCHW", "OIHW", "NCHW"),
        precision=jax.lax.Precision.HIGHEST)
    y = y + b[None, :, None, None]
    Co, Ho, Wo = y.shape[1:]
    return jnp.transpose(y.reshape(N, T, Co, Ho, Wo), (0, 2, 1, 3, 4))


def _ref_forward(x, params, n_layers):
    outs, cur = [], x
    for li in range(n_layers):
        w, b = params[li]
        cur = _ref_conv(cur, w, b, 2)
        mean = jnp.mean(cur, axis=(2, 3, 4), keepdims=True)
        var = jnp.mean((cur - mean) ** 2, axis=(2, 3, 4), keepdims=True)
        cur = (cur - mean) * jax.lax.rsqrt(var + 1e-5)
        cur = jnp.where(cur >= 0.0, cur, 0.2 * cur)
        outs.append(cur)
    w, b = params[-1]
    outs.append(_ref_conv(cur, w, b, 1))
    return outs


if __name__ == "__main__":
    # opt: output_nc=4, ndf=8, D_n_layers=2, norm='instance'
    N, C_in, T, H, W = 2, 4, 4, 16, 16
    ndf, n_layers = 8, 2

    key = jax.random.PRNGKey(0)
    key, kx = jax.random.split(key)
    x = jax.random.normal(kx, (N, C_in, T, H, W), dtype=jnp.float32)

    params = []
    nf_prev, nf = C_in, ndf
    for _ in range(n_layers):
        key, k_w, k_b = jax.random.split(key, 3)
        params.append((
            jax.random.normal(k_w, (3, 3, nf_prev, nf), jnp.float32)
            * (1.0 / (3.0 * nf_prev ** 0.5)),
            0.1 * jax.random.normal(k_b, (nf,), jnp.float32)))
        nf_prev, nf = nf, min(nf * 2, 512)
    key, k_w, k_b = jax.random.split(key, 3)
    params.append((
        jax.random.normal(k_w, (3, 3, nf_prev, 1), jnp.float32)
        * (1.0 / (3.0 * nf_prev ** 0.5)),
        0.1 * jax.random.normal(k_b, (1,), jnp.float32)))

    fwd = jax.jit(lambda xx, pp: local_discriminator_forward(xx, pp, n_layers))
    outs = jax.block_until_ready(fwd(x, params))

    refs = _ref_forward(x, params, n_layers)
    expected = [(N, ndf, T, H // 2, W // 2),
                (N, min(2 * ndf, 512), T, H // 4, W // 4),
                (N, 1, T, H // 4, W // 4)]
    assert len(outs) == n_layers + 1
    for o, r, s in zip(outs, refs, expected):
        assert o.shape == s, (o.shape, s)
        err = float(jnp.max(jnp.abs(o - r)))
        assert err < 5e-2, err

    print("KERNEL_OK")
</pallas_src>

<mosaic_0001>
module attributes {stable_mosaic.version = 11 : i64} {
  func.func @kernel(%arg0: i32, %arg1: memref<1x16x9x9x4xf32, #tpu.memory_space<vmem>>, %arg2: memref<36x8xf32, #tpu.memory_space<vmem>>, %arg3: memref<1x8xf32, #tpu.memory_space<vmem>>, %arg4: memref<1x256x8xf32, #tpu.memory_space<vmem>>, %arg5: memref<256x36xf32, #tpu.memory_space<vmem>>) attributes {dimension_semantics = [#tpu.dimension_semantics<parallel>], iteration_bounds = array<i64: 2>, scalar_prefetch = 0 : i64, scratch_operands = 1 : i64, tpu.core_type = #tpu.core_type<tc>, window_params = [{transform_indices = @transform_0, window_bounds = array<i64: 1, 16, 9, 9, 4>}, {pipeline_mode = #tpu.pipeline_mode<synchronous>, transform_indices = @transform_1, window_bounds = array<i64: 36, 8>}, {pipeline_mode = #tpu.pipeline_mode<synchronous>, transform_indices = @transform_2, window_bounds = array<i64: 1, 8>}, {transform_indices = @transform_3, window_bounds = array<i64: 1, 256, 8>}]} {
    %c0 = arith.constant 0 : index
    %c0_0 = arith.constant 0 : index
    %c0_1 = arith.constant 0 : index
    %c0_2 = arith.constant 0 : index
    %c0_3 = arith.constant 0 : index
    %0 = vector.load %arg1[%c0, %c0_0, %c0_1, %c0_2, %c0_3] : memref<1x16x9x9x4xf32, #tpu.memory_space<vmem>>, vector<1x4x8x8x4xf32>
    %1 = vector.shape_cast %0 : vector<1x4x8x8x4xf32> to vector<4x8x8x4xf32>
    %2 = vector.shape_cast %1 : vector<4x8x8x4xf32> to vector<256x4xf32>
    %c0_4 = arith.constant 0 : index
    %c0_5 = arith.constant 0 : index
    %3 = vector.load %arg5[%c0_4, %c0_5] : memref<256x36xf32, #tpu.memory_space<vmem>>, vector<256x4xf32>
    tpu.vector_store %arg5[%c0_4, %c0_5], %2 {strides = array<i32>} : memref<256x36xf32, #tpu.memory_space<vmem>>, vector<256x4xf32>,
    %c0_6 = arith.constant 0 : index
    %c4 = arith.constant 4 : index
    %c0_7 = arith.constant 0 : index
    %c0_8 = arith.constant 0 : index
    %c0_9 = arith.constant 0 : index
    %4 = vector.load %arg1[%c0_6, %c4, %c0_7, %c0_8, %c0_9] : memref<1x16x9x9x4xf32, #tpu.memory_space<vmem>>, vector<1x4x8x8x4xf32>
    %5 = vector.shape_cast %4 : vector<1x4x8x8x4xf32> to vector<4x8x8x4xf32>
    %6 = vector.shape_cast %5 : vector<4x8x8x4xf32> to vector<256x4xf32>
    %c0_10 = arith.constant 0 : index
    %c4_11 = arith.constant 4 : index
    %7 = vector.load %arg5[%c0_10, %c4_11] : memref<256x36xf32, #tpu.memory_space<vmem>>, vector<256x4xf32>
    tpu.vector_store %arg5[%c0_10, %c4_11], %6 {strides = array<i32>} : memref<256x36xf32, #tpu.memory_space<vmem>>, vector<256x4xf32>,
    %c0_12 = arith.constant 0 : index
    %c0_13 = arith.constant 0 : index
    %c0_14 = arith.constant 0 : index
    %c1 = arith.constant 1 : index
    %c0_15 = arith.constant 0 : index
    %8 = vector.load %arg1[%c0_12, %c0_13, %c0_14, %c1, %c0_15] : memref<1x16x9x9x4xf32, #tpu.memory_space<vmem>>, vector<1x4x8x8x4xf32>
    %9 = vector.shape_cast %8 : vector<1x4x8x8x4xf32> to vector<4x8x8x4xf32>
    %10 = vector.shape_cast %9 : vector<4x8x8x4xf32> to vector<256x4xf32>
    %c0_16 = arith.constant 0 : index
    %c8 = arith.constant 8 : index
    %11 = vector.load %arg5[%c0_16, %c8] : memref<256x36xf32, #tpu.memory_space<vmem>>, vector<256x4xf32>
    tpu.vector_store %arg5[%c0_16, %c8], %10 {strides = array<i32>} : memref<256x36xf32, #tpu.memory_space<vmem>>, vector<256x4xf32>,
    %c0_17 = arith.constant 0 : index
    %c8_18 = arith.constant 8 : index
    %c0_19 = arith.constant 0 : index
    %c0_20 = arith.constant 0 : index
    %c0_21 = arith.constant 0 : index
    %12 = vector.load %arg1[%c0_17, %c8_18, %c0_19, %c0_20, %c0_21] : memref<1x16x9x9x4xf32, #tpu.memory_space<vmem>>, vector<1x4x8x8x4xf32>
    %13 = vector.shape_cast %12 : vector<1x4x8x8x4xf32> to vector<4x8x8x4xf32>
    %14 = vector.shape_cast %13 : vector<4x8x8x4xf32> to vector<256x4xf32>
    %c0_22 = arith.constant 0 : index
    %c12 = arith.constant 12 : index
    %15 = vector.load %arg5[%c0_22, %c12] : memref<256x36xf32, #tpu.memory_space<vmem>>, vector<256x4xf32>
    tpu.vector_store %arg5[%c0_22, %c12], %14 {strides = array<i32>} : memref<256x36xf32, #tpu.memory_space<vmem>>, vector<256x4xf32>,
    %c0_23 = arith.constant 0 : index
    %c12_24 = arith.constant 12 : index
    %c0_25 = arith.constant 0 : index
    %c0_26 = arith.constant 0 : index
    %c0_27 = arith.constant 0 : index
    %16 = vector.load %arg1[%c0_23, %c12_24, %c0_25, %c0_26, %c0_27] : memref<1x16x9x9x4xf32, #tpu.memory_space<vmem>>, vector<1x4x8x8x4xf32>
    %17 = vector.shape_cast %16 : vector<1x4x8x8x4xf32> to vector<4x8x8x4xf32>
    %18 = vector.shape_cast %17 : vector<4x8x8x4xf32> to vector<256x4xf32>
    %c0_28 = arith.constant 0 : index
    %c16 = arith.constant 16 : index
    %19 = vector.load %arg5[%c0_28, %c16] : memref<256x36xf32, #tpu.memory_space<vmem>>, vector<256x4xf32>
    tpu.vector_store %arg5[%c0_28, %c16], %18 {strides = array<i32>} : memref<256x36xf32, #tpu.memory_space<vmem>>, vector<256x4xf32>,
    %c0_29 = arith.constant 0 : index
    %c8_30 = arith.constant 8 : index
    %c0_31 = arith.constant 0 : index
    %c1_32 = arith.constant 1 : index
    %c0_33 = arith.constant 0 : index
    %20 = vector.load %arg1[%c0_29, %c8_30, %c0_31, %c1_32, %c0_33] : memref<1x16x9x9x4xf32, #tpu.memory_space<vmem>>, vector<1x4x8x8x4xf32>
    %21 = vector.shape_cast %20 : vector<1x4x8x8x4xf32> to vector<4x8x8x4xf32>
    %22 = vector.shape_cast %21 : vector<4x8x8x4xf32> to vector<256x4xf32>
    %c0_34 = arith.constant 0 : index
    %c20 = arith.constant 20 : index
    %23 = vector.load %arg5[%c0_34, %c20] : memref<256x36xf32, #tpu.memory_space<vmem>>, vector<256x4xf32>
    tpu.vector_store %arg5[%c0_34, %c20], %22 {strides = array<i32>} : memref<256x36xf32, #tpu.memory_space<vmem>>, vector<256x4xf32>,
    %c0_35 = arith.constant 0 : index
    %c0_36 = arith.constant 0 : index
    %c1_37 = arith.constant 1 : index
    %c0_38 = arith.constant 0 : index
    %c0_39 = arith.constant 0 : index
    %24 = vector.load %arg1[%c0_35, %c0_36, %c1_37, %c0_38, %c0_39] : memref<1x16x9x9x4xf32, #tpu.memory_space<vmem>>, vector<1x4x8x8x4xf32>
    %25 = vector.shape_cast %24 : vector<1x4x8x8x4xf32> to vector<4x8x8x4xf32>
    %26 = vector.shape_cast %25 : vector<4x8x8x4xf32> to vector<256x4xf32>
    %c0_40 = arith.constant 0 : index
    %c24 = arith.constant 24 : index
    %27 = vector.load %arg5[%c0_40, %c24] : memref<256x36xf32, #tpu.memory_space<vmem>>, vector<256x4xf32>
    tpu.vector_store %arg5[%c0_40, %c24], %26 {strides = array<i32>} : memref<256x36xf32, #tpu.memory_space<vmem>>, vector<256x4xf32>,
    %c0_41 = arith.constant 0 : index
    %c4_42 = arith.constant 4 : index
    %c1_43 = arith.constant 1 : index
    %c0_44 = arith.constant 0 : index
    %c0_45 = arith.constant 0 : index
    %28 = vector.load %arg1[%c0_41, %c4_42, %c1_43, %c0_44, %c0_45] : memref<1x16x9x9x4xf32, #tpu.memory_space<vmem>>, vector<1x4x8x8x4xf32>
    %29 = vector.shape_cast %28 : vector<1x4x8x8x4xf32> to vector<4x8x8x4xf32>
    %30 = vector.shape_cast %29 : vector<4x8x8x4xf32> to vector<256x4xf32>
    %c0_46 = arith.constant 0 : index
    %c28 = arith.constant 28 : index
    %31 = vector.load %arg5[%c0_46, %c28] : memref<256x36xf32, #tpu.memory_space<vmem>>, vector<256x4xf32>
    tpu.vector_store %arg5[%c0_46, %c28], %30 {strides = array<i32>} : memref<256x36xf32, #tpu.memory_space<vmem>>, vector<256x4xf32>,
    %c0_47 = arith.constant 0 : index
    %c0_48 = arith.constant 0 : index
    %c1_49 = arith.constant 1 : index
    %c1_50 = arith.constant 1 : index
    %c0_51 = arith.constant 0 : index
    %32 = vector.load %arg1[%c0_47, %c0_48, %c1_49, %c1_50, %c0_51] : memref<1x16x9x9x4xf32, #tpu.memory_space<vmem>>, vector<1x4x8x8x4xf32>
    %33 = vector.shape_cast %32 : vector<1x4x8x8x4xf32> to vector<4x8x8x4xf32>
    %34 = vector.shape_cast %33 : vector<4x8x8x4xf32> to vector<256x4xf32>
    %c0_52 = arith.constant 0 : index
    %c32 = arith.constant 32 : index
    %35 = vector.load %arg5[%c0_52, %c32] : memref<256x36xf32, #tpu.memory_space<vmem>>, vector<256x4xf32>
    tpu.vector_store %arg5[%c0_52, %c32], %34 {strides = array<i32>} : memref<256x36xf32, #tpu.memory_space<vmem>>, vector<256x4xf32>,
    %c0_53 = arith.constant 0 : index
    %c0_54 = arith.constant 0 : index
    %36 = vector.load %arg5[%c0_53, %c0_54] : memref<256x36xf32, #tpu.memory_space<vmem>>, vector<256x36xf32>
    %c0_55 = arith.constant 0 : index
    %c0_56 = arith.constant 0 : index
    %37 = vector.load %arg2[%c0_55, %c0_56] : memref<36x8xf32, #tpu.memory_space<vmem>>, vector<36x8xf32>
    %cst = arith.constant dense<0.000000e+00> : vector<256x8xf32>
    %38 = tpu.matmul %36, %37, %cst {dimension_numbers = #tpu.dot_dimension_numbers<[1], [0], [0], [1], [0, 0, 1, 1], [], []>} : vector<256x36xf32>, vector<36x8xf32>, vector<256x8xf32> -> vector<256x8xf32>
    %c0_57 = arith.constant 0 : index
    %c0_58 = arith.constant 0 : index
    %39 = vector.load %arg3[%c0_57, %c0_58] : memref<1x8xf32, #tpu.memory_space<vmem>>, vector<1x8xf32>
    %40 = vector.broadcast %39 : vector<1x8xf32> to vector<256x8xf32>
    %41 = arith.addf %38, %40 : vector<256x8xf32>
    %cst_59 = arith.constant dense<0.000000e+00> : vector<8xf32>
    %42 = vector.multi_reduction <add>, %41, %cst_59 [0] : vector<256x8xf32> to vector<8xf32>
    %43 = vector.shape_cast %42 : vector<8xf32> to vector<1x8xf32>
    %44 = arith.mulf %41, %41 : vector<256x8xf32>
    %cst_60 = arith.constant dense<0.000000e+00> : vector<8xf32>
    %45 = vector.multi_reduction <add>, %44, %cst_60 [0] : vector<256x8xf32> to vector<8xf32>
    %46 = vector.shape_cast %45 : vector<8xf32> to vector<1x8xf32>
    %cst_61 = arith.constant 3.906250e-03 : f32
    %47 = vector.broadcast %cst_61 : f32 to vector<1x8xf32>
    %48 = arith.mulf %43, %47 : vector<1x8xf32>
    %cst_62 = arith.constant 3.906250e-03 : f32
    %49 = vector.broadcast %cst_62 : f32 to vector<1x8xf32>
    %50 = arith.mulf %46, %49 : vector<1x8xf32>
    %51 = arith.mulf %48, %48 : vector<1x8xf32>
    %52 = arith.subf %50, %51 : vector<1x8xf32>
    %53 = vector.broadcast %48 : vector<1x8xf32> to vector<256x8xf32>
    %54 = arith.subf %41, %53 : vector<256x8xf32>
    %cst_63 = arith.constant 9.99999974E-6 : f32
    %55 = vector.broadcast %cst_63 : f32 to vector<1x8xf32>
    %56 = arith.addf %52, %55 : vector<1x8xf32>
    %57 = math.rsqrt %56 : vector<1x8xf32>
    %58 = vector.broadcast %57 : vector<1x8xf32> to vector<256x8xf32>
    %59 = arith.mulf %54, %58 : vector<256x8xf32>
    %cst_64 = arith.constant 0.000000e+00 : f32
    %60 = vector.broadcast %cst_64 : f32 to vector<256x8xf32>
    %61 = arith.cmpf oge, %59, %60 : vector<256x8xf32>
    %cst_65 = arith.constant 2.000000e-01 : f32
    %62 = vector.broadcast %cst_65 : f32 to vector<256x8xf32>
    %63 = arith.mulf %62, %59 : vector<256x8xf32>
    %64 = arith.select %61, %59, %63 : vector<256x8xi1>, vector<256x8xf32>
    %c0_66 = arith.constant 0 : index
    %c0_67 = arith.constant 0 : index
    %c0_68 = arith.constant 0 : index
    %65 = vector.load %arg4[%c0_66, %c0_67, %c0_68] : memref<1x256x8xf32, #tpu.memory_space<vmem>>, vector<1x256x8xf32>
    %66 = vector.shape_cast %65 : vector<1x256x8xf32> to vector<256x8xf32>
    %67 = vector.shape_cast %64 : vector<256x8xf32> to vector<1x256x8xf32>
    tpu.vector_store %arg4[%c0_66, %c0_67, %c0_68], %67 {strides = array<i32>} : memref<1x256x8xf32, #tpu.memory_space<vmem>>, vector<1x256x8xf32>,
    return
  }
  func.func @transform_0(%arg0: i32) -> (i32, i32, i32, i32, i32) {
    %c0_i32 = arith.constant 0 : i32
    %c0_i32_0 = arith.constant 0 : i32
    %c0_i32_1 = arith.constant 0 : i32
    %c0_i32_2 = arith.constant 0 : i32
    %c0_i32_3 = arith.constant 0 : i32
    return %arg0, %c0_i32, %c0_i32_0, %c0_i32_1, %c0_i32_2 : i32, i32, i32, i32, i32
  }
  func.func @transform_1(%arg0: i32) -> (i32, i32) {
    %c0_i32 = arith.constant 0 : i32
    %c0_i32_0 = arith.constant 0 : i32
    %c0_i32_1 = arith.constant 0 : i32
    return %c0_i32, %c0_i32_0 : i32, i32
  }
  func.func @transform_2(%arg0: i32) -> (i32, i32) {
    %c0_i32 = arith.constant 0 : i32
    %c0_i32_0 = arith.constant 0 : i32
    %c0_i32_1 = arith.constant 0 : i32
    return %c0_i32, %c0_i32_0 : i32, i32
  }
  func.func @transform_3(%arg0: i32) -> (i32, i32, i32) {
    %c0_i32 = arith.constant 0 : i32
    %c0_i32_0 = arith.constant 0 : i32
    %c0_i32_1 = arith.constant 0 : i32
    return %arg0, %c0_i32, %c0_i32_0 : i32, i32, i32
  }
}

module attributes {stable_mosaic.version = 11 : i64} {
  func.func @kernel(%arg0: i32, %arg1: memref<1x16x5x5x8xf32, #tpu.memory_space<vmem>>, %arg2: memref<72x16xf32, #tpu.memory_space<vmem>>, %arg3: memref<1x16xf32, #tpu.memory_space<vmem>>, %arg4: memref<1x144xf32, #tpu.memory_space<vmem>>, %arg5: memref<1x1xf32, #tpu.memory_space<vmem>>, %arg6: memref<64x9xf32, #tpu.memory_space<vmem>>, %arg7: memref<1x64x16xf32, #tpu.memory_space<vmem>>, %arg8: memref<1x64x1xf32, #tpu.memory_space<vmem>>, %arg9: memref<64x72xf32, #tpu.memory_space<vmem>>, %arg10: memref<74x16xf32, #tpu.memory_space<vmem>>, %arg11: memref<64x144xf32, #tpu.memory_space<vmem>>) attributes {dimension_semantics = [#tpu.dimension_semantics<parallel>], iteration_bounds = array<i64: 2>, scalar_prefetch = 0 : i64, scratch_operands = 3 : i64, tpu.core_type = #tpu.core_type<tc>, window_params = [{transform_indices = @transform_0, window_bounds = array<i64: 1, 16, 5, 5, 8>}, {pipeline_mode = #tpu.pipeline_mode<synchronous>, transform_indices = @transform_1, window_bounds = array<i64: 72, 16>}, {pipeline_mode = #tpu.pipeline_mode<synchronous>, transform_indices = @transform_2, window_bounds = array<i64: 1, 16>}, {pipeline_mode = #tpu.pipeline_mode<synchronous>, transform_indices = @transform_3, window_bounds = array<i64: 1, 144>}, {pipeline_mode = #tpu.pipeline_mode<synchronous>, transform_indices = @transform_4, window_bounds = array<i64: 1, 1>}, {pipeline_mode = #tpu.pipeline_mode<synchronous>, transform_indices = @transform_5, window_bounds = array<i64: 64, 9>}, {transform_indices = @transform_6, window_bounds = array<i64: 1, 64, 16>}, {transform_indices = @transform_7, window_bounds = array<i64: 1, 64, 1>}]} {
    %c0 = arith.constant 0 : index
    %c0_0 = arith.constant 0 : index
    %c0_1 = arith.constant 0 : index
    %c0_2 = arith.constant 0 : index
    %c0_3 = arith.constant 0 : index
    %0 = vector.load %arg1[%c0, %c0_0, %c0_1, %c0_2, %c0_3] : memref<1x16x5x5x8xf32, #tpu.memory_space<vmem>>, vector<1x4x4x4x8xf32>
    %1 = vector.shape_cast %0 : vector<1x4x4x4x8xf32> to vector<4x4x4x8xf32>
    %2 = vector.shape_cast %1 : vector<4x4x4x8xf32> to vector<64x8xf32>
    %c0_4 = arith.constant 0 : index
    %c0_5 = arith.constant 0 : index
    %3 = vector.load %arg9[%c0_4, %c0_5] : memref<64x72xf32, #tpu.memory_space<vmem>>, vector<64x8xf32>
    tpu.vector_store %arg9[%c0_4, %c0_5], %2 {strides = array<i32>} : memref<64x72xf32, #tpu.memory_space<vmem>>, vector<64x8xf32>,
    %c0_6 = arith.constant 0 : index
    %c4 = arith.constant 4 : index
    %c0_7 = arith.constant 0 : index
    %c0_8 = arith.constant 0 : index
    %c0_9 = arith.constant 0 : index
    %4 = vector.load %arg1[%c0_6, %c4, %c0_7, %c0_8, %c0_9] : memref<1x16x5x5x8xf32, #tpu.memory_space<vmem>>, vector<1x4x4x4x8xf32>
    %5 = vector.shape_cast %4 : vector<1x4x4x4x8xf32> to vector<4x4x4x8xf32>
    %6 = vector.shape_cast %5 : vector<4x4x4x8xf32> to vector<64x8xf32>
    %c0_10 = arith.constant 0 : index
    %c8 = arith.constant 8 : index
    %7 = vector.load %arg9[%c0_10, %c8] : memref<64x72xf32, #tpu.memory_space<vmem>>, vector<64x8xf32>
    tpu.vector_store %arg9[%c0_10, %c8], %6 {strides = array<i32>} : memref<64x72xf32, #tpu.memory_space<vmem>>, vector<64x8xf32>,
    %c0_11 = arith.constant 0 : index
    %c0_12 = arith.constant 0 : index
    %c0_13 = arith.constant 0 : index
    %c1 = arith.constant 1 : index
    %c0_14 = arith.constant 0 : index
    %8 = vector.load %arg1[%c0_11, %c0_12, %c0_13, %c1, %c0_14] : memref<1x16x5x5x8xf32, #tpu.memory_space<vmem>>, vector<1x4x4x4x8xf32>
    %9 = vector.shape_cast %8 : vector<1x4x4x4x8xf32> to vector<4x4x4x8xf32>
    %10 = vector.shape_cast %9 : vector<4x4x4x8xf32> to vector<64x8xf32>
    %c0_15 = arith.constant 0 : index
    %c16 = arith.constant 16 : index
    %11 = vector.load %arg9[%c0_15, %c16] : memref<64x72xf32, #tpu.memory_space<vmem>>, vector<64x8xf32>
    tpu.vector_store %arg9[%c0_15, %c16], %10 {strides = array<i32>} : memref<64x72xf32, #tpu.memory_space<vmem>>, vector<64x8xf32>,
    %c0_16 = arith.constant 0 : index
    %c8_17 = arith.constant 8 : index
    %c0_18 = arith.constant 0 : index
    %c0_19 = arith.constant 0 : index
    %c0_20 = arith.constant 0 : index
    %12 = vector.load %arg1[%c0_16, %c8_17, %c0_18, %c0_19, %c0_20] : memref<1x16x5x5x8xf32, #tpu.memory_space<vmem>>, vector<1x4x4x4x8xf32>
    %13 = vector.shape_cast %12 : vector<1x4x4x4x8xf32> to vector<4x4x4x8xf32>
    %14 = vector.shape_cast %13 : vector<4x4x4x8xf32> to vector<64x8xf32>
    %c0_21 = arith.constant 0 : index
    %c24 = arith.constant 24 : index
    %15 = vector.load %arg9[%c0_21, %c24] : memref<64x72xf32, #tpu.memory_space<vmem>>, vector<64x8xf32>
    tpu.vector_store %arg9[%c0_21, %c24], %14 {strides = array<i32>} : memref<64x72xf32, #tpu.memory_space<vmem>>, vector<64x8xf32>,
    %c0_22 = arith.constant 0 : index
    %c12 = arith.constant 12 : index
    %c0_23 = arith.constant 0 : index
    %c0_24 = arith.constant 0 : index
    %c0_25 = arith.constant 0 : index
    %16 = vector.load %arg1[%c0_22, %c12, %c0_23, %c0_24, %c0_25] : memref<1x16x5x5x8xf32, #tpu.memory_space<vmem>>, vector<1x4x4x4x8xf32>
    %17 = vector.shape_cast %16 : vector<1x4x4x4x8xf32> to vector<4x4x4x8xf32>
    %18 = vector.shape_cast %17 : vector<4x4x4x8xf32> to vector<64x8xf32>
    %c0_26 = arith.constant 0 : index
    %c32 = arith.constant 32 : index
    %19 = vector.load %arg9[%c0_26, %c32] : memref<64x72xf32, #tpu.memory_space<vmem>>, vector<64x8xf32>
    tpu.vector_store %arg9[%c0_26, %c32], %18 {strides = array<i32>} : memref<64x72xf32, #tpu.memory_space<vmem>>, vector<64x8xf32>,
    %c0_27 = arith.constant 0 : index
    %c8_28 = arith.constant 8 : index
    %c0_29 = arith.constant 0 : index
    %c1_30 = arith.constant 1 : index
    %c0_31 = arith.constant 0 : index
    %20 = vector.load %arg1[%c0_27, %c8_28, %c0_29, %c1_30, %c0_31] : memref<1x16x5x5x8xf32, #tpu.memory_space<vmem>>, vector<1x4x4x4x8xf32>
    %21 = vector.shape_cast %20 : vector<1x4x4x4x8xf32> to vector<4x4x4x8xf32>
    %22 = vector.shape_cast %21 : vector<4x4x4x8xf32> to vector<64x8xf32>
    %c0_32 = arith.constant 0 : index
    %c40 = arith.constant 40 : index
    %23 = vector.load %arg9[%c0_32, %c40] : memref<64x72xf32, #tpu.memory_space<vmem>>, vector<64x8xf32>
    tpu.vector_store %arg9[%c0_32, %c40], %22 {strides = array<i32>} : memref<64x72xf32, #tpu.memory_space<vmem>>, vector<64x8xf32>,
    %c0_33 = arith.constant 0 : index
    %c0_34 = arith.constant 0 : index
    %c1_35 = arith.constant 1 : index
    %c0_36 = arith.constant 0 : index
    %c0_37 = arith.constant 0 : index
    %24 = vector.load %arg1[%c0_33, %c0_34, %c1_35, %c0_36, %c0_37] : memref<1x16x5x5x8xf32, #tpu.memory_space<vmem>>, vector<1x4x4x4x8xf32>
    %25 = vector.shape_cast %24 : vector<1x4x4x4x8xf32> to vector<4x4x4x8xf32>
    %26 = vector.shape_cast %25 : vector<4x4x4x8xf32> to vector<64x8xf32>
    %c0_38 = arith.constant 0 : index
    %c48 = arith.constant 48 : index
    %27 = vector.load %arg9[%c0_38, %c48] : memref<64x72xf32, #tpu.memory_space<vmem>>, vector<64x8xf32>
    tpu.vector_store %arg9[%c0_38, %c48], %26 {strides = array<i32>} : memref<64x72xf32, #tpu.memory_space<vmem>>, vector<64x8xf32>,
    %c0_39 = arith.constant 0 : index
    %c4_40 = arith.constant 4 : index
    %c1_41 = arith.constant 1 : index
    %c0_42 = arith.constant 0 : index
    %c0_43 = arith.constant 0 : index
    %28 = vector.load %arg1[%c0_39, %c4_40, %c1_41, %c0_42, %c0_43] : memref<1x16x5x5x8xf32, #tpu.memory_space<vmem>>, vector<1x4x4x4x8xf32>
    %29 = vector.shape_cast %28 : vector<1x4x4x4x8xf32> to vector<4x4x4x8xf32>
    %30 = vector.shape_cast %29 : vector<4x4x4x8xf32> to vector<64x8xf32>
    %c0_44 = arith.constant 0 : index
    %c56 = arith.constant 56 : index
    %31 = vector.load %arg9[%c0_44, %c56] : memref<64x72xf32, #tpu.memory_space<vmem>>, vector<64x8xf32>
    tpu.vector_store %arg9[%c0_44, %c56], %30 {strides = array<i32>} : memref<64x72xf32, #tpu.memory_space<vmem>>, vector<64x8xf32>,
    %c0_45 = arith.constant 0 : index
    %c0_46 = arith.constant 0 : index
    %c1_47 = arith.constant 1 : index
    %c1_48 = arith.constant 1 : index
    %c0_49 = arith.constant 0 : index
    %32 = vector.load %arg1[%c0_45, %c0_46, %c1_47, %c1_48, %c0_49] : memref<1x16x5x5x8xf32, #tpu.memory_space<vmem>>, vector<1x4x4x4x8xf32>
    %33 = vector.shape_cast %32 : vector<1x4x4x4x8xf32> to vector<4x4x4x8xf32>
    %34 = vector.shape_cast %33 : vector<4x4x4x8xf32> to vector<64x8xf32>
    %c0_50 = arith.constant 0 : index
    %c64 = arith.constant 64 : index
    %35 = vector.load %arg9[%c0_50, %c64] : memref<64x72xf32, #tpu.memory_space<vmem>>, vector<64x8xf32>
    tpu.vector_store %arg9[%c0_50, %c64], %34 {strides = array<i32>} : memref<64x72xf32, #tpu.memory_space<vmem>>, vector<64x8xf32>,
    %c0_51 = arith.constant 0 : index
    %c0_52 = arith.constant 0 : index
    %36 = vector.load %arg9[%c0_51, %c0_52] : memref<64x72xf32, #tpu.memory_space<vmem>>, vector<64x72xf32>
    %c0_53 = arith.constant 0 : index
    %c0_54 = arith.constant 0 : index
    %37 = vector.load %arg2[%c0_53, %c0_54] : memref<72x16xf32, #tpu.memory_space<vmem>>, vector<72x16xf32>
    %cst = arith.constant dense<0.000000e+00> : vector<64x16xf32>
    %38 = tpu.matmul %36, %37, %cst {dimension_numbers = #tpu.dot_dimension_numbers<[1], [0], [0], [1], [0, 0, 1, 1], [], []>} : vector<64x72xf32>, vector<72x16xf32>, vector<64x16xf32> -> vector<64x16xf32>
    %c0_55 = arith.constant 0 : index
    %c0_56 = arith.constant 0 : index
    %39 = vector.load %arg3[%c0_55, %c0_56] : memref<1x16xf32, #tpu.memory_space<vmem>>, vector<1x16xf32>
    %40 = vector.broadcast %39 : vector<1x16xf32> to vector<64x16xf32>
    %41 = arith.addf %38, %40 : vector<64x16xf32>
    %cst_57 = arith.constant dense<0.000000e+00> : vector<16xf32>
    %42 = vector.multi_reduction <add>, %41, %cst_57 [0] : vector<64x16xf32> to vector<16xf32>
    %43 = vector.shape_cast %42 : vector<16xf32> to vector<1x16xf32>
    %44 = arith.mulf %41, %41 : vector<64x16xf32>
    %cst_58 = arith.constant dense<0.000000e+00> : vector<16xf32>
    %45 = vector.multi_reduction <add>, %44, %cst_58 [0] : vector<64x16xf32> to vector<16xf32>
    %46 = vector.shape_cast %45 : vector<16xf32> to vector<1x16xf32>
    %cst_59 = arith.constant 1.562500e-02 : f32
    %47 = vector.broadcast %cst_59 : f32 to vector<1x16xf32>
    %48 = arith.mulf %43, %47 : vector<1x16xf32>
    %cst_60 = arith.constant 1.562500e-02 : f32
    %49 = vector.broadcast %cst_60 : f32 to vector<1x16xf32>
    %50 = arith.mulf %46, %49 : vector<1x16xf32>
    %51 = arith.mulf %48, %48 : vector<1x16xf32>
    %52 = arith.subf %50, %51 : vector<1x16xf32>
    %53 = vector.broadcast %48 : vector<1x16xf32> to vector<64x16xf32>
    %54 = arith.subf %41, %53 : vector<64x16xf32>
    %cst_61 = arith.constant 9.99999974E-6 : f32
    %55 = vector.broadcast %cst_61 : f32 to vector<1x16xf32>
    %56 = arith.addf %52, %55 : vector<1x16xf32>
    %57 = math.rsqrt %56 : vector<1x16xf32>
    %58 = vector.broadcast %57 : vector<1x16xf32> to vector<64x16xf32>
    %59 = arith.mulf %54, %58 : vector<64x16xf32>
    %cst_62 = arith.constant 0.000000e+00 : f32
    %60 = vector.broadcast %cst_62 : f32 to vector<64x16xf32>
    %61 = arith.cmpf oge, %59, %60 : vector<64x16xf32>
    %cst_63 = arith.constant 2.000000e-01 : f32
    %62 = vector.broadcast %cst_63 : f32 to vector<64x16xf32>
    %63 = arith.mulf %62, %59 : vector<64x16xf32>
    %64 = arith.select %61, %59, %63 : vector<64x16xi1>, vector<64x16xf32>
    %c0_64 = arith.constant 0 : index
    %c0_65 = arith.constant 0 : index
    %c0_66 = arith.constant 0 : index
    %65 = vector.load %arg7[%c0_64, %c0_65, %c0_66] : memref<1x64x16xf32, #tpu.memory_space<vmem>>, vector<1x64x16xf32>
    %66 = vector.shape_cast %65 : vector<1x64x16xf32> to vector<64x16xf32>
    %67 = vector.shape_cast %64 : vector<64x16xf32> to vector<1x64x16xf32>
    tpu.vector_store %arg7[%c0_64, %c0_65, %c0_66], %67 {strides = array<i32>} : memref<1x64x16xf32, #tpu.memory_space<vmem>>, vector<1x64x16xf32>,
    %cst_67 = arith.constant 0.000000e+00 : f32
    %68 = vector.broadcast %cst_67 : f32 to vector<74x16xf32>
    %c0_68 = arith.constant 0 : index
    %c0_69 = arith.constant 0 : index
    %69 = vector.load %arg10[%c0_68, %c0_69] : memref<74x16xf32, #tpu.memory_space<vmem>>, vector<74x16xf32>
    tpu.vector_store %arg10[%c0_68, %c0_69], %68 {strides = array<i32>} : memref<74x16xf32, #tpu.memory_space<vmem>>, vector<74x16xf32>,
    %c5 = arith.constant 5 : index
    %c0_70 = arith.constant 0 : index
    %70 = vector.load %arg10[%c5, %c0_70] : memref<74x16xf32, #tpu.memory_space<vmem>>, vector<64x16xf32>
    tpu.vector_store %arg10[%c5, %c0_70], %64 {strides = array<i32>} : memref<74x16xf32, #tpu.memory_space<vmem>>, vector<64x16xf32>,
    %c0_71 = arith.constant 0 : index
    %c0_72 = arith.constant 0 : index
    %71 = vector.load %arg10[%c0_71, %c0_72] : memref<74x16xf32, #tpu.memory_space<vmem>>, vector<64x16xf32>
    %c0_73 = arith.constant 0 : index
    %c0_74 = arith.constant 0 : index
    %72 = vector.load %arg6[%c0_73, %c0_74] : memref<64x9xf32, #tpu.memory_space<vmem>>, vector<64x1xf32>
    %73 = vector.broadcast %72 : vector<64x1xf32> to vector<64x16xf32>
    %74 = arith.mulf %71, %73 : vector<64x16xf32>
    %c0_75 = arith.constant 0 : index
    %c0_76 = arith.constant 0 : index
    %75 = vector.load %arg11[%c0_75, %c0_76] : memref<64x144xf32, #tpu.memory_space<vmem>>, vector<64x16xf32>
    tpu.vector_store %arg11[%c0_75, %c0_76], %74 {strides = array<i32>} : memref<64x144xf32, #tpu.memory_space<vmem>>, vector<64x16xf32>,
    %c1_77 = arith.constant 1 : index
    %c0_78 = arith.constant 0 : index
    %76 = vector.load %arg10[%c1_77, %c0_78] : memref<74x16xf32, #tpu.memory_space<vmem>>, vector<64x16xf32>
    %c0_79 = arith.constant 0 : index
    %c1_80 = arith.constant 1 : index
    %77 = vector.load %arg6[%c0_79, %c1_80] : memref<64x9xf32, #tpu.memory_space<vmem>>, vector<64x1xf32>
    %78 = vector.broadcast %77 : vector<64x1xf32> to vector<64x16xf32>
    %79 = arith.mulf %76, %78 : vector<64x16xf32>
    %c0_81 = arith.constant 0 : index
    %c16_82 = arith.constant 16 : index
    %80 = vector.load %arg11[%c0_81, %c16_82] : memref<64x144xf32, #tpu.memory_space<vmem>>, vector<64x16xf32>
    tpu.vector_store %arg11[%c0_81, %c16_82], %79 {strides = array<i32>} : memref<64x144xf32, #tpu.memory_space<vmem>>, vector<64x16xf32>,
    %c2 = arith.constant 2 : index
    %c0_83 = arith.constant 0 : index
    %81 = vector.load %arg10[%c2, %c0_83] : memref<74x16xf32, #tpu.memory_space<vmem>>, vector<64x16xf32>
    %c0_84 = arith.constant 0 : index
    %c2_85 = arith.constant 2 : index
    %82 = vector.load %arg6[%c0_84, %c2_85] : memref<64x9xf32, #tpu.memory_space<vmem>>, vector<64x1xf32>
    %83 = vector.broadcast %82 : vector<64x1xf32> to vector<64x16xf32>
    %84 = arith.mulf %81, %83 : vector<64x16xf32>
    %c0_86 = arith.constant 0 : index
    %c32_87 = arith.constant 32 : index
    %85 = vector.load %arg11[%c0_86, %c32_87] : memref<64x144xf32, #tpu.memory_space<vmem>>, vector<64x16xf32>
    tpu.vector_store %arg11[%c0_86, %c32_87], %84 {strides = array<i32>} : memref<64x144xf32, #tpu.memory_space<vmem>>, vector<64x16xf32>,
    %c4_88 = arith.constant 4 : index
    %c0_89 = arith.constant 0 : index
    %86 = vector.load %arg10[%c4_88, %c0_89] : memref<74x16xf32, #tpu.memory_space<vmem>>, vector<64x16xf32>
    %c0_90 = arith.constant 0 : index
    %c3 = arith.constant 3 : index
    %87 = vector.load %arg6[%c0_90, %c3] : memref<64x9xf32, #tpu.memory_space<vmem>>, vector<64x1xf32>
    %88 = vector.broadcast %87 : vector<64x1xf32> to vector<64x16xf32>
    %89 = arith.mulf %86, %88 : vector<64x16xf32>
    %c0_91 = arith.constant 0 : index
    %c48_92 = arith.constant 48 : index
    %90 = vector.load %arg11[%c0_91, %c48_92] : memref<64x144xf32, #tpu.memory_space<vmem>>, vector<64x16xf32>
    tpu.vector_store %arg11[%c0_91, %c48_92], %89 {strides = array<i32>} : memref<64x144xf32, #tpu.memory_space<vmem>>, vector<64x16xf32>,
    %c5_93 = arith.constant 5 : index
    %c0_94 = arith.constant 0 : index
    %91 = vector.load %arg10[%c5_93, %c0_94] : memref<74x16xf32, #tpu.memory_space<vmem>>, vector<64x16xf32>
    %c0_95 = arith.constant 0 : index
    %c4_96 = arith.constant 4 : index
    %92 = vector.load %arg6[%c0_95, %c4_96] : memref<64x9xf32, #tpu.memory_space<vmem>>, vector<64x1xf32>
    %93 = vector.broadcast %92 : vector<64x1xf32> to vector<64x16xf32>
    %94 = arith.mulf %91, %93 : vector<64x16xf32>
    %c0_97 = arith.constant 0 : index
    %c64_98 = arith.constant 64 : index
    %95 = vector.load %arg11[%c0_97, %c64_98] : memref<64x144xf32, #tpu.memory_space<vmem>>, vector<64x16xf32>
    tpu.vector_store %arg11[%c0_97, %c64_98], %94 {strides = array<i32>} : memref<64x144xf32, #tpu.memory_space<vmem>>, vector<64x16xf32>,
    %c6 = arith.constant 6 : index
    %c0_99 = arith.constant 0 : index
    %96 = vector.load %arg10[%c6, %c0_99] : memref<74x16xf32, #tpu.memory_space<vmem>>, vector<64x16xf32>
    %c0_100 = arith.constant 0 : index
    %c5_101 = arith.constant 5 : index
    %97 = vector.load %arg6[%c0_100, %c5_101] : memref<64x9xf32, #tpu.memory_space<vmem>>, vector<64x1xf32>
    %98 = vector.broadcast %97 : vector<64x1xf32> to vector<64x16xf32>
    %99 = arith.mulf %96, %98 : vector<64x16xf32>
    %c0_102 = arith.constant 0 : index
    %c80 = arith.constant 80 : index
    %100 = vector.load %arg11[%c0_102, %c80] : memref<64x144xf32, #tpu.memory_space<vmem>>, vector<64x16xf32>
    tpu.vector_store %arg11[%c0_102, %c80], %99 {strides = array<i32>} : memref<64x144xf32, #tpu.memory_space<vmem>>, vector<64x16xf32>,
    %c8_103 = arith.constant 8 : index
    %c0_104 = arith.constant 0 : index
    %101 = vector.load %arg10[%c8_103, %c0_104] : memref<74x16xf32, #tpu.memory_space<vmem>>, vector<64x16xf32>
    %c0_105 = arith.constant 0 : index
    %c6_106 = arith.constant 6 : index
    %102 = vector.load %arg6[%c0_105, %c6_106] : memref<64x9xf32, #tpu.memory_space<vmem>>, vector<64x1xf32>
    %103 = vector.broadcast %102 : vector<64x1xf32> to vector<64x16xf32>
    %104 = arith.mulf %101, %103 : vector<64x16xf32>
    %c0_107 = arith.constant 0 : index
    %c96 = arith.constant 96 : index
    %105 = vector.load %arg11[%c0_107, %c96] : memref<64x144xf32, #tpu.memory_space<vmem>>, vector<64x16xf32>
    tpu.vector_store %arg11[%c0_107, %c96], %104 {strides = array<i32>} : memref<64x144xf32, #tpu.memory_space<vmem>>, vector<64x16xf32>,
    %c9 = arith.constant 9 : index
    %c0_108 = arith.constant 0 : index
    %106 = vector.load %arg10[%c9, %c0_108] : memref<74x16xf32, #tpu.memory_space<vmem>>, vector<64x16xf32>
    %c0_109 = arith.constant 0 : index
    %c7 = arith.constant 7 : index
    %107 = vector.load %arg6[%c0_109, %c7] : memref<64x9xf32, #tpu.memory_space<vmem>>, vector<64x1xf32>
    %108 = vector.broadcast %107 : vector<64x1xf32> to vector<64x16xf32>
    %109 = arith.mulf %106, %108 : vector<64x16xf32>
    %c0_110 = arith.constant 0 : index
    %c112 = arith.constant 112 : index
    %110 = vector.load %arg11[%c0_110, %c112] : memref<64x144xf32, #tpu.memory_space<vmem>>, vector<64x16xf32>
    tpu.vector_store %arg11[%c0_110, %c112], %109 {strides = array<i32>} : memref<64x144xf32, #tpu.memory_space<vmem>>, vector<64x16xf32>,
    %c10 = arith.constant 10 : index
    %c0_111 = arith.constant 0 : index
    %111 = vector.load %arg10[%c10, %c0_111] : memref<74x16xf32, #tpu.memory_space<vmem>>, vector<64x16xf32>
    %c0_112 = arith.constant 0 : index
    %c8_113 = arith.constant 8 : index
    %112 = vector.load %arg6[%c0_112, %c8_113] : memref<64x9xf32, #tpu.memory_space<vmem>>, vector<64x1xf32>
    %113 = vector.broadcast %112 : vector<64x1xf32> to vector<64x16xf32>
    %114 = arith.mulf %111, %113 : vector<64x16xf32>
    %c0_114 = arith.constant 0 : index
    %c128 = arith.constant 128 : index
    %115 = vector.load %arg11[%c0_114, %c128] : memref<64x144xf32, #tpu.memory_space<vmem>>, vector<64x16xf32>
    tpu.vector_store %arg11[%c0_114, %c128], %114 {strides = array<i32>} : memref<64x144xf32, #tpu.memory_space<vmem>>, vector<64x16xf32>,
    %c0_115 = arith.constant 0 : index
    %c0_116 = arith.constant 0 : index
    %116 = vector.load %arg11[%c0_115, %c0_116] : memref<64x144xf32, #tpu.memory_space<vmem>>, vector<64x144xf32>
    %c0_117 = arith.constant 0 : index
    %c0_118 = arith.constant 0 : index
    %117 = vector.load %arg4[%c0_117, %c0_118] : memref<1x144xf32, #tpu.memory_space<vmem>>, vector<1x144xf32>
    %118 = vector.broadcast %117 : vector<1x144xf32> to vector<64x144xf32>
    %119 = arith.mulf %116, %118 : vector<64x144xf32>
    %cst_119 = arith.constant dense<0.000000e+00> : vector<64xf32>
    %120 = vector.multi_reduction <add>, %119, %cst_119 [1] : vector<64x144xf32> to vector<64xf32>
    %121 = vector.shape_cast %120 : vector<64xf32> to vector<64x1xf32>
    %c0_120 = arith.constant 0 : index
    %c0_121 = arith.constant 0 : index
    %122 = vector.load %arg5[%c0_120, %c0_121] : memref<1x1xf32, #tpu.memory_space<vmem>>, vector<1x1xf32>
    %123 = vector.broadcast %122 : vector<1x1xf32> to vector<64x1xf32>
    %124 = arith.addf %121, %123 : vector<64x1xf32>
    %c0_122 = arith.constant 0 : index
    %c0_123 = arith.constant 0 : index
    %c0_124 = arith.constant 0 : index
    %125 = vector.load %arg8[%c0_122, %c0_123, %c0_124] : memref<1x64x1xf32, #tpu.memory_space<vmem>>, vector<1x64x1xf32>
    %126 = vector.shape_cast %125 : vector<1x64x1xf32> to vector<64x1xf32>
    %127 = vector.shape_cast %124 : vector<64x1xf32> to vector<1x64x1xf32>
    tpu.vector_store %arg8[%c0_122, %c0_123, %c0_124], %127 {strides = array<i32>} : memref<1x64x1xf32, #tpu.memory_space<vmem>>, vector<1x64x1xf32>,
    return
  }
  func.func @transform_0(%arg0: i32) -> (i32, i32, i32, i32, i32) {
    %c0_i32 = arith.constant 0 : i32
    %c0_i32_0 = arith.constant 0 : i32
    %c0_i32_1 = arith.constant 0 : i32
    %c0_i32_2 = arith.constant 0 : i32
    %c0_i32_3 = arith.constant 0 : i32
    return %arg0, %c0_i32, %c0_i32_0, %c0_i32_1, %c0_i32_2 : i32, i32, i32, i32, i32
  }
  func.func @transform_1(%arg0: i32) -> (i32, i32) {
    %c0_i32 = arith.constant 0 : i32
    %c0_i32_0 = arith.constant 0 : i32
    %c0_i32_1 = arith.constant 0 : i32
    return %c0_i32, %c0_i32_0 : i32, i32
  }
  func.func @transform_2(%arg0: i32) -> (i32, i32) {
    %c0_i32 = arith.constant 0 : i32
    %c0_i32_0 = arith.constant 0 : i32
    %c0_i32_1 = arith.constant 0 : i32
    return %c0_i32, %c0_i32_0 : i32, i32
  }
  func.func @transform_3(%arg0: i32) -> (i32, i32) {
    %c0_i32 = arith.constant 0 : i32
    %c0_i32_0 = arith.constant 0 : i32
    %c0_i32_1 = arith.constant 0 : i32
    return %c0_i32, %c0_i32_0 : i32, i32
  }
  func.func @transform_4(%arg0: i32) -> (i32, i32) {
    %c0_i32 = arith.constant 0 : i32
    %c0_i32_0 = arith.constant 0 : i32
    %c0_i32_1 = arith.constant 0 : i32
    return %c0_i32, %c0_i32_0 : i32, i32
  }
  func.func @transform_5(%arg0: i32) -> (i32, i32) {
    %c0_i32 = arith.constant 0 : i32
    %c0_i32_0 = arith.constant 0 : i32
    %c0_i32_1 = arith.constant 0 : i32
    return %c0_i32, %c0_i32_0 : i32, i32
  }
  func.func @transform_6(%arg0: i32) -> (i32, i32, i32) {
    %c0_i32 = arith.constant 0 : i32
    %c0_i32_0 = arith.constant 0 : i32
    %c0_i32_1 = arith.constant 0 : i32
    return %arg0, %c0_i32, %c0_i32_0 : i32, i32, i32
  }
  func.func @transform_7(%arg0: i32) -> (i32, i32, i32) {
    %c0_i32 = arith.constant 0 : i32
    %c0_i32_0 = arith.constant 0 : i32
    %c0_i32_1 = arith.constant 0 : i32
    return %arg0, %c0_i32, %c0_i32_0 : i32, i32, i32
  }
}

</mosaic_0001>

<llo_original>
// kernel: _lambda_.2
$region0: #{_lambda_.2}
  #allocation0 [shape = 'u32[]', space=smem, size = 0x4, offset = 0x4, fixed_abs, tag = 'smem constant byte address 0x4 - core index']
  #allocation1 [shape = 'u32[144,128]{1,0:T(1,128)}', space=vmem, size = 0x12000, scoped, tag = 'internal scratch']
  #allocation2 [shape = 'f32[256,36]{1,0:T(8,128)}', space=vmem, size = 0x20000, scoped, tag = 'scratch operand']
  %s0 = inlined_call_operand.vmem [shape: f32[2,16,9,9,4], index: 0, kind: input, shape index: {}]
  %s1 = inlined_call_operand.vmem [shape: f32[36,8], index: 1, kind: input, shape index: {}]
  %s2 = inlined_call_operand.vmem [shape: f32[1,8], index: 2, kind: input, shape index: {}]
  %s3 = inlined_call_operand.vmem [shape: f32[2,256,8], index: 3, kind: output, shape index: {}]
  %s4 = sld [smem:[#allocation0]]
  $region45: #{_lambda_.2} parent=0
    _
  %s6 = ssub.s32 1, %s4
  %s7 = scalar_select 0, %s6, %s4
  loop: start=0, step=1, limit=4
  $region2: #{_lambda_.2} parent=0 // loop_pre_header
    _
  $region3: #{_lambda_.2} parent=0 // loop_header
    %s9 = sphi 0, %s13
    %p10 = scmp.ge.s32.totalorder %s9, 4
    %s19 = sphi 0, %s21
    %s22 = sphi 0, %s19
    %s23 = sphi 0, %s22
    %s39 = sphi 0, %s23
    %s43 = sphi 0, %s43
    %s45 = sphi 0, %s43
    %s46 = sphi 0, %s45
    %s60 = sphi 0, %s46
    %s64 = sphi 0, %s64
    %s66 = sphi 0, %s64
    %s67 = sphi 0, %s66
    %s81 = sphi 0, %s67
    %s87 = sphi 0, %s89
    %s90 = sphi 0, %s87
    %s91 = sphi 0, %s90
    %s107 = sphi 0, %s91
  $region4: #{_lambda_.2} parent=0 // loop_header_branch
    %12 = sbr.rel (%p10) target = $region8
  $region5: #{_lambda_.2} parent=0 // loop_body
    %s14 = ssub.s32 %s9, 1
    %s15 = ssub.s32 %s9, 2
    %s16 = sadd.s32 %s9, 1
    %s17 = ssub.s32 %s9, %s16
    %p18 = scmp.eq.s32.totalorder %s17, 0
    %s20 = sadd.s32 %s19, 1
    %s21 = scalar_select %p18, %s19, %s20
    %p24 = pneg %p18
    %p25 = scmp.eq.s32.totalorder %s9, 1
    %p26 = por %p24, %p25
    %p27 = scmp.ne.s32.totalorder %s19, %s22
    %p28 = scmp.eq.s32.totalorder %s9, 0
    %p29 = por %p27, %p28
    %p30 = scmp.ne.s32.totalorder %s19, %s22
    %p31 = scmp.eq.s32.totalorder %s14, 1
    %p32 = por %p30, %p31
    %p33 = scmp.ne.s32.totalorder %s22, %s23
    %p34 = scmp.eq.s32.totalorder %s14, 0
    %p35 = por %p33, %p34
    %p36 = scmp.ne.s32.totalorder %s22, %s23
    %p37 = scmp.eq.s32.totalorder %s15, 1
    %p38 = por %p36, %p37
    %p40 = scmp.ne.s32.totalorder %s23, %s39
    %p41 = scmp.eq.s32.totalorder %s15, 0
    %p42 = por %p40, %p41
    %s44 = sadd.s32 %s43, 1
    %p47 = scmp.eq.s32.totalorder %s9, 1
    %p48 = scmp.ne.s32.totalorder %s43, %s45
    %p49 = scmp.eq.s32.totalorder %s9, 0
    %p50 = por %p48, %p49
    %p51 = scmp.ne.s32.totalorder %s43, %s45
    %p52 = scmp.eq.s32.totalorder %s14, 1
    %p53 = por %p51, %p52
    %p54 = scmp.ne.s32.totalorder %s45, %s46
    %p55 = scmp.eq.s32.totalorder %s14, 0
    %p56 = por %p54, %p55
    %p57 = scmp.ne.s32.totalorder %s45, %s46
    %p58 = scmp.eq.s32.totalorder %s15, 1
    %p59 = por %p57, %p58
    %p61 = scmp.ne.s32.totalorder %s46, %s60
    %p62 = scmp.eq.s32.totalorder %s15, 0
    %p63 = por %p61, %p62
    %s65 = sadd.s32 %s64, 1
    %p68 = scmp.eq.s32.totalorder %s9, 1
    %p69 = scmp.ne.s32.totalorder %s64, %s66
    %p70 = scmp.eq.s32.totalorder %s9, 0
    %p71 = por %p69, %p70
    %p72 = scmp.ne.s32.totalorder %s64, %s66
    %p73 = scmp.eq.s32.totalorder %s14, 1
    %p74 = por %p72, %p73
    %p75 = scmp.ne.s32.totalorder %s66, %s67
    %p76 = scmp.eq.s32.totalorder %s14, 0
    %p77 = por %p75, %p76
    %p78 = scmp.ne.s32.totalorder %s66, %s67
    %p79 = scmp.eq.s32.totalorder %s15, 1
    %p80 = por %p78, %p79
    %p82 = scmp.ne.s32.totalorder %s67, %s81
    %p83 = scmp.eq.s32.totalorder %s15, 0
    %p84 = por %p82, %p83
    %s85 = ssub.s32 %s9, %s16
    %p86 = scmp.eq.s32.totalorder %s85, 0
    %s88 = sadd.s32 %s87, 1
    %s89 = scalar_select %p86, %s87, %s88
    %p92 = pneg %p86
    %p93 = scmp.eq.s32.totalorder %s9, 1
    %p94 = por %p92, %p93
    %p95 = scmp.ne.s32.totalorder %s87, %s90
    %p96 = scmp.eq.s32.totalorder %s9, 0
    %p97 = por %p95, %p96
    %p98 = scmp.ne.s32.totalorder %s87, %s90
    %p99 = scmp.eq.s32.totalorder %s14, 1
    %p100 = por %p98, %p99
    %p101 = scmp.ne.s32.totalorder %s90, %s91
    %p102 = scmp.eq.s32.totalorder %s14, 0
    %p103 = por %p101, %p102
    %p104 = scmp.ne.s32.totalorder %s90, %s91
    %p105 = scmp.eq.s32.totalorder %s15, 1
    %p106 = por %p104, %p105
    %p108 = scmp.ne.s32.totalorder %s91, %s107
    %p109 = scmp.eq.s32.totalorder %s15, 0
    %p110 = por %p108, %p109
    %p111 = scmp.le.s32.totalorder 1, %s9
    %p112 = scmp.lt.s32.totalorder %s9, 3
    %p113 = pnand %p111, %p112
    %p114 = pneg %p113
    // Predicated region
    $region9: #{_lambda_.2} parent=5 // pred_check
      _
    $region10: #{_lambda_.2} parent=5 // pred_check_branch
      %116 = sbr.rel (%p113) target = $region12
    $region11: #{_lambda_.2} parent=5 // pred_region
      %s117 = ssub.s32 %s9, 1
      // Predicated region
      $region13: #{_lambda_.2} parent=11 // pred_check
        %p118 = pneg %p56
      $region14: #{_lambda_.2} parent=11 // pred_check_branch
        %120 = sbr.rel (%p118) target = $region16
      $region15: #{_lambda_.2} parent=11 // pred_region
        _
      $region16: #{_lambda_.2} parent=11 // pred_fallthru
        _
      // Predicated region
      $region17: #{_lambda_.2} parent=11 // pred_check
        %p121 = pneg %p77
      $region18: #{_lambda_.2} parent=11 // pred_check_branch
        %123 = sbr.rel (%p121) target = $region20
      $region19: #{_lambda_.2} parent=11 // pred_region
        _
      $region20: #{_lambda_.2} parent=11 // pred_fallthru
        _
    $region12: #{_lambda_.2} parent=5 // pred_fallthru
      _
    %p124 = scmp.lt.s32.totalorder %s9, 2
    // Predicated region
    $region21: #{_lambda_.2} parent=5 // pred_check
      %p125 = pneg %p124
    $region22: #{_lambda_.2} parent=5 // pred_check_branch
      %127 = sbr.rel (%p125) target = $region24
    $region23: #{_lambda_.2} parent=5 // pred_region
      // Predicated region
      $region25: #{_lambda_.2} parent=23 // pred_check
        %p128 = pneg %p29
      $region26: #{_lambda_.2} parent=23 // pred_check_branch
        %130 = sbr.rel (%p128) target = $region28
      $region27: #{_lambda_.2} parent=23 // pred_region
        %p131 = scmp.lt.s32.totalorder %s9, 1
        %s132 = scalar_select %p131, %s9, 1
        %s133 = smul.addr %s132, 288
        %s134 = smul.addr %s133, 8
        %s135 = scalar_lea.vmem %s0, %s134
      $region28: #{_lambda_.2} parent=23 // pred_fallthru
        _
    $region24: #{_lambda_.2} parent=5 // pred_fallthru
      _
    %p136 = scmp.le.s32.totalorder 1, %s9
    %p137 = scmp.lt.s32.totalorder %s9, 3
    %p138 = pnand %p136, %p137
    %p139 = pneg %p138
    // Predicated region
    $region29: #{_lambda_.2} parent=5 // pred_check
      _
    $region30: #{_lambda_.2} parent=5 // pred_check_branch
      %141 = sbr.rel (%p138) target = $region32
    $region31: #{_lambda_.2} parent=5 // pred_region
      %s142 = ssub.s32 %s9, 1
      %p143 = scmp.lt.s32.totalorder %s14, 1
      %s144 = scalar_select %p143, %s14, 1
      %s145 = smul.addr %s144, 288
      %s146 = smul.addr %s145, 8
      %s147 = scalar_lea.vmem %s0, %s146
      %p148 = pneg %p35
      %p149 = pneg %p32
      %p150 = pneg %p56
      %p151 = pneg %p53
      %p152 = pneg %p77
      %p153 = pneg %p74
      %p154 = pneg %p103
      %p155 = pneg %p100
      %p156 = scmp.lt.s32.totalorder %s14, 1
      %s157 = scalar_select %p156, %s14, 1
      %s158 = smul.addr %s157, 32
      %s159 = smul.addr %s158, 8
      %s160 = scalar_lea.vmem %s3, %s159
      %p161 = scmp.lt.s32.totalorder %s14, 1
      %s162 = scalar_select %p161, %s14, 1
      %s163 = smul.addr %s162, 288
      %s164 = smul.addr %s163, 8
      %s165 = scalar_lea.vmem %s0, %s164
      %p166 = scmp.lt.s32.totalorder %s14, 1
      %s167 = scalar_select %p166, %s14, 1
      %s168 = smul.addr %s167, 32
      %s169 = smul.addr %s168, 8
      %s170 = scalar_lea.vmem %s3, %s169
      %v171 = vld [vmem:[%s165] sm:$0xff]
      %v172 = vld [vmem:[%s165 + $0x10] sm:$0xff]
      %v173 = vld [vmem:[%s165 + $0x20] sm:$0xff]
      %v174 = vld [vmem:[%s165 + $0x30] sm:$0xff]
      %v175 = vld [vmem:[%s165 + $0x40] sm:$0xff]
      %v176 = vld [vmem:[%s165 + $0x50] sm:$0xff]
      %v177 = vld [vmem:[%s165 + $0x60] sm:$0xff]
      %v178 = vld [vmem:[%s165 + $0x70] sm:$0xff]
      %v179 = vld [vmem:[%s165 + $0x90] sm:$0xff]
      %v180 = vld [vmem:[%s165 + $0xa0] sm:$0xff]
      %v181 = vld [vmem:[%s165 + $0xb0] sm:$0xff]
      %v182 = vld [vmem:[%s165 + $0xc0] sm:$0xff]
      %v183 = vld [vmem:[%s165 + $0xd0] sm:$0xff]
      %v184 = vld [vmem:[%s165 + $0xe0] sm:$0xff]
      %v185 = vld [vmem:[%s165 + $0xf0] sm:$0xff]
      %v186 = vld [vmem:[%s165 + $0x100] sm:$0xff]
      %v187 = vld [vmem:[%s165 + $0x120] sm:$0xff]
      %v188 = vld [vmem:[%s165 + $0x130] sm:$0xff]
      %v189 = vld [vmem:[%s165 + $0x140] sm:$0xff]
      %v190 = vld [vmem:[%s165 + $0x150] sm:$0xff]
      %v191 = vld [vmem:[%s165 + $0x160] sm:$0xff]
      %v192 = vld [vmem:[%s165 + $0x170] sm:$0xff]
      %v193 = vld [vmem:[%s165 + $0x180] sm:$0xff]
      %v194 = vld [vmem:[%s165 + $0x190] sm:$0xff]
      %v195 = vld [vmem:[%s165 + $0x1b0] sm:$0xff]
      %v196 = vld [vmem:[%s165 + $0x1c0] sm:$0xff]
      %v197 = vld [vmem:[%s165 + $0x1d0] sm:$0xff]
      %v198 = vld [vmem:[%s165 + $0x1e0] sm:$0xff]
      %v199 = vld [vmem:[%s165 + $0x1f0] sm:$0xff]
      %v200 = vld [vmem:[%s165 + $0x200] sm:$0xff]
      %v201 = vld [vmem:[%s165 + $0x210] sm:$0xff]
      %v202 = vld [vmem:[%s165 + $0x220] sm:$0xff]
      %vm203 = vcmask 31744
      %204 = vst.msk [vmem:[#allocation2] sm:$0xff] %vm203, %v171
      %205 = vst.msk [vmem:[#allocation2 + $0x8] sm:$0xff] %vm203, %v172
      %206 = vst.msk [vmem:[#allocation2 + $0x10] sm:$0xff] %vm203, %v173
      %207 = vst.msk [vmem:[#allocation2 + $0x18] sm:$0xff] %vm203, %v174
      %208 = vst.msk [vmem:[#allocation2 + $0x20] sm:$0xff] %vm203, %v175
      %209 = vst.msk [vmem:[#allocation2 + $0x28] sm:$0xff] %vm203, %v176
      %210 = vst.msk [vmem:[#allocation2 + $0x30] sm:$0xff] %vm203, %v177
      %211 = vst.msk [vmem:[#allocation2 + $0x38] sm:$0xff] %vm203, %v178
      %212 = vst.msk [vmem:[#allocation2 + $0x40] sm:$0xff] %vm203, %v179
      %213 = vst.msk [vmem:[#allocation2 + $0x48] sm:$0xff] %vm203, %v180
      %214 = vst.msk [vmem:[#allocation2 + $0x50] sm:$0xff] %vm203, %v181
      %215 = vst.msk [vmem:[#allocation2 + $0x58] sm:$0xff] %vm203, %v182
      %216 = vst.msk [vmem:[#allocation2 + $0x60] sm:$0xff] %vm203, %v183
      %217 = vst.msk [vmem:[#allocation2 + $0x68] sm:$0xff] %vm203, %v184
      %218 = vst.msk [vmem:[#allocation2 + $0x70] sm:$0xff] %vm203, %v185
      %219 = vst.msk [vmem:[#allocation2 + $0x78] sm:$0xff] %vm203, %v186
      %220 = vst.msk [vmem:[#allocation2 + $0x80] sm:$0xff] %vm203, %v187
      %221 = vst.msk [vmem:[#allocation2 + $0x88] sm:$0xff] %vm203, %v188
      %222 = vst.msk [vmem:[#allocation2 + $0x90] sm:$0xff] %vm203, %v189
      %223 = vst.msk [vmem:[#allocation2 + $0x98] sm:$0xff] %vm203, %v190
      %224 = vst.msk [vmem:[#allocation2 + $0xa0] sm:$0xff] %vm203, %v191
      %225 = vst.msk [vmem:[#allocation2 + $0xa8] sm:$0xff] %vm203, %v192
      %226 = vst.msk [vmem:[#allocation2 + $0xb0] sm:$0xff] %vm203, %v193
      %227 = vst.msk [vmem:[#allocation2 + $0xb8] sm:$0xff] %vm203, %v194
      %228 = vst.msk [vmem:[#allocation2 + $0xc0] sm:$0xff] %vm203, %v195
      %229 = vst.msk [vmem:[#allocation2 + $0xc8] sm:$0xff] %vm203, %v196
      %230 = vst.msk [vmem:[#allocation2 + $0xd0] sm:$0xff] %vm203, %v197
      %231 = vst.msk [vmem:[#allocation2 + $0xd8] sm:$0xff] %vm203, %v198
      %232 = vst.msk [vmem:[#allocation2 + $0xe0] sm:$0xff] %vm203, %v199
      %233 = vst.msk [vmem:[#allocation2 + $0xe8] sm:$0xff] %vm203, %v200
      %234 = vst.msk [vmem:[#allocation2 + $0xf0] sm:$0xff] %vm203, %v201
      %235 = vst.msk [vmem:[#allocation2 + $0xf8] sm:$0xff] %vm203, %v202
      %s236 = scalar_lea.vmem %s165, 576
      %v237 = vld [vmem:[%s236] sm:$0xff]
      %v238 = vld [vmem:[%s236 + $0x10] sm:$0xff]
      %v239 = vld [vmem:[%s236 + $0x20] sm:$0xff]
      %v240 = vld [vmem:[%s236 + $0x30] sm:$0xff]
      %v241 = vld [vmem:[%s236 + $0x40] sm:$0xff]
      %v242 = vld [vmem:[%s236 + $0x50] sm:$0xff]
      %v243 = vld [vmem:[%s236 + $0x60] sm:$0xff]
      %v244 = vld [vmem:[%s236 + $0x70] sm:$0xff]
      %v245 = vld [vmem:[%s236 + $0x90] sm:$0xff]
      %v246 = vld [vmem:[%s236 + $0xa0] sm:$0xff]
      %v247 = vld [vmem:[%s236 + $0xb0] sm:$0xff]
      %v248 = vld [vmem:[%s236 + $0xc0] sm:$0xff]
      %v249 = vld [vmem:[%s236 + $0xd0] sm:$0xff]
      %v250 = vld [vmem:[%s236 + $0xe0] sm:$0xff]
      %v251 = vld [vmem:[%s236 + $0xf0] sm:$0xff]
      %v252 = vld [vmem:[%s236 + $0x100] sm:$0xff]
      %v253 = vld [vmem:[%s236 + $0x120] sm:$0xff]
      %v254 = vld [vmem:[%s236 + $0x130] sm:$0xff]
      %v255 = vld [vmem:[%s236 + $0x140] sm:$0xff]
      %v256 = vld [vmem:[%s236 + $0x150] sm:$0xff]
      %v257 = vld [vmem:[%s236 + $0x160] sm:$0xff]
      %v258 = vld [vmem:[%s236 + $0x170] sm:$0xff]
      %v259 = vld [vmem:[%s236 + $0x180] sm:$0xff]
      %v260 = vld [vmem:[%s236 + $0x190] sm:$0xff]
      %v261 = vld [vmem:[%s236 + $0x1b0] sm:$0xff]
      %v262 = vld [vmem:[%s236 + $0x1c0] sm:$0xff]
      %v263 = vld [vmem:[%s236 + $0x1d0] sm:$0xff]
      %v264 = vld [vmem:[%s236 + $0x1e0] sm:$0xff]
      %v265 = vld [vmem:[%s236 + $0x1f0] sm:$0xff]
      %v266 = vld [vmem:[%s236 + $0x200] sm:$0xff]
      %v267 = vld [vmem:[%s236 + $0x210] sm:$0xff]
      %v268 = vld [vmem:[%s236 + $0x220] sm:$0xff]
      %301 = vrot.lane.b32.xlu0 %v237, 4
      %v302 = vpop.permute.xlu0 %301
      %303 = vrot.lane.b32.xlu0 %v238, 4
      %v304 = vpop.permute.xlu0 %303
      %305 = vrot.lane.b32.xlu0 %v239, 4
      %v306 = vpop.permute.xlu0 %305
      %307 = vrot.lane.b32.xlu0 %v240, 4
      %v308 = vpop.permute.xlu0 %307
      %309 = vrot.lane.b32.xlu0 %v241, 4
      %v310 = vpop.permute.xlu0 %309
      %311 = vrot.lane.b32.xlu0 %v242, 4
      %v312 = vpop.permute.xlu0 %311
      %313 = vrot.lane.b32.xlu0 %v243, 4
      %v314 = vpop.permute.xlu0 %313
      %315 = vrot.lane.b32.xlu0 %v244, 4
      %v316 = vpop.permute.xlu0 %315
      %317 = vrot.lane.b32.xlu0 %v245, 4
      %v318 = vpop.permute.xlu0 %317
      %319 = vrot.lane.b32.xlu0 %v246, 4
      %v320 = vpop.permute.xlu0 %319
      %321 = vrot.lane.b32.xlu0 %v247, 4
      %v322 = vpop.permute.xlu0 %321
      %323 = vrot.lane.b32.xlu0 %v248, 4
      %v324 = vpop.permute.xlu0 %323
      %325 = vrot.lane.b32.xlu0 %v249, 4
      %v326 = vpop.permute.xlu0 %325
      %327 = vrot.lane.b32.xlu0 %v250, 4
      %v328 = vpop.permute.xlu0 %327
      %329 = vrot.lane.b32.xlu0 %v251, 4
      %v330 = vpop.permute.xlu0 %329
      %331 = vrot.lane.b32.xlu0 %v252, 4
      %v332 = vpop.permute.xlu0 %331
      %333 = vrot.lane.b32.xlu0 %v253, 4
      %v334 = vpop.permute.xlu0 %333
      %335 = vrot.lane.b32.xlu0 %v254, 4
      %v336 = vpop.permute.xlu0 %335
      %337 = vrot.lane.b32.xlu0 %v255, 4
      %v338 = vpop.permute.xlu0 %337
      %339 = vrot.lane.b32.xlu0 %v256, 4
      %v340 = vpop.permute.xlu0 %339
      %341 = vrot.lane.b32.xlu0 %v257, 4
      %v342 = vpop.permute.xlu0 %341
      %343 = vrot.lane.b32.xlu0 %v258, 4
      %v344 = vpop.permute.xlu0 %343
      %345 = vrot.lane.b32.xlu0 %v259, 4
      %v346 = vpop.permute.xlu0 %345
      %347 = vrot.lane.b32.xlu0 %v260, 4
      %v348 = vpop.permute.xlu0 %347
      %349 = vrot.lane.b32.xlu0 %v261, 4
      %v350 = vpop.permute.xlu0 %349
      %351 = vrot.lane.b32.xlu0 %v262, 4
      %v352 = vpop.permute.xlu0 %351
      %353 = vrot.lane.b32.xlu0 %v263, 4
      %v354 = vpop.permute.xlu0 %353
      %355 = vrot.lane.b32.xlu0 %v264, 4
      %v356 = vpop.permute.xlu0 %355
      %357 = vrot.lane.b32.xlu0 %v265, 4
      %v358 = vpop.permute.xlu0 %357
      %359 = vrot.lane.b32.xlu0 %v266, 4
      %v360 = vpop.permute.xlu0 %359
      %361 = vrot.lane.b32.xlu0 %v267, 4
      %v362 = vpop.permute.xlu0 %361
      %363 = vrot.lane.b32.xlu0 %v268, 4
      %v364 = vpop.permute.xlu0 %363
      %vm397 = vcmask 64544
      %398 = vst.msk [vmem:[#allocation2] sm:$0xff] %vm397, %v302
      %399 = vst.msk [vmem:[#allocation2 + $0x8] sm:$0xff] %vm397, %v304
      %400 = vst.msk [vmem:[#allocation2 + $0x10] sm:$0xff] %vm397, %v306
      %401 = vst.msk [vmem:[#allocation2 + $0x18] sm:$0xff] %vm397, %v308
      %402 = vst.msk [vmem:[#allocation2 + $0x20] sm:$0xff] %vm397, %v310
      %403 = vst.msk [vmem:[#allocation2 + $0x28] sm:$0xff] %vm397, %v312
      %404 = vst.msk [vmem:[#allocation2 + $0x30] sm:$0xff] %vm397, %v314
      %405 = vst.msk [vmem:[#allocation2 + $0x38] sm:$0xff] %vm397, %v316
      %406 = vst.msk [vmem:[#allocation2 + $0x40] sm:$0xff] %vm397, %v318
      %407 = vst.msk [vmem:[#allocation2 + $0x48] sm:$0xff] %vm397, %v320
      %408 = vst.msk [vmem:[#allocation2 + $0x50] sm:$0xff] %vm397, %v322
      %409 = vst.msk [vmem:[#allocation2 + $0x58] sm:$0xff] %vm397, %v324
      %410 = vst.msk [vmem:[#allocation2 + $0x60] sm:$0xff] %vm397, %v326
      %411 = vst.msk [vmem:[#allocation2 + $0x68] sm:$0xff] %vm397, %v328
      %412 = vst.msk [vmem:[#allocation2 + $0x70] sm:$0xff] %vm397, %v330
      %413 = vst.msk [vmem:[#allocation2 + $0x78] sm:$0xff] %vm397, %v332
      %414 = vst.msk [vmem:[#allocation2 + $0x80] sm:$0xff] %vm397, %v334
      %415 = vst.msk [vmem:[#allocation2 + $0x88] sm:$0xff] %vm397, %v336
      %416 = vst.msk [vmem:[#allocation2 + $0x90] sm:$0xff] %vm397, %v338
      %417 = vst.msk [vmem:[#allocation2 + $0x98] sm:$0xff] %vm397, %v340
      %418 = vst.msk [vmem:[#allocation2 + $0xa0] sm:$0xff] %vm397, %v342
      %419 = vst.msk [vmem:[#allocation2 + $0xa8] sm:$0xff] %vm397, %v344
      %420 = vst.msk [vmem:[#allocation2 + $0xb0] sm:$0xff] %vm397, %v346
      %421 = vst.msk [vmem:[#allocation2 + $0xb8] sm:$0xff] %vm397, %v348
      %422 = vst.msk [vmem:[#allocation2 + $0xc0] sm:$0xff] %vm397, %v350
      %423 = vst.msk [vmem:[#allocation2 + $0xc8] sm:$0xff] %vm397, %v352
      %424 = vst.msk [vmem:[#allocation2 + $0xd0] sm:$0xff] %vm397, %v354
      %425 = vst.msk [vmem:[#allocation2 + $0xd8] sm:$0xff] %vm397, %v356
      %426 = vst.msk [vmem:[#allocation2 + $0xe0] sm:$0xff] %vm397, %v358
      %427 = vst.msk [vmem:[#allocation2 + $0xe8] sm:$0xff] %vm397, %v360
      %428 = vst.msk [vmem:[#allocation2 + $0xf0] sm:$0xff] %vm397, %v362
      %429 = vst.msk [vmem:[#allocation2 + $0xf8] sm:$0xff] %vm397, %v364
      %v430 = vld [vmem:[%s165 + $0x1] sm:$0xff]
      %v431 = vld [vmem:[%s165 + $0x11] sm:$0xff]
      %v432 = vld [vmem:[%s165 + $0x21] sm:$0xff]
      %v433 = vld [vmem:[%s165 + $0x31] sm:$0xff]
      %v434 = vld [vmem:[%s165 + $0x41] sm:$0xff]
      %v435 = vld [vmem:[%s165 + $0x51] sm:$0xff]
      %v436 = vld [vmem:[%s165 + $0x61] sm:$0xff]
      %v437 = vld [vmem:[%s165 + $0x71] sm:$0xff]
      %v438 = vld [vmem:[%s165 + $0x91] sm:$0xff]
      %v439 = vld [vmem:[%s165 + $0xa1] sm:$0xff]
      %v440 = vld [vmem:[%s165 + $0xb1] sm:$0xff]
      %v441 = vld [vmem:[%s165 + $0xc1] sm:$0xff]
      %v442 = vld [vmem:[%s165 + $0xd1] sm:$0xff]
      %v443 = vld [vmem:[%s165 + $0xe1] sm:$0xff]
      %v444 = vld [vmem:[%s165 + $0xf1] sm:$0xff]
      %v445 = vld [vmem:[%s165 + $0x101] sm:$0xff]
      %v446 = vld [vmem:[%s165 + $0x121] sm:$0xff]
      %v447 = vld [vmem:[%s165 + $0x131] sm:$0xff]
      %v448 = vld [vmem:[%s165 + $0x141] sm:$0xff]
      %v449 = vld [vmem:[%s165 + $0x151] sm:$0xff]
      %v450 = vld [vmem:[%s165 + $0x161] sm:$0xff]
      %v451 = vld [vmem:[%s165 + $0x171] sm:$0xff]
      %v452 = vld [vmem:[%s165 + $0x181] sm:$0xff]
      %v453 = vld [vmem:[%s165 + $0x191] sm:$0xff]
      %v454 = vld [vmem:[%s165 + $0x1b1] sm:$0xff]
      %v455 = vld [vmem:[%s165 + $0x1c1] sm:$0xff]
      %v456 = vld [vmem:[%s165 + $0x1d1] sm:$0xff]
      %v457 = vld [vmem:[%s165 + $0x1e1] sm:$0xff]
      %v458 = vld [vmem:[%s165 + $0x1f1] sm:$0xff]
      %v459 = vld [vmem:[%s165 + $0x201] sm:$0xff]
      %v460 = vld [vmem:[%s165 + $0x211] sm:$0xff]
      %v461 = vld [vmem:[%s165 + $0x221] sm:$0xff]
      %494 = vrot.lane.b32.xlu0 %v430, 8
      %v495 = vpop.permute.xlu0 %494
      %496 = vrot.lane.b32.xlu0 %v431, 8
      %v497 = vpop.permute.xlu0 %496
      %498 = vrot.lane.b32.xlu0 %v432, 8
      %v499 = vpop.permute.xlu0 %498
      %500 = vrot.lane.b32.xlu0 %v433, 8
      %v501 = vpop.permute.xlu0 %500
      %502 = vrot.lane.b32.xlu0 %v434, 8
      %v503 = vpop.permute.xlu0 %502
      %504 = vrot.lane.b32.xlu0 %v435, 8
      %v505 = vpop.permute.xlu0 %504
      %506 = vrot.lane.b32.xlu0 %v436, 8
      %v507 = vpop.permute.xlu0 %506
      %508 = vrot.lane.b32.xlu0 %v437, 8
      %v509 = vpop.permute.xlu0 %508
      %510 = vrot.lane.b32.xlu0 %v438, 8
      %v511 = vpop.permute.xlu0 %510
      %512 = vrot.lane.b32.xlu0 %v439, 8
      %v513 = vpop.permute.xlu0 %512
      %514 = vrot.lane.b32.xlu0 %v440, 8
      %v515 = vpop.permute.xlu0 %514
      %516 = vrot.lane.b32.xlu0 %v441, 8
      %v517 = vpop.permute.xlu0 %516
      %518 = vrot.lane.b32.xlu0 %v442, 8
      %v519 = vpop.permute.xlu0 %518
      %520 = vrot.lane.b32.xlu0 %v443, 8
      %v521 = vpop.permute.xlu0 %520
      %522 = vrot.lane.b32.xlu0 %v444, 8
      %v523 = vpop.permute.xlu0 %522
      %524 = vrot.lane.b32.xlu0 %v445, 8
      %v525 = vpop.permute.xlu0 %524
      %526 = vrot.lane.b32.xlu0 %v446, 8
      %v527 = vpop.permute.xlu0 %526
      %528 = vrot.lane.b32.xlu0 %v447, 8
      %v529 = vpop.permute.xlu0 %528
      %530 = vrot.lane.b32.xlu0 %v448, 8
      %v531 = vpop.permute.xlu0 %530
      %532 = vrot.lane.b32.xlu0 %v449, 8
      %v533 = vpop.permute.xlu0 %532
      %534 = vrot.lane.b32.xlu0 %v450, 8
      %v535 = vpop.permute.xlu0 %534
      %536 = vrot.lane.b32.xlu0 %v451, 8
      %v537 = vpop.permute.xlu0 %536
      %538 = vrot.lane.b32.xlu0 %v452, 8
      %v539 = vpop.permute.xlu0 %538
      %540 = vrot.lane.b32.xlu0 %v453, 8
      %v541 = vpop.permute.xlu0 %540
      %542 = vrot.lane.b32.xlu0 %v454, 8
      %v543 = vpop.permute.xlu0 %542
      %544 = vrot.lane.b32.xlu0 %v455, 8
      %v545 = vpop.permute.xlu0 %544
      %546 = vrot.lane.b32.xlu0 %v456, 8
      %v547 = vpop.permute.xlu0 %546
      %548 = vrot.lane.b32.xlu0 %v457, 8
      %v549 = vpop.permute.xlu0 %548
      %550 = vrot.lane.b32.xlu0 %v458, 8
      %v551 = vpop.permute.xlu0 %550
      %552 = vrot.lane.b32.xlu0 %v459, 8
      %v553 = vpop.permute.xlu0 %552
      %554 = vrot.lane.b32.xlu0 %v460, 8
      %v555 = vpop.permute.xlu0 %554
      %556 = vrot.lane.b32.xlu0 %v461, 8
      %v557 = vpop.permute.xlu0 %556
      %vm590 = vcmask 97344
      %591 = vst.msk [vmem:[#allocation2] sm:$0xff] %vm590, %v495
      %592 = vst.msk [vmem:[#allocation2 + $0x8] sm:$0xff] %vm590, %v497
      %593 = vst.msk [vmem:[#allocation2 + $0x10] sm:$0xff] %vm590, %v499
      %594 = vst.msk [vmem:[#allocation2 + $0x18] sm:$0xff] %vm590, %v501
      %595 = vst.msk [vmem:[#allocation2 + $0x20] sm:$0xff] %vm590, %v503
      %596 = vst.msk [vmem:[#allocation2 + $0x28] sm:$0xff] %vm590, %v505
      %597 = vst.msk [vmem:[#allocation2 + $0x30] sm:$0xff] %vm590, %v507
      %598 = vst.msk [vmem:[#allocation2 + $0x38] sm:$0xff] %vm590, %v509
      %599 = vst.msk [vmem:[#allocation2 + $0x40] sm:$0xff] %vm590, %v511
      %600 = vst.msk [vmem:[#allocation2 + $0x48] sm:$0xff] %vm590, %v513
      %601 = vst.msk [vmem:[#allocation2 + $0x50] sm:$0xff] %vm590, %v515
      %602 = vst.msk [vmem:[#allocation2 + $0x58] sm:$0xff] %vm590, %v517
      %603 = vst.msk [vmem:[#allocation2 + $0x60] sm:$0xff] %vm590, %v519
      %604 = vst.msk [vmem:[#allocation2 + $0x68] sm:$0xff] %vm590, %v521
      %605 = vst.msk [vmem:[#allocation2 + $0x70] sm:$0xff] %vm590, %v523
      %606 = vst.msk [vmem:[#allocation2 + $0x78] sm:$0xff] %vm590, %v525
      %607 = vst.msk [vmem:[#allocation2 + $0x80] sm:$0xff] %vm590, %v527
      %608 = vst.msk [vmem:[#allocation2 + $0x88] sm:$0xff] %vm590, %v529
      %609 = vst.msk [vmem:[#allocation2 + $0x90] sm:$0xff] %vm590, %v531
      %610 = vst.msk [vmem:[#allocation2 + $0x98] sm:$0xff] %vm590, %v533
      %611 = vst.msk [vmem:[#allocation2 + $0xa0] sm:$0xff] %vm590, %v535
      %612 = vst.msk [vmem:[#allocation2 + $0xa8] sm:$0xff] %vm590, %v537
      %613 = vst.msk [vmem:[#allocation2 + $0xb0] sm:$0xff] %vm590, %v539
      %614 = vst.msk [vmem:[#allocation2 + $0xb8] sm:$0xff] %vm590, %v541
      %615 = vst.msk [vmem:[#allocation2 + $0xc0] sm:$0xff] %vm590, %v543
      %616 = vst.msk [vmem:[#allocation2 + $0xc8] sm:$0xff] %vm590, %v545
      %617 = vst.msk [vmem:[#allocation2 + $0xd0] sm:$0xff] %vm590, %v547
      %618 = vst.msk [vmem:[#allocation2 + $0xd8] sm:$0xff] %vm590, %v549
      %619 = vst.msk [vmem:[#allocation2 + $0xe0] sm:$0xff] %vm590, %v551
      %620 = vst.msk [vmem:[#allocation2 + $0xe8] sm:$0xff] %vm590, %v553
      %621 = vst.msk [vmem:[#allocation2 + $0xf0] sm:$0xff] %vm590, %v555
      %622 = vst.msk [vmem:[#allocation2 + $0xf8] sm:$0xff] %vm590, %v557
      %s623 = scalar_lea.vmem %s165, 1152
      %v624 = vld [vmem:[%s623] sm:$0xff]
      %v625 = vld [vmem:[%s623 + $0x10] sm:$0xff]
      %v626 = vld [vmem:[%s623 + $0x20] sm:$0xff]
      %v627 = vld [vmem:[%s623 + $0x30] sm:$0xff]
      %v628 = vld [vmem:[%s623 + $0x40] sm:$0xff]
      %v629 = vld [vmem:[%s623 + $0x50] sm:$0xff]
      %v630 = vld [vmem:[%s623 + $0x60] sm:$0xff]
      %v631 = vld [vmem:[%s623 + $0x70] sm:$0xff]
      %v632 = vld [vmem:[%s623 + $0x90] sm:$0xff]
      %v633 = vld [vmem:[%s623 + $0xa0] sm:$0xff]
      %v634 = vld [vmem:[%s623 + $0xb0] sm:$0xff]
      %v635 = vld [vmem:[%s623 + $0xc0] sm:$0xff]
      %v636 = vld [vmem:[%s623 + $0xd0] sm:$0xff]
      %v637 = vld [vmem:[%s623 + $0xe0] sm:$0xff]
      %v638 = vld [vmem:[%s623 + $0xf0] sm:$0xff]
      %v639 = vld [vmem:[%s623 + $0x100] sm:$0xff]
      %v640 = vld [vmem:[%s623 + $0x120] sm:$0xff]
      %v641 = vld [vmem:[%s623 + $0x130] sm:$0xff]
      %v642 = vld [vmem:[%s623 + $0x140] sm:$0xff]
      %v643 = vld [vmem:[%s623 + $0x150] sm:$0xff]
      %v644 = vld [vmem:[%s623 + $0x160] sm:$0xff]
      %v645 = vld [vmem:[%s623 + $0x170] sm:$0xff]
      %v646 = vld [vmem:[%s623 + $0x180] sm:$0xff]
      %v647 = vld [vmem:[%s623 + $0x190] sm:$0xff]
      %v648 = vld [vmem:[%s623 + $0x1b0] sm:$0xff]
      %v649 = vld [vmem:[%s623 + $0x1c0] sm:$0xff]
      %v650 = vld [vmem:[%s623 + $0x1d0] sm:$0xff]
      %v651 = vld [vmem:[%s623 + $0x1e0] sm:$0xff]
      %v652 = vld [vmem:[%s623 + $0x1f0] sm:$0xff]
      %v653 = vld [vmem:[%s623 + $0x200] sm:$0xff]
      %v654 = vld [vmem:[%s623 + $0x210] sm:$0xff]
      %v655 = vld [vmem:[%s623 + $0x220] sm:$0xff]
      %688 = vrot.lane.b32.xlu0 %v624, 12
      %v689 = vpop.permute.xlu0 %688
      %690 = vrot.lane.b32.xlu0 %v625, 12
      %v691 = vpop.permute.xlu0 %690
      %692 = vrot.lane.b32.xlu0 %v626, 12
      %v693 = vpop.permute.xlu0 %692
      %694 = vrot.lane.b32.xlu0 %v627, 12
      %v695 = vpop.permute.xlu0 %694
      %696 = vrot.lane.b32.xlu0 %v628, 12
      %v697 = vpop.permute.xlu0 %696
      %698 = vrot.lane.b32.xlu0 %v629, 12
      %v699 = vpop.permute.xlu0 %698
      %700 = vrot.lane.b32.xlu0 %v630, 12
      %v701 = vpop.permute.xlu0 %700
      %702 = vrot.lane.b32.xlu0 %v631, 12
      %v703 = vpop.permute.xlu0 %702
      %704 = vrot.lane.b32.xlu0 %v632, 12
      %v705 = vpop.permute.xlu0 %704
      %706 = vrot.lane.b32.xlu0 %v633, 12
      %v707 = vpop.permute.xlu0 %706
      %708 = vrot.lane.b32.xlu0 %v634, 12
      %v709 = vpop.permute.xlu0 %708
      %710 = vrot.lane.b32.xlu0 %v635, 12
      %v711 = vpop.permute.xlu0 %710
      %712 = vrot.lane.b32.xlu0 %v636, 12
      %v713 = vpop.permute.xlu0 %712
      %714 = vrot.lane.b32.xlu0 %v637, 12
      %v715 = vpop.permute.xlu0 %714
      %716 = vrot.lane.b32.xlu0 %v638, 12
      %v717 = vpop.permute.xlu0 %716
      %718 = vrot.lane.b32.xlu0 %v639, 12
      %v719 = vpop.permute.xlu0 %718
      %720 = vrot.lane.b32.xlu0 %v640, 12
      %v721 = vpop.permute.xlu0 %720
      %722 = vrot.lane.b32.xlu0 %v641, 12
      %v723 = vpop.permute.xlu0 %722
      %724 = vrot.lane.b32.xlu0 %v642, 12
      %v725 = vpop.permute.xlu0 %724
      %726 = vrot.lane.b32.xlu0 %v643, 12
      %v727 = vpop.permute.xlu0 %726
      %728 = vrot.lane.b32.xlu0 %v644, 12
      %v729 = vpop.permute.xlu0 %728
      %730 = vrot.lane.b32.xlu0 %v645, 12
      %v731 = vpop.permute.xlu0 %730
      %732 = vrot.lane.b32.xlu0 %v646, 12
      %v733 = vpop.permute.xlu0 %732
      %734 = vrot.lane.b32.xlu0 %v647, 12
      %v735 = vpop.permute.xlu0 %734
      %736 = vrot.lane.b32.xlu0 %v648, 12
      %v737 = vpop.permute.xlu0 %736
      %738 = vrot.lane.b32.xlu0 %v649, 12
      %v739 = vpop.permute.xlu0 %738
      %740 = vrot.lane.b32.xlu0 %v650, 12
      %v741 = vpop.permute.xlu0 %740
      %742 = vrot.lane.b32.xlu0 %v651, 12
      %v743 = vpop.permute.xlu0 %742
      %744 = vrot.lane.b32.xlu0 %v652, 12
      %v745 = vpop.permute.xlu0 %744
      %746 = vrot.lane.b32.xlu0 %v653, 12
      %v747 = vpop.permute.xlu0 %746
      %748 = vrot.lane.b32.xlu0 %v654, 12
      %v749 = vpop.permute.xlu0 %748
      %750 = vrot.lane.b32.xlu0 %v655, 12
      %v751 = vpop.permute.xlu0 %750
      %vm784 = vcmask 130144
      %785 = vst.msk [vmem:[#allocation2] sm:$0xff] %vm784, %v689
      %786 = vst.msk [vmem:[#allocation2 + $0x8] sm:$0xff] %vm784, %v691
      %787 = vst.msk [vmem:[#allocation2 + $0x10] sm:$0xff] %vm784, %v693
      %788 = vst.msk [vmem:[#allocation2 + $0x18] sm:$0xff] %vm784, %v695
      %789 = vst.msk [vmem:[#allocation2 + $0x20] sm:$0xff] %vm784, %v697
      %790 = vst.msk [vmem:[#allocation2 + $0x28] sm:$0xff] %vm784, %v699
      %791 = vst.msk [vmem:[#allocation2 + $0x30] sm:$0xff] %vm784, %v701
      %792 = vst.msk [vmem:[#allocation2 + $0x38] sm:$0xff] %vm784, %v703
      %793 = vst.msk [vmem:[#allocation2 + $0x40] sm:$0xff] %vm784, %v705
      %794 = vst.msk [vmem:[#allocation2 + $0x48] sm:$0xff] %vm784, %v707
      %795 = vst.msk [vmem:[#allocation2 + $0x50] sm:$0xff] %vm784, %v709
      %796 = vst.msk [vmem:[#allocation2 + $0x58] sm:$0xff] %vm784, %v711
      %797 = vst.msk [vmem:[#allocation2 + $0x60] sm:$0xff] %vm784, %v713
      %798 = vst.msk [vmem:[#allocation2 + $0x68] sm:$0xff] %vm784, %v715
      %799 = vst.msk [vmem:[#allocation2 + $0x70] sm:$0xff] %vm784, %v717
      %800 = vst.msk [vmem:[#allocation2 + $0x78] sm:$0xff] %vm784, %v719
      %801 = vst.msk [vmem:[#allocation2 + $0x80] sm:$0xff] %vm784, %v721
      %802 = vst.msk [vmem:[#allocation2 + $0x88] sm:$0xff] %vm784, %v723
      %803 = vst.msk [vmem:[#allocation2 + $0x90] sm:$0xff] %vm784, %v725
      %804 = vst.msk [vmem:[#allocation2 + $0x98] sm:$0xff] %vm784, %v727
      %805 = vst.msk [vmem:[#allocation2 + $0xa0] sm:$0xff] %vm784, %v729
      %806 = vst.msk [vmem:[#allocation2 + $0xa8] sm:$0xff] %vm784, %v731
      %807 = vst.msk [vmem:[#allocation2 + $0xb0] sm:$0xff] %vm784, %v733
      %808 = vst.msk [vmem:[#allocation2 + $0xb8] sm:$0xff] %vm784, %v735
      %809 = vst.msk [vmem:[#allocation2 + $0xc0] sm:$0xff] %vm784, %v737
      %810 = vst.msk [vmem:[#allocation2 + $0xc8] sm:$0xff] %vm784, %v739
      %811 = vst.msk [vmem:[#allocation2 + $0xd0] sm:$0xff] %vm784, %v741
      %812 = vst.msk [vmem:[#allocation2 + $0xd8] sm:$0xff] %vm784, %v743
      %813 = vst.msk [vmem:[#allocation2 + $0xe0] sm:$0xff] %vm784, %v745
      %814 = vst.msk [vmem:[#allocation2 + $0xe8] sm:$0xff] %vm784, %v747
      %815 = vst.msk [vmem:[#allocation2 + $0xf0] sm:$0xff] %vm784, %v749
      %816 = vst.msk [vmem:[#allocation2 + $0xf8] sm:$0xff] %vm784, %v751
      %s817 = scalar_lea.vmem %s165, 1728
      %v818 = vld [vmem:[%s817] sm:$0xff]
      %v819 = vld [vmem:[%s817 + $0x10] sm:$0xff]
      %v820 = vld [vmem:[%s817 + $0x20] sm:$0xff]
      %v821 = vld [vmem:[%s817 + $0x30] sm:$0xff]
      %v822 = vld [vmem:[%s817 + $0x40] sm:$0xff]
      %v823 = vld [vmem:[%s817 + $0x50] sm:$0xff]
      %v824 = vld [vmem:[%s817 + $0x60] sm:$0xff]
      %v825 = vld [vmem:[%s817 + $0x70] sm:$0xff]
      %v826 = vld [vmem:[%s817 + $0x90] sm:$0xff]
      %v827 = vld [vmem:[%s817 + $0xa0] sm:$0xff]
      %v828 = vld [vmem:[%s817 + $0xb0] sm:$0xff]
      %v829 = vld [vmem:[%s817 + $0xc0] sm:$0xff]
      %v830 = vld [vmem:[%s817 + $0xd0] sm:$0xff]
      %v831 = vld [vmem:[%s817 + $0xe0] sm:$0xff]
      %v832 = vld [vmem:[%s817 + $0xf0] sm:$0xff]
      %v833 = vld [vmem:[%s817 + $0x100] sm:$0xff]
      %v834 = vld [vmem:[%s817 + $0x120] sm:$0xff]
      %v835 = vld [vmem:[%s817 + $0x130] sm:$0xff]
      %v836 = vld [vmem:[%s817 + $0x140] sm:$0xff]
      %v837 = vld [vmem:[%s817 + $0x150] sm:$0xff]
      %v838 = vld [vmem:[%s817 + $0x160] sm:$0xff]
      %v839 = vld [vmem:[%s817 + $0x170] sm:$0xff]
      %v840 = vld [vmem:[%s817 + $0x180] sm:$0xff]
      %v841 = vld [vmem:[%s817 + $0x190] sm:$0xff]
      %v842 = vld [vmem:[%s817 + $0x1b0] sm:$0xff]
      %v843 = vld [vmem:[%s817 + $0x1c0] sm:$0xff]
      %v844 = vld [vmem:[%s817 + $0x1d0] sm:$0xff]
      %v845 = vld [vmem:[%s817 + $0x1e0] sm:$0xff]
      %v846 = vld [vmem:[%s817 + $0x1f0] sm:$0xff]
      %v847 = vld [vmem:[%s817 + $0x200] sm:$0xff]
      %v848 = vld [vmem:[%s817 + $0x210] sm:$0xff]
      %v849 = vld [vmem:[%s817 + $0x220] sm:$0xff]
      %882 = vrot.lane.b32.xlu0 %v818, 16
      %v883 = vpop.permute.xlu0 %882
      %884 = vrot.lane.b32.xlu0 %v819, 16
      %v885 = vpop.permute.xlu0 %884
      %886 = vrot.lane.b32.xlu0 %v820, 16
      %v887 = vpop.permute.xlu0 %886
      %888 = vrot.lane.b32.xlu0 %v821, 16
      %v889 = vpop.permute.xlu0 %888
      %890 = vrot.lane.b32.xlu0 %v822, 16
      %v891 = vpop.permute.xlu0 %890
      %892 = vrot.lane.b32.xlu0 %v823, 16
      %v893 = vpop.permute.xlu0 %892
      %894 = vrot.lane.b32.xlu0 %v824, 16
      %v895 = vpop.permute.xlu0 %894
      %896 = vrot.lane.b32.xlu0 %v825, 16
      %v897 = vpop.permute.xlu0 %896
      %898 = vrot.lane.b32.xlu0 %v826, 16
      %v899 = vpop.permute.xlu0 %898
      %900 = vrot.lane.b32.xlu0 %v827, 16
      %v901 = vpop.permute.xlu0 %900
      %902 = vrot.lane.b32.xlu0 %v828, 16
      %v903 = vpop.permute.xlu0 %902
      %904 = vrot.lane.b32.xlu0 %v829, 16
      %v905 = vpop.permute.xlu0 %904
      %906 = vrot.lane.b32.xlu0 %v830, 16
      %v907 = vpop.permute.xlu0 %906
      %908 = vrot.lane.b32.xlu0 %v831, 16
      %v909 = vpop.permute.xlu0 %908
      %910 = vrot.lane.b32.xlu0 %v832, 16
      %v911 = vpop.permute.xlu0 %910
      %912 = vrot.lane.b32.xlu0 %v833, 16
      %v913 = vpop.permute.xlu0 %912
      %914 = vrot.lane.b32.xlu0 %v834, 16
      %v915 = vpop.permute.xlu0 %914
      %916 = vrot.lane.b32.xlu0 %v835, 16
      %v917 = vpop.permute.xlu0 %916
      %918 = vrot.lane.b32.xlu0 %v836, 16
      %v919 = vpop.permute.xlu0 %918
      %920 = vrot.lane.b32.xlu0 %v837, 16
      %v921 = vpop.permute.xlu0 %920
      %922 = vrot.lane.b32.xlu0 %v838, 16
      %v923 = vpop.permute.xlu0 %922
      %924 = vrot.lane.b32.xlu0 %v839, 16
      %v925 = vpop.permute.xlu0 %924
      %926 = vrot.lane.b32.xlu0 %v840, 16
      %v927 = vpop.permute.xlu0 %926
      %928 = vrot.lane.b32.xlu0 %v841, 16
      %v929 = vpop.permute.xlu0 %928
      %930 = vrot.lane.b32.xlu0 %v842, 16
      %v931 = vpop.permute.xlu0 %930
      %932 = vrot.lane.b32.xlu0 %v843, 16
      %v933 = vpop.permute.xlu0 %932
      %934 = vrot.lane.b32.xlu0 %v844, 16
      %v935 = vpop.permute.xlu0 %934
      %936 = vrot.lane.b32.xlu0 %v845, 16
      %v937 = vpop.permute.xlu0 %936
      %938 = vrot.lane.b32.xlu0 %v846, 16
      %v939 = vpop.permute.xlu0 %938
      %940 = vrot.lane.b32.xlu0 %v847, 16
      %v941 = vpop.permute.xlu0 %940
      %942 = vrot.lane.b32.xlu0 %v848, 16
      %v943 = vpop.permute.xlu0 %942
      %944 = vrot.lane.b32.xlu0 %v849, 16
      %v945 = vpop.permute.xlu0 %944
      %vm978 = vcmask 162944
      %979 = vst.msk [vmem:[#allocation2] sm:$0xff] %vm978, %v883
      %980 = vst.msk [vmem:[#allocation2 + $0x8] sm:$0xff] %vm978, %v885
      %981 = vst.msk [vmem:[#allocation2 + $0x10] sm:$0xff] %vm978, %v887
      %982 = vst.msk [vmem:[#allocation2 + $0x18] sm:$0xff] %vm978, %v889
      %983 = vst.msk [vmem:[#allocation2 + $0x20] sm:$0xff] %vm978, %v891
      %984 = vst.msk [vmem:[#allocation2 + $0x28] sm:$0xff] %vm978, %v893
      %985 = vst.msk [vmem:[#allocation2 + $0x30] sm:$0xff] %vm978, %v895
      %986 = vst.msk [vmem:[#allocation2 + $0x38] sm:$0xff] %vm978, %v897
      %987 = vst.msk [vmem:[#allocation2 + $0x40] sm:$0xff] %vm978, %v899
      %988 = vst.msk [vmem:[#allocation2 + $0x48] sm:$0xff] %vm978, %v901
      %989 = vst.msk [vmem:[#allocation2 + $0x50] sm:$0xff] %vm978, %v903
      %990 = vst.msk [vmem:[#allocation2 + $0x58] sm:$0xff] %vm978, %v905
      %991 = vst.msk [vmem:[#allocation2 + $0x60] sm:$0xff] %vm978, %v907
      %992 = vst.msk [vmem:[#allocation2 + $0x68] sm:$0xff] %vm978, %v909
      %993 = vst.msk [vmem:[#allocation2 + $0x70] sm:$0xff] %vm978, %v911
      %994 = vst.msk [vmem:[#allocation2 + $0x78] sm:$0xff] %vm978, %v913
      %995 = vst.msk [vmem:[#allocation2 + $0x80] sm:$0xff] %vm978, %v915
      %996 = vst.msk [vmem:[#allocation2 + $0x88] sm:$0xff] %vm978, %v917
      %997 = vst.msk [vmem:[#allocation2 + $0x90] sm:$0xff] %vm978, %v919
      %998 = vst.msk [vmem:[#allocation2 + $0x98] sm:$0xff] %vm978, %v921
      %999 = vst.msk [vmem:[#allocation2 + $0xa0] sm:$0xff] %vm978, %v923
      %1000 = vst.msk [vmem:[#allocation2 + $0xa8] sm:$0xff] %vm978, %v925
      %1001 = vst.msk [vmem:[#allocation2 + $0xb0] sm:$0xff] %vm978, %v927
      %1002 = vst.msk [vmem:[#allocation2 + $0xb8] sm:$0xff] %vm978, %v929
      %1003 = vst.msk [vmem:[#allocation2 + $0xc0] sm:$0xff] %vm978, %v931
      %1004 = vst.msk [vmem:[#allocation2 + $0xc8] sm:$0xff] %vm978, %v933
      %1005 = vst.msk [vmem:[#allocation2 + $0xd0] sm:$0xff] %vm978, %v935
      %1006 = vst.msk [vmem:[#allocation2 + $0xd8] sm:$0xff] %vm978, %v937
      %1007 = vst.msk [vmem:[#allocation2 + $0xe0] sm:$0xff] %vm978, %v939
      %1008 = vst.msk [vmem:[#allocation2 + $0xe8] sm:$0xff] %vm978, %v941
      %1009 = vst.msk [vmem:[#allocation2 + $0xf0] sm:$0xff] %vm978, %v943
      %1010 = vst.msk [vmem:[#allocation2 + $0xf8] sm:$0xff] %vm978, %v945
      %v1011 = vld [vmem:[%s623 + $0x1] sm:$0xff]
      %v1012 = vld [vmem:[%s623 + $0x11] sm:$0xff]
      %v1013 = vld [vmem:[%s623 + $0x21] sm:$0xff]
      %v1014 = vld [vmem:[%s623 + $0x31] sm:$0xff]
      %v1015 = vld [vmem:[%s623 + $0x41] sm:$0xff]
      %v1016 = vld [vmem:[%s623 + $0x51] sm:$0xff]
      %v1017 = vld [vmem:[%s623 + $0x61] sm:$0xff]
      %v1018 = vld [vmem:[%s623 + $0x71] sm:$0xff]
      %v1019 = vld [vmem:[%s623 + $0x91] sm:$0xff]
      %v1020 = vld [vmem:[%s623 + $0xa1] sm:$0xff]
      %v1021 = vld [vmem:[%s623 + $0xb1] sm:$0xff]
      %v1022 = vld [vmem:[%s623 + $0xc1] sm:$0xff]
      %v1023 = vld [vmem:[%s623 + $0xd1] sm:$0xff]
      %v1024 = vld [vmem:[%s623 + $0xe1] sm:$0xff]
      %v1025 = vld [vmem:[%s623 + $0xf1] sm:$0xff]
      %v1026 = vld [vmem:[%s623 + $0x101] sm:$0xff]
      %v1027 = vld [vmem:[%s623 + $0x121] sm:$0xff]
      %v1028 = vld [vmem:[%s623 + $0x131] sm:$0xff]
      %v1029 = vld [vmem:[%s623 + $0x141] sm:$0xff]
      %v1030 = vld [vmem:[%s623 + $0x151] sm:$0xff]
      %v1031 = vld [vmem:[%s623 + $0x161] sm:$0xff]
      %v1032 = vld [vmem:[%s623 + $0x171] sm:$0xff]
      %v1033 = vld [vmem:[%s623 + $0x181] sm:$0xff]
      %v1034 = vld [vmem:[%s623 + $0x191] sm:$0xff]
      %v1035 = vld [vmem:[%s623 + $0x1b1] sm:$0xff]
      %v1036 = vld [vmem:[%s623 + $0x1c1] sm:$0xff]
      %v1037 = vld [vmem:[%s623 + $0x1d1] sm:$0xff]
      %v1038 = vld [vmem:[%s623 + $0x1e1] sm:$0xff]
      %v1039 = vld [vmem:[%s623 + $0x1f1] sm:$0xff]
      %v1040 = vld [vmem:[%s623 + $0x201] sm:$0xff]
      %v1041 = vld [vmem:[%s623 + $0x211] sm:$0xff]
      %v1042 = vld [vmem:[%s623 + $0x221] sm:$0xff]
      %1075 = vrot.lane.b32.xlu0 %v1011, 20
      %v1076 = vpop.permute.xlu0 %1075
      %1077 = vrot.lane.b32.xlu0 %v1012, 20
      %v1078 = vpop.permute.xlu0 %1077
      %1079 = vrot.lane.b32.xlu0 %v1013, 20
      %v1080 = vpop.permute.xlu0 %1079
      %1081 = vrot.lane.b32.xlu0 %v1014, 20
      %v1082 = vpop.permute.xlu0 %1081
      %1083 = vrot.lane.b32.xlu0 %v1015, 20
      %v1084 = vpop.permute.xlu0 %1083
      %1085 = vrot.lane.b32.xlu0 %v1016, 20
      %v1086 = vpop.permute.xlu0 %1085
      %1087 = vrot.lane.b32.xlu0 %v1017, 20
      %v1088 = vpop.permute.xlu0 %1087
      %1089 = vrot.lane.b32.xlu0 %v1018, 20
      %v1090 = vpop.permute.xlu0 %1089
      %1091 = vrot.lane.b32.xlu0 %v1019, 20
      %v1092 = vpop.permute.xlu0 %1091
      %1093 = vrot.lane.b32.xlu0 %v1020, 20
      %v1094 = vpop.permute.xlu0 %1093
      %1095 = vrot.lane.b32.xlu0 %v1021, 20
      %v1096 = vpop.permute.xlu0 %1095
      %1097 = vrot.lane.b32.xlu0 %v1022, 20
      %v1098 = vpop.permute.xlu0 %1097
      %1099 = vrot.lane.b32.xlu0 %v1023, 20
      %v1100 = vpop.permute.xlu0 %1099
      %1101 = vrot.lane.b32.xlu0 %v1024, 20
      %v1102 = vpop.permute.xlu0 %1101
      %1103 = vrot.lane.b32.xlu0 %v1025, 20
      %v1104 = vpop.permute.xlu0 %1103
      %1105 = vrot.lane.b32.xlu0 %v1026, 20
      %v1106 = vpop.permute.xlu0 %1105
      %1107 = vrot.lane.b32.xlu0 %v1027, 20
      %v1108 = vpop.permute.xlu0 %1107
      %1109 = vrot.lane.b32.xlu0 %v1028, 20
      %v1110 = vpop.permute.xlu0 %1109
      %1111 = vrot.lane.b32.xlu0 %v1029, 20
      %v1112 = vpop.permute.xlu0 %1111
      %1113 = vrot.lane.b32.xlu0 %v1030, 20
      %v1114 = vpop.permute.xlu0 %1113
      %1115 = vrot.lane.b32.xlu0 %v1031, 20
      %v1116 = vpop.permute.xlu0 %1115
      %1117 = vrot.lane.b32.xlu0 %v1032, 20
      %v1118 = vpop.permute.xlu0 %1117
      %1119 = vrot.lane.b32.xlu0 %v1033, 20
      %v1120 = vpop.permute.xlu0 %1119
      %1121 = vrot.lane.b32.xlu0 %v1034, 20
      %v1122 = vpop.permute.xlu0 %1121
      %1123 = vrot.lane.b32.xlu0 %v1035, 20
      %v1124 = vpop.permute.xlu0 %1123
      %1125 = vrot.lane.b32.xlu0 %v1036, 20
      %v1126 = vpop.permute.xlu0 %1125
      %1127 = vrot.lane.b32.xlu0 %v1037, 20
      %v1128 = vpop.permute.xlu0 %1127
      %1129 = vrot.lane.b32.xlu0 %v1038, 20
      %v1130 = vpop.permute.xlu0 %1129
      %1131 = vrot.lane.b32.xlu0 %v1039, 20
      %v1132 = vpop.permute.xlu0 %1131
      %1133 = vrot.lane.b32.xlu0 %v1040, 20
      %v1134 = vpop.permute.xlu0 %1133
      %1135 = vrot.lane.b32.xlu0 %v1041, 20
      %v1136 = vpop.permute.xlu0 %1135
      %1137 = vrot.lane.b32.xlu0 %v1042, 20
      %v1138 = vpop.permute.xlu0 %1137
      %vm1171 = vcmask 195744
      %1172 = vst.msk [vmem:[#allocation2] sm:$0xff] %vm1171, %v1076
      %1173 = vst.msk [vmem:[#allocation2 + $0x8] sm:$0xff] %vm1171, %v1078
      %1174 = vst.msk [vmem:[#allocation2 + $0x10] sm:$0xff] %vm1171, %v1080
      %1175 = vst.msk [vmem:[#allocation2 + $0x18] sm:$0xff] %vm1171, %v1082
      %1176 = vst.msk [vmem:[#allocation2 + $0x20] sm:$0xff] %vm1171, %v1084
      %1177 = vst.msk [vmem:[#allocation2 + $0x28] sm:$0xff] %vm1171, %v1086
      %1178 = vst.msk [vmem:[#allocation2 + $0x30] sm:$0xff] %vm1171, %v1088
      %1179 = vst.msk [vmem:[#allocation2 + $0x38] sm:$0xff] %vm1171, %v1090
      %1180 = vst.msk [vmem:[#allocation2 + $0x40] sm:$0xff] %vm1171, %v1092
      %1181 = vst.msk [vmem:[#allocation2 + $0x48] sm:$0xff] %vm1171, %v1094
      %1182 = vst.msk [vmem:[#allocation2 + $0x50] sm:$0xff] %vm1171, %v1096
      %1183 = vst.msk [vmem:[#allocation2 + $0x58] sm:$0xff] %vm1171, %v1098
      %1184 = vst.msk [vmem:[#allocation2 + $0x60] sm:$0xff] %vm1171, %v1100
      %1185 = vst.msk [vmem:[#allocation2 + $0x68] sm:$0xff] %vm1171, %v1102
      %1186 = vst.msk [vmem:[#allocation2 + $0x70] sm:$0xff] %vm1171, %v1104
      %1187 = vst.msk [vmem:[#allocation2 + $0x78] sm:$0xff] %vm1171, %v1106
      %1188 = vst.msk [vmem:[#allocation2 + $0x80] sm:$0xff] %vm1171, %v1108
      %1189 = vst.msk [vmem:[#allocation2 + $0x88] sm:$0xff] %vm1171, %v1110
      %1190 = vst.msk [vmem:[#allocation2 + $0x90] sm:$0xff] %vm1171, %v1112
      %1191 = vst.msk [vmem:[#allocation2 + $0x98] sm:$0xff] %vm1171, %v1114
      %1192 = vst.msk [vmem:[#allocation2 + $0xa0] sm:$0xff] %vm1171, %v1116
      %1193 = vst.msk [vmem:[#allocation2 + $0xa8] sm:$0xff] %vm1171, %v1118
      %1194 = vst.msk [vmem:[#allocation2 + $0xb0] sm:$0xff] %vm1171, %v1120
      %1195 = vst.msk [vmem:[#allocation2 + $0xb8] sm:$0xff] %vm1171, %v1122
      %1196 = vst.msk [vmem:[#allocation2 + $0xc0] sm:$0xff] %vm1171, %v1124
      %1197 = vst.msk [vmem:[#allocation2 + $0xc8] sm:$0xff] %vm1171, %v1126
      %1198 = vst.msk [vmem:[#allocation2 + $0xd0] sm:$0xff] %vm1171, %v1128
      %1199 = vst.msk [vmem:[#allocation2 + $0xd8] sm:$0xff] %vm1171, %v1130
      %1200 = vst.msk [vmem:[#allocation2 + $0xe0] sm:$0xff] %vm1171, %v1132
      %1201 = vst.msk [vmem:[#allocation2 + $0xe8] sm:$0xff] %vm1171, %v1134
      %1202 = vst.msk [vmem:[#allocation2 + $0xf0] sm:$0xff] %vm1171, %v1136
      %1203 = vst.msk [vmem:[#allocation2 + $0xf8] sm:$0xff] %vm1171, %v1138
      %s1204 = scalar_lea.vmem %s165, 16
      %v1205 = vld [vmem:[%s1204] sm:$0xff]
      %v1206 = vld [vmem:[%s1204 + $0x10] sm:$0xff]
      %v1207 = vld [vmem:[%s1204 + $0x20] sm:$0xff]
      %v1208 = vld [vmem:[%s1204 + $0x30] sm:$0xff]
      %v1209 = vld [vmem:[%s1204 + $0x40] sm:$0xff]
      %v1210 = vld [vmem:[%s1204 + $0x50] sm:$0xff]
      %v1211 = vld [vmem:[%s1204 + $0x60] sm:$0xff]
      %v1212 = vld [vmem:[%s1204 + $0x70] sm:$0xff]
      %v1213 = vld [vmem:[%s1204 + $0x90] sm:$0xff]
      %v1214 = vld [vmem:[%s1204 + $0xa0] sm:$0xff]
      %v1215 = vld [vmem:[%s1204 + $0xb0] sm:$0xff]
      %v1216 = vld [vmem:[%s1204 + $0xc0] sm:$0xff]
      %v1217 = vld [vmem:[%s1204 + $0xd0] sm:$0xff]
      %v1218 = vld [vmem:[%s1204 + $0xe0] sm:$0xff]
      %v1219 = vld [vmem:[%s1204 + $0xf0] sm:$0xff]
      %v1220 = vld [vmem:[%s1204 + $0x100] sm:$0xff]
      %v1221 = vld [vmem:[%s1204 + $0x120] sm:$0xff]
      %v1222 = vld [vmem:[%s1204 + $0x130] sm:$0xff]
      %v1223 = vld [vmem:[%s1204 + $0x140] sm:$0xff]
      %v1224 = vld [vmem:[%s1204 + $0x150] sm:$0xff]
      %v1225 = vld [vmem:[%s1204 + $0x160] sm:$0xff]
      %v1226 = vld [vmem:[%s1204 + $0x170] sm:$0xff]
      %v1227 = vld [vmem:[%s1204 + $0x180] sm:$0xff]
      %v1228 = vld [vmem:[%s1204 + $0x190] sm:$0xff]
      %v1229 = vld [vmem:[%s1204 + $0x1b0] sm:$0xff]
      %v1230 = vld [vmem:[%s1204 + $0x1c0] sm:$0xff]
      %v1231 = vld [vmem:[%s1204 + $0x1d0] sm:$0xff]
      %v1232 = vld [vmem:[%s1204 + $0x1e0] sm:$0xff]
      %v1233 = vld [vmem:[%s1204 + $0x1f0] sm:$0xff]
      %v1234 = vld [vmem:[%s1204 + $0x200] sm:$0xff]
      %v1235 = vld [vmem:[%s1204 + $0x210] sm:$0xff]
      %v1236 = vld [vmem:[%s1204 + $0x220] sm:$0xff]
      %1269 = vrot.lane.b32.xlu0 %v1205, 24
      %v1270 = vpop.permute.xlu0 %1269
      %1271 = vrot.lane.b32.xlu0 %v1206, 24
      %v1272 = vpop.permute.xlu0 %1271
      %1273 = vrot.lane.b32.xlu0 %v1207, 24
      %v1274 = vpop.permute.xlu0 %1273
      %1275 = vrot.lane.b32.xlu0 %v1208, 24
      %v1276 = vpop.permute.xlu0 %1275
      %1277 = vrot.lane.b32.xlu0 %v1209, 24
      %v1278 = vpop.permute.xlu0 %1277
      %1279 = vrot.lane.b32.xlu0 %v1210, 24
      %v1280 = vpop.permute.xlu0 %1279
      %1281 = vrot.lane.b32.xlu0 %v1211, 24
      %v1282 = vpop.permute.xlu0 %1281
      %1283 = vrot.lane.b32.xlu0 %v1212, 24
      %v1284 = vpop.permute.xlu0 %1283
      %1285 = vrot.lane.b32.xlu0 %v1213, 24
      %v1286 = vpop.permute.xlu0 %1285
      %1287 = vrot.lane.b32.xlu0 %v1214, 24
      %v1288 = vpop.permute.xlu0 %1287
      %1289 = vrot.lane.b32.xlu0 %v1215, 24
      %v1290 = vpop.permute.xlu0 %1289
      %1291 = vrot.lane.b32.xlu0 %v1216, 24
      %v1292 = vpop.permute.xlu0 %1291
      %1293 = vrot.lane.b32.xlu0 %v1217, 24
      %v1294 = vpop.permute.xlu0 %1293
      %1295 = vrot.lane.b32.xlu0 %v1218, 24
      %v1296 = vpop.permute.xlu0 %1295
      %1297 = vrot.lane.b32.xlu0 %v1219, 24
      %v1298 = vpop.permute.xlu0 %1297
      %1299 = vrot.lane.b32.xlu0 %v1220, 24
      %v1300 = vpop.permute.xlu0 %1299
      %1301 = vrot.lane.b32.xlu0 %v1221, 24
      %v1302 = vpop.permute.xlu0 %1301
      %1303 = vrot.lane.b32.xlu0 %v1222, 24
      %v1304 = vpop.permute.xlu0 %1303
      %1305 = vrot.lane.b32.xlu0 %v1223, 24
      %v1306 = vpop.permute.xlu0 %1305
      %1307 = vrot.lane.b32.xlu0 %v1224, 24
      %v1308 = vpop.permute.xlu0 %1307
      %1309 = vrot.lane.b32.xlu0 %v1225, 24
      %v1310 = vpop.permute.xlu0 %1309
      %1311 = vrot.lane.b32.xlu0 %v1226, 24
      %v1312 = vpop.permute.xlu0 %1311
      %1313 = vrot.lane.b32.xlu0 %v1227, 24
      %v1314 = vpop.permute.xlu0 %1313
      %1315 = vrot.lane.b32.xlu0 %v1228, 24
      %v1316 = vpop.permute.xlu0 %1315
      %1317 = vrot.lane.b32.xlu0 %v1229, 24
      %v1318 = vpop.permute.xlu0 %1317
      %1319 = vrot.lane.b32.xlu0 %v1230, 24
      %v1320 = vpop.permute.xlu0 %1319
      %1321 = vrot.lane.b32.xlu0 %v1231, 24
      %v1322 = vpop.permute.xlu0 %1321
      %1323 = vrot.lane.b32.xlu0 %v1232, 24
      %v1324 = vpop.permute.xlu0 %1323
      %1325 = vrot.lane.b32.xlu0 %v1233, 24
      %v1326 = vpop.permute.xlu0 %1325
      %1327 = vrot.lane.b32.xlu0 %v1234, 24
      %v1328 = vpop.permute.xlu0 %1327
      %1329 = vrot.lane.b32.xlu0 %v1235, 24
      %v1330 = vpop.permute.xlu0 %1329
      %1331 = vrot.lane.b32.xlu0 %v1236, 24
      %v1332 = vpop.permute.xlu0 %1331
      %vm1365 = vcmask 228544
      %1366 = vst.msk [vmem:[#allocation2] sm:$0xff] %vm1365, %v1270
      %1367 = vst.msk [vmem:[#allocation2 + $0x8] sm:$0xff] %vm1365, %v1272
      %1368 = vst.msk [vmem:[#allocation2 + $0x10] sm:$0xff] %vm1365, %v1274
      %1369 = vst.msk [vmem:[#allocation2 + $0x18] sm:$0xff] %vm1365, %v1276
      %1370 = vst.msk [vmem:[#allocation2 + $0x20] sm:$0xff] %vm1365, %v1278
      %1371 = vst.msk [vmem:[#allocation2 + $0x28] sm:$0xff] %vm1365, %v1280
      %1372 = vst.msk [vmem:[#allocation2 + $0x30] sm:$0xff] %vm1365, %v1282
      %1373 = vst.msk [vmem:[#allocation2 + $0x38] sm:$0xff] %vm1365, %v1284
      %1374 = vst.msk [vmem:[#allocation2 + $0x40] sm:$0xff] %vm1365, %v1286
      %1375 = vst.msk [vmem:[#allocation2 + $0x48] sm:$0xff] %vm1365, %v1288
      %1376 = vst.msk [vmem:[#allocation2 + $0x50] sm:$0xff] %vm1365, %v1290
      %1377 = vst.msk [vmem:[#allocation2 + $0x58] sm:$0xff] %vm1365, %v1292
      %1378 = vst.msk [vmem:[#allocation2 + $0x60] sm:$0xff] %vm1365, %v1294
      %1379 = vst.msk [vmem:[#allocation2 + $0x68] sm:$0xff] %vm1365, %v1296
      %1380 = vst.msk [vmem:[#allocation2 + $0x70] sm:$0xff] %vm1365, %v1298
      %1381 = vst.msk [vmem:[#allocation2 + $0x78] sm:$0xff] %vm1365, %v1300
      %1382 = vst.msk [vmem:[#allocation2 + $0x80] sm:$0xff] %vm1365, %v1302
      %1383 = vst.msk [vmem:[#allocation2 + $0x88] sm:$0xff] %vm1365, %v1304
      %1384 = vst.msk [vmem:[#allocation2 + $0x90] sm:$0xff] %vm1365, %v1306
      %1385 = vst.msk [vmem:[#allocation2 + $0x98] sm:$0xff] %vm1365, %v1308
      %1386 = vst.msk [vmem:[#allocation2 + $0xa0] sm:$0xff] %vm1365, %v1310
      %1387 = vst.msk [vmem:[#allocation2 + $0xa8] sm:$0xff] %vm1365, %v1312
      %1388 = vst.msk [vmem:[#allocation2 + $0xb0] sm:$0xff] %vm1365, %v1314
      %1389 = vst.msk [vmem:[#allocation2 + $0xb8] sm:$0xff] %vm1365, %v1316
      %1390 = vst.msk [vmem:[#allocation2 + $0xc0] sm:$0xff] %vm1365, %v1318
      %1391 = vst.msk [vmem:[#allocation2 + $0xc8] sm:$0xff] %vm1365, %v1320
      %1392 = vst.msk [vmem:[#allocation2 + $0xd0] sm:$0xff] %vm1365, %v1322
      %1393 = vst.msk [vmem:[#allocation2 + $0xd8] sm:$0xff] %vm1365, %v1324
      %1394 = vst.msk [vmem:[#allocation2 + $0xe0] sm:$0xff] %vm1365, %v1326
      %1395 = vst.msk [vmem:[#allocation2 + $0xe8] sm:$0xff] %vm1365, %v1328
      %1396 = vst.msk [vmem:[#allocation2 + $0xf0] sm:$0xff] %vm1365, %v1330
      %1397 = vst.msk [vmem:[#allocation2 + $0xf8] sm:$0xff] %vm1365, %v1332
      %s1398 = scalar_lea.vmem %s165, 592
      %v1399 = vld [vmem:[%s1398] sm:$0xff]
      %v1400 = vld [vmem:[%s1398 + $0x10] sm:$0xff]
      %v1401 = vld [vmem:[%s1398 + $0x20] sm:$0xff]
      %v1402 = vld [vmem:[%s1398 + $0x30] sm:$0xff]
      %v1403 = vld [vmem:[%s1398 + $0x40] sm:$0xff]
      %v1404 = vld [vmem:[%s1398 + $0x50] sm:$0xff]
      %v1405 = vld [vmem:[%s1398 + $0x60] sm:$0xff]
      %v1406 = vld [vmem:[%s1398 + $0x70] sm:$0xff]
      %v1407 = vld [vmem:[%s1398 + $0x90] sm:$0xff]
      %v1408 = vld [vmem:[%s1398 + $0xa0] sm:$0xff]
      %v1409 = vld [vmem:[%s1398 + $0xb0] sm:$0xff]
      %v1410 = vld [vmem:[%s1398 + $0xc0] sm:$0xff]
      %v1411 = vld [vmem:[%s1398 + $0xd0] sm:$0xff]
      %v1412 = vld [vmem:[%s1398 + $0xe0] sm:$0xff]
      %v1413 = vld [vmem:[%s1398 + $0xf0] sm:$0xff]
      %v1414 = vld [vmem:[%s1398 + $0x100] sm:$0xff]
      %v1415 = vld [vmem:[%s1398 + $0x120] sm:$0xff]
      %v1416 = vld [vmem:[%s1398 + $0x130] sm:$0xff]
      %v1417 = vld [vmem:[%s1398 + $0x140] sm:$0xff]
      %v1418 = vld [vmem:[%s1398 + $0x150] sm:$0xff]
      %v1419 = vld [vmem:[%s1398 + $0x160] sm:$0xff]
      %v1420 = vld [vmem:[%s1398 + $0x170] sm:$0xff]
      %v1421 = vld [vmem:[%s1398 + $0x180] sm:$0xff]
      %v1422 = vld [vmem:[%s1398 + $0x190] sm:$0xff]
      %v1423 = vld [vmem:[%s1398 + $0x1b0] sm:$0xff]
      %v1424 = vld [vmem:[%s1398 + $0x1c0] sm:$0xff]
      %v1425 = vld [vmem:[%s1398 + $0x1d0] sm:$0xff]
      %v1426 = vld [vmem:[%s1398 + $0x1e0] sm:$0xff]
      %v1427 = vld [vmem:[%s1398 + $0x1f0] sm:$0xff]
      %v1428 = vld [vmem:[%s1398 + $0x200] sm:$0xff]
      %v1429 = vld [vmem:[%s1398 + $0x210] sm:$0xff]
      %v1430 = vld [vmem:[%s1398 + $0x220] sm:$0xff]
      %1463 = vrot.lane.b32.xlu0 %v1399, 28
      %v1464 = vpop.permute.xlu0 %1463
      %1465 = vrot.lane.b32.xlu0 %v1400, 28
      %v1466 = vpop.permute.xlu0 %1465
      %1467 = vrot.lane.b32.xlu0 %v1401, 28
      %v1468 = vpop.permute.xlu0 %1467
      %1469 = vrot.lane.b32.xlu0 %v1402, 28
      %v1470 = vpop.permute.xlu0 %1469
      %1471 = vrot.lane.b32.xlu0 %v1403, 28
      %v1472 = vpop.permute.xlu0 %1471
      %1473 = vrot.lane.b32.xlu0 %v1404, 28
      %v1474 = vpop.permute.xlu0 %1473
      %1475 = vrot.lane.b32.xlu0 %v1405, 28
      %v1476 = vpop.permute.xlu0 %1475
      %1477 = vrot.lane.b32.xlu0 %v1406, 28
      %v1478 = vpop.permute.xlu0 %1477
      %1479 = vrot.lane.b32.xlu0 %v1407, 28
      %v1480 = vpop.permute.xlu0 %1479
      %1481 = vrot.lane.b32.xlu0 %v1408, 28
      %v1482 = vpop.permute.xlu0 %1481
      %1483 = vrot.lane.b32.xlu0 %v1409, 28
      %v1484 = vpop.permute.xlu0 %1483
      %1485 = vrot.lane.b32.xlu0 %v1410, 28
      %v1486 = vpop.permute.xlu0 %1485
      %1487 = vrot.lane.b32.xlu0 %v1411, 28
      %v1488 = vpop.permute.xlu0 %1487
      %1489 = vrot.lane.b32.xlu0 %v1412, 28
      %v1490 = vpop.permute.xlu0 %1489
      %1491 = vrot.lane.b32.xlu0 %v1413, 28
      %v1492 = vpop.permute.xlu0 %1491
      %1493 = vrot.lane.b32.xlu0 %v1414, 28
      %v1494 = vpop.permute.xlu0 %1493
      %1495 = vrot.lane.b32.xlu0 %v1415, 28
      %v1496 = vpop.permute.xlu0 %1495
      %1497 = vrot.lane.b32.xlu0 %v1416, 28
      %v1498 = vpop.permute.xlu0 %1497
      %1499 = vrot.lane.b32.xlu0 %v1417, 28
      %v1500 = vpop.permute.xlu0 %1499
      %1501 = vrot.lane.b32.xlu0 %v1418, 28
      %v1502 = vpop.permute.xlu0 %1501
      %1503 = vrot.lane.b32.xlu0 %v1419, 28
      %v1504 = vpop.permute.xlu0 %1503
      %1505 = vrot.lane.b32.xlu0 %v1420, 28
      %v1506 = vpop.permute.xlu0 %1505
      %1507 = vrot.lane.b32.xlu0 %v1421, 28
      %v1508 = vpop.permute.xlu0 %1507
      %1509 = vrot.lane.b32.xlu0 %v1422, 28
      %v1510 = vpop.permute.xlu0 %1509
      %1511 = vrot.lane.b32.xlu0 %v1423, 28
      %v1512 = vpop.permute.xlu0 %1511
      %1513 = vrot.lane.b32.xlu0 %v1424, 28
      %v1514 = vpop.permute.xlu0 %1513
      %1515 = vrot.lane.b32.xlu0 %v1425, 28
      %v1516 = vpop.permute.xlu0 %1515
      %1517 = vrot.lane.b32.xlu0 %v1426, 28
      %v1518 = vpop.permute.xlu0 %1517
      %1519 = vrot.lane.b32.xlu0 %v1427, 28
      %v1520 = vpop.permute.xlu0 %1519
      %1521 = vrot.lane.b32.xlu0 %v1428, 28
      %v1522 = vpop.permute.xlu0 %1521
      %1523 = vrot.lane.b32.xlu0 %v1429, 28
      %v1524 = vpop.permute.xlu0 %1523
      %1525 = vrot.lane.b32.xlu0 %v1430, 28
      %v1526 = vpop.permute.xlu0 %1525
      %vm1559 = vcmask 261344
      %1560 = vst.msk [vmem:[#allocation2] sm:$0xff] %vm1559, %v1464
      %1561 = vst.msk [vmem:[#allocation2 + $0x8] sm:$0xff] %vm1559, %v1466
      %1562 = vst.msk [vmem:[#allocation2 + $0x10] sm:$0xff] %vm1559, %v1468
      %1563 = vst.msk [vmem:[#allocation2 + $0x18] sm:$0xff] %vm1559, %v1470
      %1564 = vst.msk [vmem:[#allocation2 + $0x20] sm:$0xff] %vm1559, %v1472
      %1565 = vst.msk [vmem:[#allocation2 + $0x28] sm:$0xff] %vm1559, %v1474
      %1566 = vst.msk [vmem:[#allocation2 + $0x30] sm:$0xff] %vm1559, %v1476
      %1567 = vst.msk [vmem:[#allocation2 + $0x38] sm:$0xff] %vm1559, %v1478
      %1568 = vst.msk [vmem:[#allocation2 + $0x40] sm:$0xff] %vm1559, %v1480
      %1569 = vst.msk [vmem:[#allocation2 + $0x48] sm:$0xff] %vm1559, %v1482
      %1570 = vst.msk [vmem:[#allocation2 + $0x50] sm:$0xff] %vm1559, %v1484
      %1571 = vst.msk [vmem:[#allocation2 + $0x58] sm:$0xff] %vm1559, %v1486
      %1572 = vst.msk [vmem:[#allocation2 + $0x60] sm:$0xff] %vm1559, %v1488
      %1573 = vst.msk [vmem:[#allocation2 + $0x68] sm:$0xff] %vm1559, %v1490
      %1574 = vst.msk [vmem:[#allocation2 + $0x70] sm:$0xff] %vm1559, %v1492
      %1575 = vst.msk [vmem:[#allocation2 + $0x78] sm:$0xff] %vm1559, %v1494
      %1576 = vst.msk [vmem:[#allocation2 + $0x80] sm:$0xff] %vm1559, %v1496
      %1577 = vst.msk [vmem:[#allocation2 + $0x88] sm:$0xff] %vm1559, %v1498
      %1578 = vst.msk [vmem:[#allocation2 + $0x90] sm:$0xff] %vm1559, %v1500
      %1579 = vst.msk [vmem:[#allocation2 + $0x98] sm:$0xff] %vm1559, %v1502
      %1580 = vst.msk [vmem:[#allocation2 + $0xa0] sm:$0xff] %vm1559, %v1504
      %1581 = vst.msk [vmem:[#allocation2 + $0xa8] sm:$0xff] %vm1559, %v1506
      %1582 = vst.msk [vmem:[#allocation2 + $0xb0] sm:$0xff] %vm1559, %v1508
      %1583 = vst.msk [vmem:[#allocation2 + $0xb8] sm:$0xff] %vm1559, %v1510
      %1584 = vst.msk [vmem:[#allocation2 + $0xc0] sm:$0xff] %vm1559, %v1512
      %1585 = vst.msk [vmem:[#allocation2 + $0xc8] sm:$0xff] %vm1559, %v1514
      %1586 = vst.msk [vmem:[#allocation2 + $0xd0] sm:$0xff] %vm1559, %v1516
      %1587 = vst.msk [vmem:[#allocation2 + $0xd8] sm:$0xff] %vm1559, %v1518
      %1588 = vst.msk [vmem:[#allocation2 + $0xe0] sm:$0xff] %vm1559, %v1520
      %1589 = vst.msk [vmem:[#allocation2 + $0xe8] sm:$0xff] %vm1559, %v1522
      %1590 = vst.msk [vmem:[#allocation2 + $0xf0] sm:$0xff] %vm1559, %v1524
      %1591 = vst.msk [vmem:[#allocation2 + $0xf8] sm:$0xff] %vm1559, %v1526
      %v1592 = vld [vmem:[%s1204 + $0x1] sm:$0xff]
      %v1593 = vld [vmem:[%s1204 + $0x11] sm:$0xff]
      %v1594 = vld [vmem:[%s1204 + $0x21] sm:$0xff]
      %v1595 = vld [vmem:[%s1204 + $0x31] sm:$0xff]
      %v1596 = vld [vmem:[%s1204 + $0x41] sm:$0xff]
      %v1597 = vld [vmem:[%s1204 + $0x51] sm:$0xff]
      %v1598 = vld [vmem:[%s1204 + $0x61] sm:$0xff]
      %v1599 = vld [vmem:[%s1204 + $0x71] sm:$0xff]
      %v1600 = vld [vmem:[%s1204 + $0x91] sm:$0xff]
      %v1601 = vld [vmem:[%s1204 + $0xa1] sm:$0xff]
      %v1602 = vld [vmem:[%s1204 + $0xb1] sm:$0xff]
      %v1603 = vld [vmem:[%s1204 + $0xc1] sm:$0xff]
      %v1604 = vld [vmem:[%s1204 + $0xd1] sm:$0xff]
      %v1605 = vld [vmem:[%s1204 + $0xe1] sm:$0xff]
      %v1606 = vld [vmem:[%s1204 + $0xf1] sm:$0xff]
      %v1607 = vld [vmem:[%s1204 + $0x101] sm:$0xff]
      %v1608 = vld [vmem:[%s1204 + $0x121] sm:$0xff]
      %v1609 = vld [vmem:[%s1204 + $0x131] sm:$0xff]
      %v1610 = vld [vmem:[%s1204 + $0x141] sm:$0xff]
      %v1611 = vld [vmem:[%s1204 + $0x151] sm:$0xff]
      %v1612 = vld [vmem:[%s1204 + $0x161] sm:$0xff]
      %v1613 = vld [vmem:[%s1204 + $0x171] sm:$0xff]
      %v1614 = vld [vmem:[%s1204 + $0x181] sm:$0xff]
      %v1615 = vld [vmem:[%s1204 + $0x191] sm:$0xff]
      %v1616 = vld [vmem:[%s1204 + $0x1b1] sm:$0xff]
      %v1617 = vld [vmem:[%s1204 + $0x1c1] sm:$0xff]
      %v1618 = vld [vmem:[%s1204 + $0x1d1] sm:$0xff]
      %v1619 = vld [vmem:[%s1204 + $0x1e1] sm:$0xff]
      %v1620 = vld [vmem:[%s1204 + $0x1f1] sm:$0xff]
      %v1621 = vld [vmem:[%s1204 + $0x201] sm:$0xff]
      %v1622 = vld [vmem:[%s1204 + $0x211] sm:$0xff]
      %v1623 = vld [vmem:[%s1204 + $0x221] sm:$0xff]
      %1656 = vrot.lane.b32.xlu0 %v1592, 32
      %v1657 = vpop.permute.xlu0 %1656
      %1658 = vrot.lane.b32.xlu0 %v1593, 32
      %v1659 = vpop.permute.xlu0 %1658
      %1660 = vrot.lane.b32.xlu0 %v1594, 32
      %v1661 = vpop.permute.xlu0 %1660
      %1662 = vrot.lane.b32.xlu0 %v1595, 32
      %v1663 = vpop.permute.xlu0 %1662
      %1664 = vrot.lane.b32.xlu0 %v1596, 32
      %v1665 = vpop.permute.xlu0 %1664
      %1666 = vrot.lane.b32.xlu0 %v1597, 32
      %v1667 = vpop.permute.xlu0 %1666
      %1668 = vrot.lane.b32.xlu0 %v1598, 32
      %v1669 = vpop.permute.xlu0 %1668
      %1670 = vrot.lane.b32.xlu0 %v1599, 32
      %v1671 = vpop.permute.xlu0 %1670
      %1672 = vrot.lane.b32.xlu0 %v1600, 32
      %v1673 = vpop.permute.xlu0 %1672
      %1674 = vrot.lane.b32.xlu0 %v1601, 32
      %v1675 = vpop.permute.xlu0 %1674
      %1676 = vrot.lane.b32.xlu0 %v1602, 32
      %v1677 = vpop.permute.xlu0 %1676
      %1678 = vrot.lane.b32.xlu0 %v1603, 32
      %v1679 = vpop.permute.xlu0 %1678
      %1680 = vrot.lane.b32.xlu0 %v1604, 32
      %v1681 = vpop.permute.xlu0 %1680
      %1682 = vrot.lane.b32.xlu0 %v1605, 32
      %v1683 = vpop.permute.xlu0 %1682
      %1684 = vrot.lane.b32.xlu0 %v1606, 32
      %v1685 = vpop.permute.xlu0 %1684
      %1686 = vrot.lane.b32.xlu0 %v1607, 32
      %v1687 = vpop.permute.xlu0 %1686
      %1688 = vrot.lane.b32.xlu0 %v1608, 32
      %v1689 = vpop.permute.xlu0 %1688
      %1690 = vrot.lane.b32.xlu0 %v1609, 32
      %v1691 = vpop.permute.xlu0 %1690
      %1692 = vrot.lane.b32.xlu0 %v1610, 32
      %v1693 = vpop.permute.xlu0 %1692
      %1694 = vrot.lane.b32.xlu0 %v1611, 32
      %v1695 = vpop.permute.xlu0 %1694
      %1696 = vrot.lane.b32.xlu0 %v1612, 32
      %v1697 = vpop.permute.xlu0 %1696
      %1698 = vrot.lane.b32.xlu0 %v1613, 32
      %v1699 = vpop.permute.xlu0 %1698
      %1700 = vrot.lane.b32.xlu0 %v1614, 32
      %v1701 = vpop.permute.xlu0 %1700
      %1702 = vrot.lane.b32.xlu0 %v1615, 32
      %v1703 = vpop.permute.xlu0 %1702
      %1704 = vrot.lane.b32.xlu0 %v1616, 32
      %v1705 = vpop.permute.xlu0 %1704
      %1706 = vrot.lane.b32.xlu0 %v1617, 32
      %v1707 = vpop.permute.xlu0 %1706
      %1708 = vrot.lane.b32.xlu0 %v1618, 32
      %v1709 = vpop.permute.xlu0 %1708
      %1710 = vrot.lane.b32.xlu0 %v1619, 32
      %v1711 = vpop.permute.xlu0 %1710
      %1712 = vrot.lane.b32.xlu0 %v1620, 32
      %v1713 = vpop.permute.xlu0 %1712
      %1714 = vrot.lane.b32.xlu0 %v1621, 32
      %v1715 = vpop.permute.xlu0 %1714
      %1716 = vrot.lane.b32.xlu0 %v1622, 32
      %v1717 = vpop.permute.xlu0 %1716
      %1718 = vrot.lane.b32.xlu0 %v1623, 32
      %v1719 = vpop.permute.xlu0 %1718
      %vm1752 = vcmask 294144
      %1753 = vst.msk [vmem:[#allocation2] sm:$0xff] %vm1752, %v1657
      %1754 = vst.msk [vmem:[#allocation2 + $0x8] sm:$0xff] %vm1752, %v1659
      %1755 = vst.msk [vmem:[#allocation2 + $0x10] sm:$0xff] %vm1752, %v1661
      %1756 = vst.msk [vmem:[#allocation2 + $0x18] sm:$0xff] %vm1752, %v1663
      %1757 = vst.msk [vmem:[#allocation2 + $0x20] sm:$0xff] %vm1752, %v1665
      %1758 = vst.msk [vmem:[#allocation2 + $0x28] sm:$0xff] %vm1752, %v1667
      %1759 = vst.msk [vmem:[#allocation2 + $0x30] sm:$0xff] %vm1752, %v1669
      %1760 = vst.msk [vmem:[#allocation2 + $0x38] sm:$0xff] %vm1752, %v1671
      %1761 = vst.msk [vmem:[#allocation2 + $0x40] sm:$0xff] %vm1752, %v1673
      %1762 = vst.msk [vmem:[#allocation2 + $0x48] sm:$0xff] %vm1752, %v1675
      %1763 = vst.msk [vmem:[#allocation2 + $0x50] sm:$0xff] %vm1752, %v1677
      %1764 = vst.msk [vmem:[#allocation2 + $0x58] sm:$0xff] %vm1752, %v1679
      %1765 = vst.msk [vmem:[#allocation2 + $0x60] sm:$0xff] %vm1752, %v1681
      %1766 = vst.msk [vmem:[#allocation2 + $0x68] sm:$0xff] %vm1752, %v1683
      %1767 = vst.msk [vmem:[#allocation2 + $0x70] sm:$0xff] %vm1752, %v1685
      %1768 = vst.msk [vmem:[#allocation2 + $0x78] sm:$0xff] %vm1752, %v1687
      %1769 = vst.msk [vmem:[#allocation2 + $0x80] sm:$0xff] %vm1752, %v1689
      %1770 = vst.msk [vmem:[#allocation2 + $0x88] sm:$0xff] %vm1752, %v1691
      %1771 = vst.msk [vmem:[#allocation2 + $0x90] sm:$0xff] %vm1752, %v1693
      %1772 = vst.msk [vmem:[#allocation2 + $0x98] sm:$0xff] %vm1752, %v1695
      %1773 = vst.msk [vmem:[#allocation2 + $0xa0] sm:$0xff] %vm1752, %v1697
      %1774 = vst.msk [vmem:[#allocation2 + $0xa8] sm:$0xff] %vm1752, %v1699
      %1775 = vst.msk [vmem:[#allocation2 + $0xb0] sm:$0xff] %vm1752, %v1701
      %1776 = vst.msk [vmem:[#allocation2 + $0xb8] sm:$0xff] %vm1752, %v1703
      %1777 = vst.msk [vmem:[#allocation2 + $0xc0] sm:$0xff] %vm1752, %v1705
      %1778 = vst.msk [vmem:[#allocation2 + $0xc8] sm:$0xff] %vm1752, %v1707
      %1779 = vst.msk [vmem:[#allocation2 + $0xd0] sm:$0xff] %vm1752, %v1709
      %1780 = vst.msk [vmem:[#allocation2 + $0xd8] sm:$0xff] %vm1752, %v1711
      %1781 = vst.msk [vmem:[#allocation2 + $0xe0] sm:$0xff] %vm1752, %v1713
      %1782 = vst.msk [vmem:[#allocation2 + $0xe8] sm:$0xff] %vm1752, %v1715
      %1783 = vst.msk [vmem:[#allocation2 + $0xf0] sm:$0xff] %vm1752, %v1717
      %1784 = vst.msk [vmem:[#allocation2 + $0xf8] sm:$0xff] %vm1752, %v1719
      %v1785 = vld [vmem:[#allocation2] sm:$0xff]
      %v1786 = vld [vmem:[#allocation2 + $0x8] sm:$0xff]
      %v1787 = vld [vmem:[#allocation2 + $0x10] sm:$0xff]
      %v1788 = vld [vmem:[#allocation2 + $0x18] sm:$0xff]
      %v1789 = vld [vmem:[#allocation2 + $0x20] sm:$0xff]
      %v1790 = vld [vmem:[#allocation2 + $0x28] sm:$0xff]
      %v1791 = vld [vmem:[#allocation2 + $0x30] sm:$0xff]
      %v1792 = vld [vmem:[#allocation2 + $0x38] sm:$0xff]
      %v1793 = vld [vmem:[#allocation2 + $0x40] sm:$0xff]
      %v1794 = vld [vmem:[#allocation2 + $0x48] sm:$0xff]
      %v1795 = vld [vmem:[#allocation2 + $0x50] sm:$0xff]
      %v1796 = vld [vmem:[#allocation2 + $0x58] sm:$0xff]
      %v1797 = vld [vmem:[#allocation2 + $0x60] sm:$0xff]
      %v1798 = vld [vmem:[#allocation2 + $0x68] sm:$0xff]
      %v1799 = vld [vmem:[#allocation2 + $0x70] sm:$0xff]
      %v1800 = vld [vmem:[#allocation2 + $0x78] sm:$0xff]
      %v1801 = vld [vmem:[#allocation2 + $0x80] sm:$0xff]
      %v1802 = vld [vmem:[#allocation2 + $0x88] sm:$0xff]
      %v1803 = vld [vmem:[#allocation2 + $0x90] sm:$0xff]
      %v1804 = vld [vmem:[#allocation2 + $0x98] sm:$0xff]
      %v1805 = vld [vmem:[#allocation2 + $0xa0] sm:$0xff]
      %v1806 = vld [vmem:[#allocation2 + $0xa8] sm:$0xff]
      %v1807 = vld [vmem:[#allocation2 + $0xb0] sm:$0xff]
      %v1808 = vld [vmem:[#allocation2 + $0xb8] sm:$0xff]
      %v1809 = vld [vmem:[#allocation2 + $0xc0] sm:$0xff]
      %v1810 = vld [vmem:[#allocation2 + $0xc8] sm:$0xff]
      %v1811 = vld [vmem:[#allocation2 + $0xd0] sm:$0xff]
      %v1812 = vld [vmem:[#allocation2 + $0xd8] sm:$0xff]
      %v1813 = vld [vmem:[#allocation2 + $0xe0] sm:$0xff]
      %v1814 = vld [vmem:[#allocation2 + $0xe8] sm:$0xff]
      %v1815 = vld [vmem:[#allocation2 + $0xf0] sm:$0xff]
      %v1816 = vld [vmem:[#allocation2 + $0xf8] sm:$0xff]
      %v1817 = vld [vmem:[%s1] sm:$0xff]
      %v1818 = vld [vmem:[%s1 + $0x8] sm:$0xff]
      %v1819 = vld [vmem:[%s1 + $0x10] sm:$0xff]
      %v1820 = vld [vmem:[%s1 + $0x18] sm:$0xff]
      %v1821 = vld [vmem:[%s1 + $0x20] sm:$0xf]
      %v1822 = vld [vmem:[%s2] sm:$0x1]
      %v1824 = vlaneseq
      %v1825 = vshrl.u32 %v1824, 7
      %v1826 = vsub.s32 0, %v1825
      %v1827 = vrot.slane %v1822, %v1826
      %vm1829 = vcmask 293888
      %v1831 = vsel %vm1829, %v1785, 0
      %v1834 = vsel %vm1829, %v1786, 0
      %v1837 = vsel %vm1829, %v1787, 0
      %v1840 = vsel %vm1829, %v1788, 0
      %v1843 = vsel %vm1829, %v1789, 0
      %v1846 = vsel %vm1829, %v1790, 0
      %v1849 = vsel %vm1829, %v1791, 0
      %v1852 = vsel %vm1829, %v1792, 0
      %v1855 = vsel %vm1829, %v1793, 0
      %v1858 = vsel %vm1829, %v1794, 0
      %v1861 = vsel %vm1829, %v1795, 0
      %v1864 = vsel %vm1829, %v1796, 0
      %v1867 = vsel %vm1829, %v1797, 0
      %v1870 = vsel %vm1829, %v1798, 0
      %v1873 = vsel %vm1829, %v1799, 0
      %v1876 = vsel %vm1829, %v1800, 0
      %v1879 = vsel %vm1829, %v1801, 0
      %v1882 = vsel %vm1829, %v1802, 0
      %v1885 = vsel %vm1829, %v1803, 0
      %v1888 = vsel %vm1829, %v1804, 0
      %v1891 = vsel %vm1829, %v1805, 0
      %v1894 = vsel %vm1829, %v1806, 0
      %v1897 = vsel %vm1829, %v1807, 0
      %v1900 = vsel %vm1829, %v1808, 0
      %v1903 = vsel %vm1829, %v1809, 0
      %v1906 = vsel %vm1829, %v1810, 0
      %v1909 = vsel %vm1829, %v1811, 0
      %v1912 = vsel %vm1829, %v1812, 0
      %v1915 = vsel %vm1829, %v1813, 0
      %v1918 = vsel %vm1829, %v1814, 0
      %v1921 = vsel %vm1829, %v1815, 0
      %v1924 = vsel %vm1829, %v1816, 0
      %vm1926 = vcmask 1043456
      %v1928 = vsel %vm1926, %v1821, 0
      %1930 = vmatprep.subr.mxu0 0.0
      %1931 = vmatpush1.msra.mxu0 %v1817
      %1932 = vmatprep.subr.mxu0 0.0
      %1933 = vmatpush1.msra.mxu0 %v1818
      %1934 = vmatprep.subr.mxu0 0.0
      %1935 = vmatpush1.msra.mxu0 %v1819
      %1936 = vmatprep.subr.mxu0 0.0
      %1937 = vmatpush1.msra.mxu0 %v1820
      %1938 = vmatprep.subr.mxu0 0.0
      %1939 = vmatpush1.msra.mxu0 %v1928
      %1940 = vmatprep.subr.mxu0 0.0
      %1941 = vmatpush1.msra.mxu0 0.0
      %1942 = vmatprep.subr.mxu0 0.0
      %1943 = vmatpush1.msra.mxu0 0.0
      %1944 = vmatprep.subr.mxu0 0.0
      %1945 = vmatpush1.msra.mxu0 0.0
      %1946 = vmatprep.subr.mxu0 0.0
      %1947 = vmatpush1.msra.mxu0 0.0
      %1948 = vmatprep.subr.mxu0 0.0
      %1949 = vmatpush1.msra.mxu0 0.0
      %1950 = vmatprep.subr.mxu0 0.0
      %1951 = vmatpush1.msra.mxu0 0.0
      %1952 = vmatprep.subr.mxu0 0.0
      %1953 = vmatpush1.msra.mxu0 0.0
      %1954 = vmatprep.subr.mxu0 0.0
      %1955 = vmatpush1.msra.mxu0 0.0
      %1956 = vmatprep.subr.mxu0 0.0
      %1957 = vmatpush1.msra.mxu0 0.0
      %1958 = vmatprep.subr.mxu0 0.0
      %1959 = vmatpush1.msra.mxu0 0.0
      %1960 = vmatprep.subr.mxu0 0.0
      %1961 = vmatpush1.msra.mxu0 0.0
      %1962 = vmatprep.subr.mxu0 0.0
      %1963 = vmatpush1.msra.mxu0 0.0
      %1964 = vmatprep.subr.mxu0 0.0
      %1965 = vmatpush1.msra.mxu0 0.0
      %1966 = vmatprep.subr.mxu0 0.0
      %1967 = vmatpush1.msra.mxu0 0.0
      %1968 = vmatprep.subr.mxu0 0.0
      %1969 = vmatpush1.msra.mxu0 0.0
      %1970 = vmatprep.subr.mxu0 0.0
      %1971 = vmatpush1.msra.mxu0 0.0
      %1972 = vmatprep.subr.mxu0 0.0
      %1973 = vmatpush1.msra.mxu0 0.0
      %1974 = vmatprep.subr.mxu0 0.0
      %1975 = vmatpush1.msra.mxu0 0.0
      %1976 = vmatprep.subr.mxu0 0.0
      %1977 = vmatpush1.msra.mxu0 0.0
      %1978 = vmatprep.subr.mxu0 0.0
      %1979 = vmatpush1.msra.mxu0 0.0
      %1980 = vmatprep.subr.mxu0 0.0
      %1981 = vmatpush1.msra.mxu0 0.0
      %1982 = vmatprep.subr.mxu0 0.0
      %1983 = vmatpush1.msra.mxu0 0.0
      %1984 = vmatprep.subr.mxu0 0.0
      %1985 = vmatpush1.msra.mxu0 0.0
      %1986 = vmatprep.subr.mxu0 0.0
      %1987 = vmatpush1.msra.mxu0 0.0
      %1988 = vmatprep.subr.mxu0 0.0
      %1989 = vmatpush1.msra.mxu0 0.0
      %1990 = vmatprep.subr.mxu0 0.0
      %1991 = vmatpush1.msra.mxu0 0.0
      %1992 = vmatprep.subr.mxu0 0.0
      %1993 = vmatpush1.msra.mxu0 0.0
      %1994 = vmatprep.mubr.f32.mxu0 0.0
      %1995 = vmatmul.mubr.f32.gmra.mrb[0].mxu0 %v1831
      %v1996 = vpop.f32.mrb[0].mxu0
      %v1997 = vadd.f32 %v1827, %v1996
      %v1998 = vpop.f32.mrb[0].mxu0
      %1999 = vmatprep.mubr.f32.mxu0 0.0
      %2000 = vmatmul.mubr.f32.gmra.mrb[0].mxu0 %v1834
      %v2001 = vpop.f32.mrb[0].mxu0
      %v2002 = vadd.f32 %v1827, %v2001
      %v2003 = vpop.f32.mrb[0].mxu0
      %2004 = vmatprep.mubr.f32.mxu0 0.0
      %2005 = vmatmul.mubr.f32.gmra.mrb[0].mxu0 %v1837
      %v2006 = vpop.f32.mrb[0].mxu0
      %v2007 = vadd.f32 %v1827, %v2006
      %v2008 = vpop.f32.mrb[0].mxu0
      %2009 = vmatprep.mubr.f32.mxu0 0.0
      %2010 = vmatmul.mubr.f32.gmra.mrb[0].mxu0 %v1840
      %v2011 = vpop.f32.mrb[0].mxu0
      %v2012 = vadd.f32 %v1827, %v2011
      %v2013 = vpop.f32.mrb[0].mxu0
      %2014 = vmatprep.mubr.f32.mxu0 0.0
      %2015 = vmatmul.mubr.f32.gmra.mrb[0].mxu0 %v1843
      %v2016 = vpop.f32.mrb[0].mxu0
      %v2017 = vadd.f32 %v1827, %v2016
      %v2018 = vpop.f32.mrb[0].mxu0
      %2019 = vmatprep.mubr.f32.mxu0 0.0
      %2020 = vmatmul.mubr.f32.gmra.mrb[0].mxu0 %v1846
      %v2021 = vpop.f32.mrb[0].mxu0
      %v2022 = vadd.f32 %v1827, %v2021
      %v2023 = vpop.f32.mrb[0].mxu0
      %2024 = vmatprep.mubr.f32.mxu0 0.0
      %2025 = vmatmul.mubr.f32.gmra.mrb[0].mxu0 %v1849
      %v2026 = vpop.f32.mrb[0].mxu0
      %v2027 = vadd.f32 %v1827, %v2026
      %v2028 = vpop.f32.mrb[0].mxu0
      %2029 = vmatprep.mubr.f32.mxu0 0.0
      %2030 = vmatmul.mubr.f32.gmra.mrb[0].mxu0 %v1852
      %v2031 = vpop.f32.mrb[0].mxu0
      %v2032 = vadd.f32 %v1827, %v2031
      %v2033 = vpop.f32.mrb[0].mxu0
      %2034 = vmatprep.mubr.f32.mxu0 0.0
      %2035 = vmatmul.mubr.f32.gmra.mrb[0].mxu0 %v1855
      %v2036 = vpop.f32.mrb[0].mxu0
      %v2037 = vadd.f32 %v1827, %v2036
      %v2038 = vpop.f32.mrb[0].mxu0
      %2039 = vmatprep.mubr.f32.mxu0 0.0
      %2040 = vmatmul.mubr.f32.gmra.mrb[0].mxu0 %v1858
      %v2041 = vpop.f32.mrb[0].mxu0
      %v2042 = vadd.f32 %v1827, %v2041
      %v2043 = vpop.f32.mrb[0].mxu0
      %2044 = vmatprep.mubr.f32.mxu0 0.0
      %2045 = vmatmul.mubr.f32.gmra.mrb[0].mxu0 %v1861
      %v2046 = vpop.f32.mrb[0].mxu0
      %v2047 = vadd.f32 %v1827, %v2046
      %v2048 = vpop.f32.mrb[0].mxu0
      %2049 = vmatprep.mubr.f32.mxu0 0.0
      %2050 = vmatmul.mubr.f32.gmra.mrb[0].mxu0 %v1864
      %v2051 = vpop.f32.mrb[0].mxu0
      %v2052 = vadd.f32 %v1827, %v2051
      %v2053 = vpop.f32.mrb[0].mxu0
      %2054 = vmatprep.mubr.f32.mxu0 0.0
      %2055 = vmatmul.mubr.f32.gmra.mrb[0].mxu0 %v1867
      %v2056 = vpop.f32.mrb[0].mxu0
      %v2057 = vadd.f32 %v1827, %v2056
      %v2058 = vpop.f32.mrb[0].mxu0
      %2059 = vmatprep.mubr.f32.mxu0 0.0
      %2060 = vmatmul.mubr.f32.gmra.mrb[0].mxu0 %v1870
      %v2061 = vpop.f32.mrb[0].mxu0
      %v2062 = vadd.f32 %v1827, %v2061
      %v2063 = vpop.f32.mrb[0].mxu0
      %2064 = vmatprep.mubr.f32.mxu0 0.0
      %2065 = vmatmul.mubr.f32.gmra.mrb[0].mxu0 %v1873
      %v2066 = vpop.f32.mrb[0].mxu0
      %v2067 = vadd.f32 %v1827, %v2066
      %v2068 = vpop.f32.mrb[0].mxu0
      %2069 = vmatprep.mubr.f32.mxu0 0.0
      %2070 = vmatmul.mubr.f32.gmra.mrb[0].mxu0 %v1876
      %v2071 = vpop.f32.mrb[0].mxu0
      %v2072 = vadd.f32 %v1827, %v2071
      %v2073 = vpop.f32.mrb[0].mxu0
      %2074 = vmatprep.mubr.f32.mxu0 0.0
      %2075 = vmatmul.mubr.f32.gmra.mrb[0].mxu0 %v1879
      %v2076 = vpop.f32.mrb[0].mxu0
      %v2077 = vadd.f32 %v1827, %v2076
      %v2078 = vpop.f32.mrb[0].mxu0
      %2079 = vmatprep.mubr.f32.mxu0 0.0
      %2080 = vmatmul.mubr.f32.gmra.mrb[0].mxu0 %v1882
      %v2081 = vpop.f32.mrb[0].mxu0
      %v2082 = vadd.f32 %v1827, %v2081
      %v2083 = vpop.f32.mrb[0].mxu0
      %2084 = vmatprep.mubr.f32.mxu0 0.0
      %2085 = vmatmul.mubr.f32.gmra.mrb[0].mxu0 %v1885
      %v2086 = vpop.f32.mrb[0].mxu0
      %v2087 = vadd.f32 %v1827, %v2086
      %v2088 = vpop.f32.mrb[0].mxu0
      %2089 = vmatprep.mubr.f32.mxu0 0.0
      %2090 = vmatmul.mubr.f32.gmra.mrb[0].mxu0 %v1888
      %v2091 = vpop.f32.mrb[0].mxu0
      %v2092 = vadd.f32 %v1827, %v2091
      %v2093 = vpop.f32.mrb[0].mxu0
      %2094 = vmatprep.mubr.f32.mxu0 0.0
      %2095 = vmatmul.mubr.f32.gmra.mrb[0].mxu0 %v1891
      %v2096 = vpop.f32.mrb[0].mxu0
      %v2097 = vadd.f32 %v1827, %v2096
      %v2098 = vpop.f32.mrb[0].mxu0
      %2099 = vmatprep.mubr.f32.mxu0 0.0
      %2100 = vmatmul.mubr.f32.gmra.mrb[0].mxu0 %v1894
      %v2101 = vpop.f32.mrb[0].mxu0
      %v2102 = vadd.f32 %v1827, %v2101
      %v2103 = vpop.f32.mrb[0].mxu0
      %2104 = vmatprep.mubr.f32.mxu0 0.0
      %2105 = vmatmul.mubr.f32.gmra.mrb[0].mxu0 %v1897
      %v2106 = vpop.f32.mrb[0].mxu0
      %v2107 = vadd.f32 %v1827, %v2106
      %v2108 = vpop.f32.mrb[0].mxu0
      %2109 = vmatprep.mubr.f32.mxu0 0.0
      %2110 = vmatmul.mubr.f32.gmra.mrb[0].mxu0 %v1900
      %v2111 = vpop.f32.mrb[0].mxu0
      %v2112 = vadd.f32 %v1827, %v2111
      %v2113 = vpop.f32.mrb[0].mxu0
      %2114 = vmatprep.mubr.f32.mxu0 0.0
      %2115 = vmatmul.mubr.f32.gmra.mrb[0].mxu0 %v1903
      %v2116 = vpop.f32.mrb[0].mxu0
      %v2117 = vadd.f32 %v1827, %v2116
      %v2118 = vpop.f32.mrb[0].mxu0
      %2119 = vmatprep.mubr.f32.mxu0 0.0
      %2120 = vmatmul.mubr.f32.gmra.mrb[0].mxu0 %v1906
      %v2121 = vpop.f32.mrb[0].mxu0
      %v2122 = vadd.f32 %v1827, %v2121
      %v2123 = vpop.f32.mrb[0].mxu0
      %2124 = vmatprep.mubr.f32.mxu0 0.0
      %2125 = vmatmul.mubr.f32.gmra.mrb[0].mxu0 %v1909
      %v2126 = vpop.f32.mrb[0].mxu0
      %v2127 = vadd.f32 %v1827, %v2126
      %v2128 = vpop.f32.mrb[0].mxu0
      %2129 = vmatprep.mubr.f32.mxu0 0.0
      %2130 = vmatmul.mubr.f32.gmra.mrb[0].mxu0 %v1912
      %v2131 = vpop.f32.mrb[0].mxu0
      %v2132 = vadd.f32 %v1827, %v2131
      %v2133 = vpop.f32.mrb[0].mxu0
      %2134 = vmatprep.mubr.f32.mxu0 0.0
      %2135 = vmatmul.mubr.f32.gmra.mrb[0].mxu0 %v1915
      %v2136 = vpop.f32.mrb[0].mxu0
      %v2137 = vadd.f32 %v1827, %v2136
      %v2138 = vpop.f32.mrb[0].mxu0
      %2139 = vmatprep.mubr.f32.mxu0 0.0
      %2140 = vmatmul.mubr.f32.gmra.mrb[0].mxu0 %v1918
      %v2141 = vpop.f32.mrb[0].mxu0
      %v2142 = vadd.f32 %v1827, %v2141
      %v2143 = vpop.f32.mrb[0].mxu0
      %2144 = vmatprep.mubr.f32.mxu0 0.0
      %2145 = vmatmul.mubr.f32.gmra.mrb[0].mxu0 %v1921
      %v2146 = vpop.f32.mrb[0].mxu0
      %v2147 = vadd.f32 %v1827, %v2146
      %v2148 = vpop.f32.mrb[0].mxu0
      %2149 = vmatprep.mubr.f32.mxu0 0.0
      %2150 = vmatmul.mubr.f32.gmra.mrb[0].mxu0 %v1924
      %v2151 = vpop.f32.mrb[0].mxu0
      %v2152 = vadd.f32 %v1827, %v2151
      %v2153 = vpop.f32.mrb[0].mxu0
      %2154 = vdwg.mxu0
      %vm2155 = vcmask 64512
      %v2156 = vsel %vm2155, %v1997, 0.0
      %v2157 = vsel %vm2155, %v2002, 0.0
      %v2158 = vadd.f32 %v2156, %v2157
      %v2159 = vsel %vm2155, %v2007, 0.0
      %v2160 = vadd.f32 %v2158, %v2159
      %v2161 = vsel %vm2155, %v2012, 0.0
      %v2162 = vadd.f32 %v2160, %v2161
      %v2163 = vsel %vm2155, %v2017, 0.0
      %v2164 = vadd.f32 %v2162, %v2163
      %v2165 = vsel %vm2155, %v2022, 0.0
      %v2166 = vadd.f32 %v2164, %v2165
      %v2167 = vsel %vm2155, %v2027, 0.0
      %v2168 = vadd.f32 %v2166, %v2167
      %v2169 = vsel %vm2155, %v2032, 0.0
      %v2170 = vadd.f32 %v2168, %v2169
      %v2171 = vsel %vm2155, %v2037, 0.0
      %v2172 = vadd.f32 %v2170, %v2171
      %v2173 = vsel %vm2155, %v2042, 0.0
      %v2174 = vadd.f32 %v2172, %v2173
      %v2175 = vsel %vm2155, %v2047, 0.0
      %v2176 = vadd.f32 %v2174, %v2175
      %v2177 = vsel %vm2155, %v2052, 0.0
      %v2178 = vadd.f32 %v2176, %v2177
      %v2179 = vsel %vm2155, %v2057, 0.0
      %v2180 = vadd.f32 %v2178, %v2179
      %v2181 = vsel %vm2155, %v2062, 0.0
      %v2182 = vadd.f32 %v2180, %v2181
      %v2183 = vsel %vm2155, %v2067, 0.0
      %v2184 = vadd.f32 %v2182, %v2183
      %v2185 = vsel %vm2155, %v2072, 0.0
      %v2186 = vadd.f32 %v2184, %v2185
      %v2187 = vsel %vm2155, %v2077, 0.0
      %v2188 = vadd.f32 %v2186, %v2187
      %v2189 = vsel %vm2155, %v2082, 0.0
      %v2190 = vadd.f32 %v2188, %v2189
      %v2191 = vsel %vm2155, %v2087, 0.0
      %v2192 = vadd.f32 %v2190, %v2191
      %v2193 = vsel %vm2155, %v2092, 0.0
      %v2194 = vadd.f32 %v2192, %v2193
      %v2195 = vsel %vm2155, %v2097, 0.0
      %v2196 = vadd.f32 %v2194, %v2195
      %v2197 = vsel %vm2155, %v2102, 0.0
      %v2198 = vadd.f32 %v2196, %v2197
      %v2199 = vsel %vm2155, %v2107, 0.0
      %v2200 = vadd.f32 %v2198, %v2199
      %v2201 = vsel %vm2155, %v2112, 0.0
      %v2202 = vadd.f32 %v2200, %v2201
      %v2203 = vsel %vm2155, %v2117, 0.0
      %v2204 = vadd.f32 %v2202, %v2203
      %v2205 = vsel %vm2155, %v2122, 0.0
      %v2206 = vadd.f32 %v2204, %v2205
      %v2207 = vsel %vm2155, %v2127, 0.0
      %v2208 = vadd.f32 %v2206, %v2207
      %v2209 = vsel %vm2155, %v2132, 0.0
      %v2210 = vadd.f32 %v2208, %v2209
      %v2211 = vsel %vm2155, %v2137, 0.0
      %v2212 = vadd.f32 %v2210, %v2211
      %v2213 = vsel %vm2155, %v2142, 0.0
      %v2214 = vadd.f32 %v2212, %v2213
      %v2215 = vsel %vm2155, %v2147, 0.0
      %v2216 = vadd.f32 %v2214, %v2215
      %v2217 = vsel %vm2155, %v2152, 0.0
      %v2218 = vadd.f32 %v2216, %v2217
      %v2219 = vrot.slane %v2218, 4
      %v2220 = vadd.f32 %v2218, %v2219
      %v2221 = vrot.slane %v2220, 2
      %v2222 = vadd.f32 %v2220, %v2221
      %v2223 = vrot.slane %v2222, 1
      %v2224 = vadd.f32 %v2222, %v2223
      %v2225 = vmul.f32 %v1997, %v1997
      %v2226 = vmul.f32 %v2002, %v2002
      %v2227 = vmul.f32 %v2007, %v2007
      %v2228 = vmul.f32 %v2012, %v2012
      %v2229 = vmul.f32 %v2017, %v2017
      %v2230 = vmul.f32 %v2022, %v2022
      %v2231 = vmul.f32 %v2027, %v2027
      %v2232 = vmul.f32 %v2032, %v2032
      %v2233 = vmul.f32 %v2037, %v2037
      %v2234 = vmul.f32 %v2042, %v2042
      %v2235 = vmul.f32 %v2047, %v2047
      %v2236 = vmul.f32 %v2052, %v2052
      %v2237 = vmul.f32 %v2057, %v2057
      %v2238 = vmul.f32 %v2062, %v2062
      %v2239 = vmul.f32 %v2067, %v2067
      %v2240 = vmul.f32 %v2072, %v2072
      %v2241 = vmul.f32 %v2077, %v2077
      %v2242 = vmul.f32 %v2082, %v2082
      %v2243 = vmul.f32 %v2087, %v2087
      %v2244 = vmul.f32 %v2092, %v2092
      %v2245 = vmul.f32 %v2097, %v2097
      %v2246 = vmul.f32 %v2102, %v2102
      %v2247 = vmul.f32 %v2107, %v2107
      %v2248 = vmul.f32 %v2112, %v2112
      %v2249 = vmul.f32 %v2117, %v2117
      %v2250 = vmul.f32 %v2122, %v2122
      %v2251 = vmul.f32 %v2127, %v2127
      %v2252 = vmul.f32 %v2132, %v2132
      %v2253 = vmul.f32 %v2137, %v2137
      %v2254 = vmul.f32 %v2142, %v2142
      %v2255 = vmul.f32 %v2147, %v2147
      %v2256 = vmul.f32 %v2152, %v2152
      %v2257 = vsel %vm2155, %v2225, 0.0
      %v2258 = vsel %vm2155, %v2226, 0.0
      %v2259 = vadd.f32 %v2257, %v2258
      %v2260 = vsel %vm2155, %v2227, 0.0
      %v2261 = vadd.f32 %v2259, %v2260
      %v2262 = vsel %vm2155, %v2228, 0.0
      %v2263 = vadd.f32 %v2261, %v2262
      %v2264 = vsel %vm2155, %v2229, 0.0
      %v2265 = vadd.f32 %v2263, %v2264
      %v2266 = vsel %vm2155, %v2230, 0.0
      %v2267 = vadd.f32 %v2265, %v2266
      %v2268 = vsel %vm2155, %v2231, 0.0
      %v2269 = vadd.f32 %v2267, %v2268
      %v2270 = vsel %vm2155, %v2232, 0.0
      %v2271 = vadd.f32 %v2269, %v2270
      %v2272 = vsel %vm2155, %v2233, 0.0
      %v2273 = vadd.f32 %v2271, %v2272
      %v2274 = vsel %vm2155, %v2234, 0.0
      %v2275 = vadd.f32 %v2273, %v2274
      %v2276 = vsel %vm2155, %v2235, 0.0
      %v2277 = vadd.f32 %v2275, %v2276
      %v2278 = vsel %vm2155, %v2236, 0.0
      %v2279 = vadd.f32 %v2277, %v2278
      %v2280 = vsel %vm2155, %v2237, 0.0
      %v2281 = vadd.f32 %v2279, %v2280
      %v2282 = vsel %vm2155, %v2238, 0.0
      %v2283 = vadd.f32 %v2281, %v2282
      %v2284 = vsel %vm2155, %v2239, 0.0
      %v2285 = vadd.f32 %v2283, %v2284
      %v2286 = vsel %vm2155, %v2240, 0.0
      %v2287 = vadd.f32 %v2285, %v2286
      %v2288 = vsel %vm2155, %v2241, 0.0
      %v2289 = vadd.f32 %v2287, %v2288
      %v2290 = vsel %vm2155, %v2242, 0.0
      %v2291 = vadd.f32 %v2289, %v2290
      %v2292 = vsel %vm2155, %v2243, 0.0
      %v2293 = vadd.f32 %v2291, %v2292
      %v2294 = vsel %vm2155, %v2244, 0.0
      %v2295 = vadd.f32 %v2293, %v2294
      %v2296 = vsel %vm2155, %v2245, 0.0
      %v2297 = vadd.f32 %v2295, %v2296
      %v2298 = vsel %vm2155, %v2246, 0.0
      %v2299 = vadd.f32 %v2297, %v2298
      %v2300 = vsel %vm2155, %v2247, 0.0
      %v2301 = vadd.f32 %v2299, %v2300
      %v2302 = vsel %vm2155, %v2248, 0.0
      %v2303 = vadd.f32 %v2301, %v2302
      %v2304 = vsel %vm2155, %v2249, 0.0
      %v2305 = vadd.f32 %v2303, %v2304
      %v2306 = vsel %vm2155, %v2250, 0.0
      %v2307 = vadd.f32 %v2305, %v2306
      %v2308 = vsel %vm2155, %v2251, 0.0
      %v2309 = vadd.f32 %v2307, %v2308
      %v2310 = vsel %vm2155, %v2252, 0.0
      %v2311 = vadd.f32 %v2309, %v2310
      %v2312 = vsel %vm2155, %v2253, 0.0
      %v2313 = vadd.f32 %v2311, %v2312
      %v2314 = vsel %vm2155, %v2254, 0.0
      %v2315 = vadd.f32 %v2313, %v2314
      %v2316 = vsel %vm2155, %v2255, 0.0
      %v2317 = vadd.f32 %v2315, %v2316
      %v2318 = vsel %vm2155, %v2256, 0.0
      %v2319 = vadd.f32 %v2317, %v2318
      %v2320 = vrot.slane %v2319, 4
      %v2321 = vadd.f32 %v2319, %v2320
      %v2322 = vrot.slane %v2321, 2
      %v2323 = vadd.f32 %v2321, %v2322
      %v2324 = vrot.slane %v2323, 1
      %v2325 = vadd.f32 %v2323, %v2324
      %v2326 = vmul.f32 %v2224, 0.00390625
      %v2327 = vmul.f32 %v2325, 0.00390625
      %v2328 = vmul.f32 %v2326, %v2326
      %v2329 = vsub.f32 %v2327, %v2328
      %v2330 = vsub.f32 %v1997, %v2326
      %v2331 = vsub.f32 %v2002, %v2326
      %v2332 = vsub.f32 %v2007, %v2326
      %v2333 = vsub.f32 %v2012, %v2326
      %v2334 = vsub.f32 %v2017, %v2326
      %v2335 = vsub.f32 %v2022, %v2326
      %v2336 = vsub.f32 %v2027, %v2326
      %v2337 = vsub.f32 %v2032, %v2326
      %v2338 = vsub.f32 %v2037, %v2326
      %v2339 = vsub.f32 %v2042, %v2326
      %v2340 = vsub.f32 %v2047, %v2326
      %v2341 = vsub.f32 %v2052, %v2326
      %v2342 = vsub.f32 %v2057, %v2326
      %v2343 = vsub.f32 %v2062, %v2326
      %v2344 = vsub.f32 %v2067, %v2326
      %v2345 = vsub.f32 %v2072, %v2326
      %v2346 = vsub.f32 %v2077, %v2326
      %v2347 = vsub.f32 %v2082, %v2326
      %v2348 = vsub.f32 %v2087, %v2326
      %v2349 = vsub.f32 %v2092, %v2326
      %v2350 = vsub.f32 %v2097, %v2326
      %v2351 = vsub.f32 %v2102, %v2326
      %v2352 = vsub.f32 %v2107, %v2326
      %v2353 = vsub.f32 %v2112, %v2326
      %v2354 = vsub.f32 %v2117, %v2326
      %v2355 = vsub.f32 %v2122, %v2326
      %v2356 = vsub.f32 %v2127, %v2326
      %v2357 = vsub.f32 %v2132, %v2326
      %v2358 = vsub.f32 %v2137, %v2326
      %v2359 = vsub.f32 %v2142, %v2326
      %v2360 = vsub.f32 %v2147, %v2326
      %v2361 = vsub.f32 %v2152, %v2326
      %v2362 = vadd.f32 %v2329, 1e-05
      %v2363 = vrsqrt.pop %v2362
      %v2364 = vmul.f32 %v2330, %v2363
      %v2365 = vmul.f32 %v2331, %v2363
      %v2366 = vmul.f32 %v2332, %v2363
      %v2367 = vmul.f32 %v2333, %v2363
      %v2368 = vmul.f32 %v2334, %v2363
      %v2369 = vmul.f32 %v2335, %v2363
      %v2370 = vmul.f32 %v2336, %v2363
      %v2371 = vmul.f32 %v2337, %v2363
      %v2372 = vmul.f32 %v2338, %v2363
      %v2373 = vmul.f32 %v2339, %v2363
      %v2374 = vmul.f32 %v2340, %v2363
      %v2375 = vmul.f32 %v2341, %v2363
      %v2376 = vmul.f32 %v2342, %v2363
      %v2377 = vmul.f32 %v2343, %v2363
      %v2378 = vmul.f32 %v2344, %v2363
      %v2379 = vmul.f32 %v2345, %v2363
      %v2380 = vmul.f32 %v2346, %v2363
      %v2381 = vmul.f32 %v2347, %v2363
      %v2382 = vmul.f32 %v2348, %v2363
      %v2383 = vmul.f32 %v2349, %v2363
      %v2384 = vmul.f32 %v2350, %v2363
      %v2385 = vmul.f32 %v2351, %v2363
      %v2386 = vmul.f32 %v2352, %v2363
      %v2387 = vmul.f32 %v2353, %v2363
      %v2388 = vmul.f32 %v2354, %v2363
      %v2389 = vmul.f32 %v2355, %v2363
      %v2390 = vmul.f32 %v2356, %v2363
      %v2391 = vmul.f32 %v2357, %v2363
      %v2392 = vmul.f32 %v2358, %v2363
      %v2393 = vmul.f32 %v2359, %v2363
      %v2394 = vmul.f32 %v2360, %v2363
      %v2395 = vmul.f32 %v2361, %v2363
      %vm2396 = vcmp.ge.f32.partialorder %v2364, 0.0
      %vm2397 = vcmp.ge.f32.partialorder %v2365, 0.0
      %vm2398 = vcmp.ge.f32.partialorder %v2366, 0.0
      %vm2399 = vcmp.ge.f32.partialorder %v2367, 0.0
      %vm2400 = vcmp.ge.f32.partialorder %v2368, 0.0
      %vm2401 = vcmp.ge.f32.partialorder %v2369, 0.0
      %vm2402 = vcmp.ge.f32.partialorder %v2370, 0.0
      %vm2403 = vcmp.ge.f32.partialorder %v2371, 0.0
      %vm2404 = vcmp.ge.f32.partialorder %v2372, 0.0
      %vm2405 = vcmp.ge.f32.partialorder %v2373, 0.0
      %vm2406 = vcmp.ge.f32.partialorder %v2374, 0.0
      %vm2407 = vcmp.ge.f32.partialorder %v2375, 0.0
      %vm2408 = vcmp.ge.f32.partialorder %v2376, 0.0
      %vm2409 = vcmp.ge.f32.partialorder %v2377, 0.0
      %vm2410 = vcmp.ge.f32.partialorder %v2378, 0.0
      %vm2411 = vcmp.ge.f32.partialorder %v2379, 0.0
      %vm2412 = vcmp.ge.f32.partialorder %v2380, 0.0
      %vm2413 = vcmp.ge.f32.partialorder %v2381, 0.0
      %vm2414 = vcmp.ge.f32.partialorder %v2382, 0.0
      %vm2415 = vcmp.ge.f32.partialorder %v2383, 0.0
      %vm2416 = vcmp.ge.f32.partialorder %v2384, 0.0
      %vm2417 = vcmp.ge.f32.partialorder %v2385, 0.0
      %vm2418 = vcmp.ge.f32.partialorder %v2386, 0.0
      %vm2419 = vcmp.ge.f32.partialorder %v2387, 0.0
      %vm2420 = vcmp.ge.f32.partialorder %v2388, 0.0
      %vm2421 = vcmp.ge.f32.partialorder %v2389, 0.0
      %vm2422 = vcmp.ge.f32.partialorder %v2390, 0.0
      %vm2423 = vcmp.ge.f32.partialorder %v2391, 0.0
      %vm2424 = vcmp.ge.f32.partialorder %v2392, 0.0
      %vm2425 = vcmp.ge.f32.partialorder %v2393, 0.0
      %vm2426 = vcmp.ge.f32.partialorder %v2394, 0.0
      %vm2427 = vcmp.ge.f32.partialorder %v2395, 0.0
      %v2428 = vmul.f32 %v2364, 0.2
      %v2429 = vmul.f32 %v2365, 0.2
      %v2430 = vmul.f32 %v2366, 0.2
      %v2431 = vmul.f32 %v2367, 0.2
      %v2432 = vmul.f32 %v2368, 0.2
      %v2433 = vmul.f32 %v2369, 0.2
      %v2434 = vmul.f32 %v2370, 0.2
      %v2435 = vmul.f32 %v2371, 0.2
      %v2436 = vmul.f32 %v2372, 0.2
      %v2437 = vmul.f32 %v2373, 0.2
      %v2438 = vmul.f32 %v2374, 0.2
      %v2439 = vmul.f32 %v2375, 0.2
      %v2440 = vmul.f32 %v2376, 0.2
      %v2441 = vmul.f32 %v2377, 0.2
      %v2442 = vmul.f32 %v2378, 0.2
      %v2443 = vmul.f32 %v2379, 0.2
      %v2444 = vmul.f32 %v2380, 0.2
      %v2445 = vmul.f32 %v2381, 0.2
      %v2446 = vmul.f32 %v2382, 0.2
      %v2447 = vmul.f32 %v2383, 0.2
      %v2448 = vmul.f32 %v2384, 0.2
      %v2449 = vmul.f32 %v2385, 0.2
      %v2450 = vmul.f32 %v2386, 0.2
      %v2451 = vmul.f32 %v2387, 0.2
      %v2452 = vmul.f32 %v2388, 0.2
      %v2453 = vmul.f32 %v2389, 0.2
      %v2454 = vmul.f32 %v2390, 0.2
      %v2455 = vmul.f32 %v2391, 0.2
      %v2456 = vmul.f32 %v2392, 0.2
      %v2457 = vmul.f32 %v2393, 0.2
      %v2458 = vmul.f32 %v2394, 0.2
      %v2459 = vmul.f32 %v2395, 0.2
      %v2460 = vsel %vm2396, %v2364, %v2428
      %v2461 = vsel %vm2397, %v2365, %v2429
      %v2462 = vsel %vm2398, %v2366, %v2430
      %v2463 = vsel %vm2399, %v2367, %v2431
      %v2464 = vsel %vm2400, %v2368, %v2432
      %v2465 = vsel %vm2401, %v2369, %v2433
      %v2466 = vsel %vm2402, %v2370, %v2434
      %v2467 = vsel %vm2403, %v2371, %v2435
      %v2468 = vsel %vm2404, %v2372, %v2436
      %v2469 = vsel %vm2405, %v2373, %v2437
      %v2470 = vsel %vm2406, %v2374, %v2438
      %v2471 = vsel %vm2407, %v2375, %v2439
      %v2472 = vsel %vm2408, %v2376, %v2440
      %v2473 = vsel %vm2409, %v2377, %v2441
      %v2474 = vsel %vm2410, %v2378, %v2442
      %v2475 = vsel %vm2411, %v2379, %v2443
      %v2476 = vsel %vm2412, %v2380, %v2444
      %v2477 = vsel %vm2413, %v2381, %v2445
      %v2478 = vsel %vm2414, %v2382, %v2446
      %v2479 = vsel %vm2415, %v2383, %v2447
      %v2480 = vsel %vm2416, %v2384, %v2448
      %v2481 = vsel %vm2417, %v2385, %v2449
      %v2482 = vsel %vm2418, %v2386, %v2450
      %v2483 = vsel %vm2419, %v2387, %v2451
      %v2484 = vsel %vm2420, %v2388, %v2452
      %v2485 = vsel %vm2421, %v2389, %v2453
      %v2486 = vsel %vm2422, %v2390, %v2454
      %v2487 = vsel %vm2423, %v2391, %v2455
      %v2488 = vsel %vm2424, %v2392, %v2456
      %v2489 = vsel %vm2425, %v2393, %v2457
      %v2490 = vsel %vm2426, %v2394, %v2458
      %v2491 = vsel %vm2427, %v2395, %v2459
      %2492 = vst.msk [vmem:[%s170] sm:$0xff] %vm2155, %v2460
      %2493 = vst.msk [vmem:[%s170 + $0x8] sm:$0xff] %vm2155, %v2461
      %2494 = vst.msk [vmem:[%s170 + $0x10] sm:$0xff] %vm2155, %v2462
      %2495 = vst.msk [vmem:[%s170 + $0x18] sm:$0xff] %vm2155, %v2463
      %2496 = vst.msk [vmem:[%s170 + $0x20] sm:$0xff] %vm2155, %v2464
      %2497 = vst.msk [vmem:[%s170 + $0x28] sm:$0xff] %vm2155, %v2465
      %2498 = vst.msk [vmem:[%s170 + $0x30] sm:$0xff] %vm2155, %v2466
      %2499 = vst.msk [vmem:[%s170 + $0x38] sm:$0xff] %vm2155, %v2467
      %2500 = vst.msk [vmem:[%s170 + $0x40] sm:$0xff] %vm2155, %v2468
      %2501 = vst.msk [vmem:[%s170 + $0x48] sm:$0xff] %vm2155, %v2469
      %2502 = vst.msk [vmem:[%s170 + $0x50] sm:$0xff] %vm2155, %v2470
      %2503 = vst.msk [vmem:[%s170 + $0x58] sm:$0xff] %vm2155, %v2471
      %2504 = vst.msk [vmem:[%s170 + $0x60] sm:$0xff] %vm2155, %v2472
      %2505 = vst.msk [vmem:[%s170 + $0x68] sm:$0xff] %vm2155, %v2473
      %2506 = vst.msk [vmem:[%s170 + $0x70] sm:$0xff] %vm2155, %v2474
      %2507 = vst.msk [vmem:[%s170 + $0x78] sm:$0xff] %vm2155, %v2475
      %2508 = vst.msk [vmem:[%s170 + $0x80] sm:$0xff] %vm2155, %v2476
      %2509 = vst.msk [vmem:[%s170 + $0x88] sm:$0xff] %vm2155, %v2477
      %2510 = vst.msk [vmem:[%s170 + $0x90] sm:$0xff] %vm2155, %v2478
      %2511 = vst.msk [vmem:[%s170 + $0x98] sm:$0xff] %vm2155, %v2479
      %2512 = vst.msk [vmem:[%s170 + $0xa0] sm:$0xff] %vm2155, %v2480
      %2513 = vst.msk [vmem:[%s170 + $0xa8] sm:$0xff] %vm2155, %v2481
      %2514 = vst.msk [vmem:[%s170 + $0xb0] sm:$0xff] %vm2155, %v2482
      %2515 = vst.msk [vmem:[%s170 + $0xb8] sm:$0xff] %vm2155, %v2483
      %2516 = vst.msk [vmem:[%s170 + $0xc0] sm:$0xff] %vm2155, %v2484
      %2517 = vst.msk [vmem:[%s170 + $0xc8] sm:$0xff] %vm2155, %v2485
      %2518 = vst.msk [vmem:[%s170 + $0xd0] sm:$0xff] %vm2155, %v2486
      %2519 = vst.msk [vmem:[%s170 + $0xd8] sm:$0xff] %vm2155, %v2487
      %2520 = vst.msk [vmem:[%s170 + $0xe0] sm:$0xff] %vm2155, %v2488
      %2521 = vst.msk [vmem:[%s170 + $0xe8] sm:$0xff] %vm2155, %v2489
      %2522 = vst.msk [vmem:[%s170 + $0xf0] sm:$0xff] %vm2155, %v2490
      %2523 = vst.msk [vmem:[%s170 + $0xf8] sm:$0xff] %vm2155, %v2491
      %p2524 = scmp.lt.s32.totalorder %s14, 1
      %s2525 = scalar_select %p2524, %s14, 1
      %s2526 = smul.addr %s2525, 32
      %s2527 = smul.addr %s2526, 8
      %s2528 = scalar_lea.vmem %s3, %s2527
      // Predicated region
      $region33: #{_lambda_.2} parent=31 // pred_check
        %p2529 = pneg %p100
      $region34: #{_lambda_.2} parent=31 // pred_check_branch
        %2531 = sbr.rel (%p2529) target = $region36
      $region35: #{_lambda_.2} parent=31 // pred_region
        _
      $region36: #{_lambda_.2} parent=31 // pred_fallthru
        _
    $region32: #{_lambda_.2} parent=5 // pred_fallthru
      _
    %p2532 = scmp.le.s32.totalorder 2, %s9
    // Predicated region
    $region37: #{_lambda_.2} parent=5 // pred_check
      %p2533 = pneg %p2532
    $region38: #{_lambda_.2} parent=5 // pred_check_branch
      %2535 = sbr.rel (%p2533) target = $region40
    $region39: #{_lambda_.2} parent=5 // pred_region
      %s2536 = ssub.s32 %s9, 2
      // Predicated region
      $region41: #{_lambda_.2} parent=39 // pred_check
        %p2537 = pneg %p106
      $region42: #{_lambda_.2} parent=39 // pred_check_branch
        %2539 = sbr.rel (%p2537) target = $region44
      $region43: #{_lambda_.2} parent=39 // pred_region
        %p2540 = scmp.lt.s32.totalorder %s15, 1
        %s2541 = scalar_select %p2540, %s15, 1
        %s2542 = smul.addr %s2541, 32
        %s2543 = smul.addr %s2542, 8
        %s2544 = scalar_lea.vmem %s3, %s2543
      $region44: #{_lambda_.2} parent=39 // pred_fallthru
        _
    $region40: #{_lambda_.2} parent=5 // pred_fallthru
      _
  $region6: #{_lambda_.2} parent=0 // loop_footer
    %s13 = sadd.s32 1, %s9
  $region7: #{_lambda_.2} parent=0 // loop_footer_branch
    %8 = sbr.rel target = $region3
  $region8: #{_lambda_.2} parent=0 // loop_exit
    _

// kernel: _lambda_.3
$region0: #{_lambda_.3}
  #allocation0 [shape = 'u32[]', space=smem, size = 0x4, offset = 0x4, fixed_abs, tag = 'smem constant byte address 0x4 - core index']
  #allocation1 [shape = 'u32[144,128]{1,0:T(1,128)}', space=vmem, size = 0x12000, scoped, tag = 'internal scratch']
  #allocation2 [shape = 'f32[64,72]{1,0:T(8,128)}', space=vmem, size = 0x8000, scoped, tag = 'scratch operand']
  #allocation3 [shape = 'f32[74,16]{1,0:T(8,128)}', space=vmem, size = 0xa000, scoped, tag = 'scratch operand']
  #allocation4 [shape = 'f32[64,144]{1,0:T(8,128)}', space=vmem, size = 0x10000, scoped, tag = 'scratch operand']
  #allocation5 [shape = 'f32[1,1]{1,0:T(1,128)S(1)}', space=vmem, size = 0x200, scoped, tag = 'scoped memory for _lambda_.3']
  %s0 = inlined_call_operand.vmem [shape: f32[2,16,5,5,8], index: 0, kind: input, shape index: {}]
  %s1 = inlined_call_operand.vmem [shape: f32[72,16], index: 1, kind: input, shape index: {}]
  %s2 = inlined_call_operand.vmem [shape: f32[1,16], index: 2, kind: input, shape index: {}]
  %s3 = inlined_call_operand.vmem [shape: f32[1,144], index: 3, kind: input, shape index: {}]
  %s4 = inlined_call_operand.<no memory space> [shape: f32[1,1], index: 4, kind: input, shape index: {}]
  %s5 = inlined_call_operand.vmem [shape: f32[64,9], index: 5, kind: input, shape index: {}]
  %s6 = inlined_call_operand.hbm [shape: f32[2,64,16], index: 6, kind: output, shape index: {0}]
  %s7 = inlined_call_operand.vmem [shape: f32[2,64,1], index: 7, kind: output, shape index: {1}]
  %8 = xla_tuple %s6, %s7
  %s9 = sld [smem:[#allocation0]]
  $region65: #{_lambda_.3} parent=0
    _
  %s11 = ssub.s32 1, %s9
  %s12 = scalar_select 0, %s11, %s9
  %v13 = vstv %s4
  %14 = vst [vmem:[#allocation5] sm:$0x1] %v13
  $region1: #{_lambda_.3} parent=0
    #allocation6 [shape = 'u8[65536]{0}', space=vmem, size = 0x10000, scoped, tag = 'output window, operand 0']
    #allocation7 [shape = 's32[2]{0}', space=sflag, size = 0x8, scoped, tag = 'scoped memory for _lambda_.3']
    %15 = vsyncpa [#allocation7], 0
    %s16 = scalar_lea.sflag [#allocation7], 1
    %17 = vsyncpa %s16, 0
    loop: start=0, step=1, limit=4
    $region2: #{_lambda_.3} parent=1 // loop_pre_header
      _
    $region3: #{_lambda_.3} parent=1 // loop_header
      %s19 = sphi 0, %s23
      %p20 = scmp.ge.s32.totalorder %s19, 4
      %s29 = sphi 0, %s31
      %s32 = sphi 0, %s29
      %s33 = sphi 0, %s32
      %s49 = sphi 0, %s33
      %s53 = sphi 0, %s53
      %s55 = sphi 0, %s53
      %s56 = sphi 0, %s55
      %s70 = sphi 0, %s56
      %s74 = sphi 0, %s74
      %s76 = sphi 0, %s74
      %s77 = sphi 0, %s76
      %s91 = sphi 0, %s77
      %s95 = sphi 0, %s95
      %s97 = sphi 0, %s95
      %s98 = sphi 0, %s97
      %s112 = sphi 0, %s98
      %s116 = sphi 0, %s116
      %s118 = sphi 0, %s116
      %s119 = sphi 0, %s118
      %s133 = sphi 0, %s119
      %s137 = sphi 0, %s137
      %s139 = sphi 0, %s137
      %s140 = sphi 0, %s139
      %s154 = sphi 0, %s140
      %s160 = sphi 0, %s162
      %s163 = sphi 0, %s160
      %s164 = sphi 0, %s163
      %s180 = sphi 0, %s164
      %s186 = sphi 0, %s188
      %s189 = sphi 0, %s186
      %s190 = sphi 0, %s189
      %s206 = sphi 0, %s190
    $region4: #{_lambda_.3} parent=1 // loop_header_branch
      %22 = sbr.rel (%p20) target = $region8
    $region5: #{_lambda_.3} parent=1 // loop_body
      %s24 = ssub.s32 %s19, 1
      %s25 = ssub.s32 %s19, 2
      %s26 = sadd.s32 %s19, 1
      %s27 = ssub.s32 %s19, %s26
      %p28 = scmp.eq.s32.totalorder %s27, 0
      %s30 = sadd.s32 %s29, 1
      %s31 = scalar_select %p28, %s29, %s30
      %p34 = pneg %p28
      %p35 = scmp.eq.s32.totalorder %s19, 1
      %p36 = por %p34, %p35
      %p37 = scmp.ne.s32.totalorder %s29, %s32
      %p38 = scmp.eq.s32.totalorder %s19, 0
      %p39 = por %p37, %p38
      %p40 = scmp.ne.s32.totalorder %s29, %s32
      %p41 = scmp.eq.s32.totalorder %s24, 1
      %p42 = por %p40, %p41
      %p43 = scmp.ne.s32.totalorder %s32, %s33
      %p44 = scmp.eq.s32.totalorder %s24, 0
      %p45 = por %p43, %p44
      %p46 = scmp.ne.s32.totalorder %s32, %s33
      %p47 = scmp.eq.s32.totalorder %s25, 1
      %p48 = por %p46, %p47
      %p50 = scmp.ne.s32.totalorder %s33, %s49
      %p51 = scmp.eq.s32.totalorder %s25, 0
      %p52 = por %p50, %p51
      %s54 = sadd.s32 %s53, 1
      %p57 = scmp.eq.s32.totalorder %s19, 1
      %p58 = scmp.ne.s32.totalorder %s53, %s55
      %p59 = scmp.eq.s32.totalorder %s19, 0
      %p60 = por %p58, %p59
      %p61 = scmp.ne.s32.totalorder %s53, %s55
      %p62 = scmp.eq.s32.totalorder %s24, 1
      %p63 = por %p61, %p62
      %p64 = scmp.ne.s32.totalorder %s55, %s56
      %p65 = scmp.eq.s32.totalorder %s24, 0
      %p66 = por %p64, %p65
      %p67 = scmp.ne.s32.totalorder %s55, %s56
      %p68 = scmp.eq.s32.totalorder %s25, 1
      %p69 = por %p67, %p68
      %p71 = scmp.ne.s32.totalorder %s56, %s70
      %p72 = scmp.eq.s32.totalorder %s25, 0
      %p73 = por %p71, %p72
      %s75 = sadd.s32 %s74, 1
      %p78 = scmp.eq.s32.totalorder %s19, 1
      %p79 = scmp.ne.s32.totalorder %s74, %s76
      %p80 = scmp.eq.s32.totalorder %s19, 0
      %p81 = por %p79, %p80
      %p82 = scmp.ne.s32.totalorder %s74, %s76
      %p83 = scmp.eq.s32.totalorder %s24, 1
      %p84 = por %p82, %p83
      %p85 = scmp.ne.s32.totalorder %s76, %s77
      %p86 = scmp.eq.s32.totalorder %s24, 0
      %p87 = por %p85, %p86
      %p88 = scmp.ne.s32.totalorder %s76, %s77
      %p89 = scmp.eq.s32.totalorder %s25, 1
      %p90 = por %p88, %p89
      %p92 = scmp.ne.s32.totalorder %s77, %s91
      %p93 = scmp.eq.s32.totalorder %s25, 0
      %p94 = por %p92, %p93
      %s96 = sadd.s32 %s95, 1
      %p99 = scmp.eq.s32.totalorder %s19, 1
      %p100 = scmp.ne.s32.totalorder %s95, %s97
      %p101 = scmp.eq.s32.totalorder %s19, 0
      %p102 = por %p100, %p101
      %p103 = scmp.ne.s32.totalorder %s95, %s97
      %p104 = scmp.eq.s32.totalorder %s24, 1
      %p105 = por %p103, %p104
      %p106 = scmp.ne.s32.totalorder %s97, %s98
      %p107 = scmp.eq.s32.totalorder %s24, 0
      %p108 = por %p106, %p107
      %p109 = scmp.ne.s32.totalorder %s97, %s98
      %p110 = scmp.eq.s32.totalorder %s25, 1
      %p111 = por %p109, %p110
      %p113 = scmp.ne.s32.totalorder %s98, %s112
      %p114 = scmp.eq.s32.totalorder %s25, 0
      %p115 = por %p113, %p114
      %s117 = sadd.s32 %s116, 1
      %p120 = scmp.eq.s32.totalorder %s19, 1
      %p121 = scmp.ne.s32.totalorder %s116, %s118
      %p122 = scmp.eq.s32.totalorder %s19, 0
      %p123 = por %p121, %p122
      %p124 = scmp.ne.s32.totalorder %s116, %s118
      %p125 = scmp.eq.s32.totalorder %s24, 1
      %p126 = por %p124, %p125
      %p127 = scmp.ne.s32.totalorder %s118, %s119
      %p128 = scmp.eq.s32.totalorder %s24, 0
      %p129 = por %p127, %p128
      %p130 = scmp.ne.s32.totalorder %s118, %s119
      %p131 = scmp.eq.s32.totalorder %s25, 1
      %p132 = por %p130, %p131
      %p134 = scmp.ne.s32.totalorder %s119, %s133
      %p135 = scmp.eq.s32.totalorder %s25, 0
      %p136 = por %p134, %p135
      %s138 = sadd.s32 %s137, 1
      %p141 = scmp.eq.s32.totalorder %s19, 1
      %p142 = scmp.ne.s32.totalorder %s137, %s139
      %p143 = scmp.eq.s32.totalorder %s19, 0
      %p144 = por %p142, %p143
      %p145 = scmp.ne.s32.totalorder %s137, %s139
      %p146 = scmp.eq.s32.totalorder %s24, 1
      %p147 = por %p145, %p146
      %p148 = scmp.ne.s32.totalorder %s139, %s140
      %p149 = scmp.eq.s32.totalorder %s24, 0
      %p150 = por %p148, %p149
      %p151 = scmp.ne.s32.totalorder %s139, %s140
      %p152 = scmp.eq.s32.totalorder %s25, 1
      %p153 = por %p151, %p152
      %p155 = scmp.ne.s32.totalorder %s140, %s154
      %p156 = scmp.eq.s32.totalorder %s25, 0
      %p157 = por %p155, %p156
      %s158 = ssub.s32 %s19, %s26
      %p159 = scmp.eq.s32.totalorder %s158, 0
      %s161 = sadd.s32 %s160, 1
      %s162 = scalar_select %p159, %s160, %s161
      %p165 = pneg %p159
      %p166 = scmp.eq.s32.totalorder %s19, 1
      %p167 = por %p165, %p166
      %p168 = scmp.ne.s32.totalorder %s160, %s163
      %p169 = scmp.eq.s32.totalorder %s19, 0
      %p170 = por %p168, %p169
      %p171 = scmp.ne.s32.totalorder %s160, %s163
      %p172 = scmp.eq.s32.totalorder %s24, 1
      %p173 = por %p171, %p172
      %p174 = scmp.ne.s32.totalorder %s163, %s164
      %p175 = scmp.eq.s32.totalorder %s24, 0
      %p176 = por %p174, %p175
      %p177 = scmp.ne.s32.totalorder %s163, %s164
      %p178 = scmp.eq.s32.totalorder %s25, 1
      %p179 = por %p177, %p178
      %p181 = scmp.ne.s32.totalorder %s164, %s180
      %p182 = scmp.eq.s32.totalorder %s25, 0
      %p183 = por %p181, %p182
      %s184 = ssub.s32 %s19, %s26
      %p185 = scmp.eq.s32.totalorder %s184, 0
      %s187 = sadd.s32 %s186, 1
      %s188 = scalar_select %p185, %s186, %s187
      %p191 = pneg %p185
      %p192 = scmp.eq.s32.totalorder %s19, 1
      %p193 = por %p191, %p192
      %p194 = scmp.ne.s32.totalorder %s186, %s189
      %p195 = scmp.eq.s32.totalorder %s19, 0
      %p196 = por %p194, %p195
      %p197 = scmp.ne.s32.totalorder %s186, %s189
      %p198 = scmp.eq.s32.totalorder %s24, 1
      %p199 = por %p197, %p198
      %p200 = scmp.ne.s32.totalorder %s189, %s190
      %p201 = scmp.eq.s32.totalorder %s24, 0
      %p202 = por %p200, %p201
      %p203 = scmp.ne.s32.totalorder %s189, %s190
      %p204 = scmp.eq.s32.totalorder %s25, 1
      %p205 = por %p203, %p204
      %p207 = scmp.ne.s32.totalorder %s190, %s206
      %p208 = scmp.eq.s32.totalorder %s25, 0
      %p209 = por %p207, %p208
      %p210 = scmp.le.s32.totalorder 1, %s19
      %p211 = scmp.lt.s32.totalorder %s19, 3
      %p212 = pnand %p210, %p211
      %p213 = pneg %p212
      // Predicated region
      $region9: #{_lambda_.3} parent=5 // pred_check
        _
      $region10: #{_lambda_.3} parent=5 // pred_check_branch
        %215 = sbr.rel (%p212) target = $region12
      $region11: #{_lambda_.3} parent=5 // pred_region
        %s216 = ssub.s32 %s19, 1
        // Predicated region
        $region13: #{_lambda_.3} parent=11 // pred_check
          %p217 = pneg %p66
        $region14: #{_lambda_.3} parent=11 // pred_check_branch
          %219 = sbr.rel (%p217) target = $region16
        $region15: #{_lambda_.3} parent=11 // pred_region
          _
        $region16: #{_lambda_.3} parent=11 // pred_fallthru
          _
        // Predicated region
        $region17: #{_lambda_.3} parent=11 // pred_check
          %p220 = pneg %p87
        $region18: #{_lambda_.3} parent=11 // pred_check_branch
          %222 = sbr.rel (%p220) target = $region20
        $region19: #{_lambda_.3} parent=11 // pred_region
          _
        $region20: #{_lambda_.3} parent=11 // pred_fallthru
          _
        // Predicated region
        $region21: #{_lambda_.3} parent=11 // pred_check
          %p223 = pneg %p108
        $region22: #{_lambda_.3} parent=11 // pred_check_branch
          %225 = sbr.rel (%p223) target = $region24
        $region23: #{_lambda_.3} parent=11 // pred_region
          _
        $region24: #{_lambda_.3} parent=11 // pred_fallthru
          _
        // Predicated region
        $region25: #{_lambda_.3} parent=11 // pred_check
          %p226 = pneg %p129
        $region26: #{_lambda_.3} parent=11 // pred_check_branch
          %228 = sbr.rel (%p226) target = $region28
        $region27: #{_lambda_.3} parent=11 // pred_region
          _
        $region28: #{_lambda_.3} parent=11 // pred_fallthru
          _
        // Predicated region
        $region29: #{_lambda_.3} parent=11 // pred_check
          %p229 = pneg %p150
        $region30: #{_lambda_.3} parent=11 // pred_check_branch
          %231 = sbr.rel (%p229) target = $region32
        $region31: #{_lambda_.3} parent=11 // pred_region
          _
        $region32: #{_lambda_.3} parent=11 // pred_fallthru
          _
      $region12: #{_lambda_.3} parent=5 // pred_fallthru
        _
      %p232 = scmp.lt.s32.totalorder %s19, 2
      // Predicated region
      $region33: #{_lambda_.3} parent=5 // pred_check
        %p233 = pneg %p232
      $region34: #{_lambda_.3} parent=5 // pred_check_branch
        %235 = sbr.rel (%p233) target = $region36
      $region35: #{_lambda_.3} parent=5 // pred_region
        // Predicated region
        $region37: #{_lambda_.3} parent=35 // pred_check
          %p236 = pneg %p39
        $region38: #{_lambda_.3} parent=35 // pred_check_branch
          %238 = sbr.rel (%p236) target = $region40
        $region39: #{_lambda_.3} parent=35 // pred_region
          %p239 = scmp.lt.s32.totalorder %s19, 1
          %s240 = scalar_select %p239, %s19, 1
          %s241 = smul.addr %s240, 80
          %s242 = smul.addr %s241, 8
          %s243 = scalar_lea.vmem %s0, %s242
        $region40: #{_lambda_.3} parent=35 // pred_fallthru
          _
      $region36: #{_lambda_.3} parent=5 // pred_fallthru
        _
      %p244 = scmp.le.s32.totalorder 1, %s19
      %p245 = scmp.lt.s32.totalorder %s19, 3
      %p246 = pnand %p244, %p245
      %p247 = pneg %p246
      // Predicated region
      $region41: #{_lambda_.3} parent=5 // pred_check
        _
      $region42: #{_lambda_.3} parent=5 // pred_check_branch
        %249 = sbr.rel (%p246) target = $region44
      $region43: #{_lambda_.3} parent=5 // pred_region
        %s250 = ssub.s32 %s19, 1
        %p251 = scmp.lt.s32.totalorder %s24, 1
        %s252 = scalar_select %p251, %s24, 1
        %s253 = smul.addr %s252, 80
        %s254 = smul.addr %s253, 8
        %s255 = scalar_lea.vmem %s0, %s254
        %p256 = pneg %p45
        %p257 = pneg %p42
        %p258 = pneg %p66
        %p259 = pneg %p63
        %p260 = pneg %p87
        %p261 = pneg %p84
        %p262 = pneg %p108
        %p263 = pneg %p105
        %p264 = pneg %p129
        %p265 = pneg %p126
        %p266 = pneg %p150
        %p267 = pneg %p147
        %p268 = pneg %p176
        %p269 = pneg %p173
        %s270 = sand.u32 %s163, 1
        %s271 = scalar_lea.sflag [#allocation7], %s270
        %s272 = sand.u32 %s163, 1
        %s273 = smul.addr %s272, 64
        %s274 = scalar_lea.vmem [#allocation6], %s273
        %p275 = pneg %p202
        %p276 = pneg %p199
        %p277 = scmp.lt.s32.totalorder %s24, 1
        %s278 = scalar_select %p277, %s24, 1
        %s279 = smul.addr %s278, 8
        %s280 = smul.addr %s279, 8
        %s281 = scalar_lea.vmem %s7, %s280
        %p282 = scmp.lt.s32.totalorder %s24, 1
        %s283 = scalar_select %p282, %s24, 1
        %s284 = smul.addr %s283, 80
        %s285 = smul.addr %s284, 8
        %s286 = scalar_lea.vmem %s0, %s285
        %p287 = scmp.lt.s32.totalorder %s24, 1
        %s288 = scalar_select %p287, %s24, 1
        %s289 = smul.addr %s288, 8
        %s290 = smul.addr %s289, 8
        %s291 = scalar_lea.vmem %s7, %s290
        %v292 = vld [vmem:[%s286] sm:$0xf]
        %v293 = vld [vmem:[%s286 + $0x8] sm:$0xf]
        %v294 = vld [vmem:[%s286 + $0x10] sm:$0xf]
        %v295 = vld [vmem:[%s286 + $0x18] sm:$0xf]
        %v296 = vld [vmem:[%s286 + $0x28] sm:$0xf]
        %v297 = vld [vmem:[%s286 + $0x30] sm:$0xf]
        %v298 = vld [vmem:[%s286 + $0x38] sm:$0xf]
        %v299 = vld [vmem:[%s286 + $0x40] sm:$0xf]
        %v300 = vld [vmem:[%s286 + $0x50] sm:$0xf]
        %v301 = vld [vmem:[%s286 + $0x58] sm:$0xf]
        %v302 = vld [vmem:[%s286 + $0x60] sm:$0xf]
        %v303 = vld [vmem:[%s286 + $0x68] sm:$0xf]
        %v304 = vld [vmem:[%s286 + $0x78] sm:$0xf]
        %v305 = vld [vmem:[%s286 + $0x80] sm:$0xf]
        %v306 = vld [vmem:[%s286 + $0x88] sm:$0xf]
        %v307 = vld [vmem:[%s286 + $0x90] sm:$0xf]
        %v324 = vcombine.low %v292, %v293
        %v325 = vcombine.low %v294, %v295
        %v326 = vcombine.low %v296, %v297
        %v327 = vcombine.low %v298, %v299
        %v328 = vcombine.low %v300, %v301
        %v329 = vcombine.low %v302, %v303
        %v330 = vcombine.low %v304, %v305
        %v331 = vcombine.low %v306, %v307
        %vm340 = vcmask 64512
        %341 = vst.msk [vmem:[#allocation2] sm:$0xff] %vm340, %v324
        %342 = vst.msk [vmem:[#allocation2 + $0x8] sm:$0xff] %vm340, %v325
        %343 = vst.msk [vmem:[#allocation2 + $0x10] sm:$0xff] %vm340, %v326
        %344 = vst.msk [vmem:[#allocation2 + $0x18] sm:$0xff] %vm340, %v327
        %345 = vst.msk [vmem:[#allocation2 + $0x20] sm:$0xff] %vm340, %v328
        %346 = vst.msk [vmem:[#allocation2 + $0x28] sm:$0xff] %vm340, %v329
        %347 = vst.msk [vmem:[#allocation2 + $0x30] sm:$0xff] %vm340, %v330
        %348 = vst.msk [vmem:[#allocation2 + $0x38] sm:$0xff] %vm340, %v331
        %s349 = scalar_lea.vmem %s286, 160
        %v350 = vld [vmem:[%s349] sm:$0xf]
        %v351 = vld [vmem:[%s349 + $0x8] sm:$0xf]
        %v352 = vld [vmem:[%s349 + $0x10] sm:$0xf]
        %v353 = vld [vmem:[%s349 + $0x18] sm:$0xf]
        %v354 = vld [vmem:[%s349 + $0x28] sm:$0xf]
        %v355 = vld [vmem:[%s349 + $0x30] sm:$0xf]
        %v356 = vld [vmem:[%s349 + $0x38] sm:$0xf]
        %v357 = vld [vmem:[%s349 + $0x40] sm:$0xf]
        %v358 = vld [vmem:[%s349 + $0x50] sm:$0xf]
        %v359 = vld [vmem:[%s349 + $0x58] sm:$0xf]
        %v360 = vld [vmem:[%s349 + $0x60] sm:$0xf]
        %v361 = vld [vmem:[%s349 + $0x68] sm:$0xf]
        %v362 = vld [vmem:[%s349 + $0x78] sm:$0xf]
        %v363 = vld [vmem:[%s349 + $0x80] sm:$0xf]
        %v364 = vld [vmem:[%s349 + $0x88] sm:$0xf]
        %v365 = vld [vmem:[%s349 + $0x90] sm:$0xf]
        %v382 = vcombine.low %v350, %v351
        %v383 = vcombine.low %v352, %v353
        %v384 = vcombine.low %v354, %v355
        %v385 = vcombine.low %v356, %v357
        %v386 = vcombine.low %v358, %v359
        %v387 = vcombine.low %v360, %v361
        %v388 = vcombine.low %v362, %v363
        %v389 = vcombine.low %v364, %v365
        %390 = vrot.lane.b32.xlu0 %v382, 8
        %v391 = vpop.permute.xlu0 %390
        %392 = vrot.lane.b32.xlu0 %v383, 8
        %v393 = vpop.permute.xlu0 %392
        %394 = vrot.lane.b32.xlu0 %v384, 8
        %v395 = vpop.permute.xlu0 %394
        %396 = vrot.lane.b32.xlu0 %v385, 8
        %v397 = vpop.permute.xlu0 %396
        %398 = vrot.lane.b32.xlu0 %v386, 8
        %v399 = vpop.permute.xlu0 %398
        %400 = vrot.lane.b32.xlu0 %v387, 8
        %v401 = vpop.permute.xlu0 %400
        %402 = vrot.lane.b32.xlu0 %v388, 8
        %v403 = vpop.permute.xlu0 %402
        %404 = vrot.lane.b32.xlu0 %v389, 8
        %v405 = vpop.permute.xlu0 %404
        %vm414 = vcmask 130112
        %415 = vst.msk [vmem:[#allocation2] sm:$0xff] %vm414, %v391
        %416 = vst.msk [vmem:[#allocation2 + $0x8] sm:$0xff] %vm414, %v393
        %417 = vst.msk [vmem:[#allocation2 + $0x10] sm:$0xff] %vm414, %v395
        %418 = vst.msk [vmem:[#allocation2 + $0x18] sm:$0xff] %vm414, %v397
        %419 = vst.msk [vmem:[#allocation2 + $0x20] sm:$0xff] %vm414, %v399
        %420 = vst.msk [vmem:[#allocation2 + $0x28] sm:$0xff] %vm414, %v401
        %421 = vst.msk [vmem:[#allocation2 + $0x30] sm:$0xff] %vm414, %v403
        %422 = vst.msk [vmem:[#allocation2 + $0x38] sm:$0xff] %vm414, %v405
        %v423 = vld [vmem:[%s286 + $0x1] sm:$0xf]
        %v424 = vld [vmem:[%s286 + $0x9] sm:$0xf]
        %v425 = vld [vmem:[%s286 + $0x11] sm:$0xf]
        %v426 = vld [vmem:[%s286 + $0x19] sm:$0xf]
        %v427 = vld [vmem:[%s286 + $0x29] sm:$0xf]
        %v428 = vld [vmem:[%s286 + $0x31] sm:$0xf]
        %v429 = vld [vmem:[%s286 + $0x39] sm:$0xf]
        %v430 = vld [vmem:[%s286 + $0x41] sm:$0xf]
        %v431 = vld [vmem:[%s286 + $0x51] sm:$0xf]
        %v432 = vld [vmem:[%s286 + $0x59] sm:$0xf]
        %v433 = vld [vmem:[%s286 + $0x61] sm:$0xf]
        %v434 = vld [vmem:[%s286 + $0x69] sm:$0xf]
        %v435 = vld [vmem:[%s286 + $0x79] sm:$0xf]
        %v436 = vld [vmem:[%s286 + $0x81] sm:$0xf]
        %v437 = vld [vmem:[%s286 + $0x89] sm:$0xf]
        %v438 = vld [vmem:[%s286 + $0x91] sm:$0xf]
        %v455 = vcombine.low %v423, %v424
        %v456 = vcombine.low %v425, %v426
        %v457 = vcombine.low %v427, %v428
        %v458 = vcombine.low %v429, %v430
        %v459 = vcombine.low %v431, %v432
        %v460 = vcombine.low %v433, %v434
        %v461 = vcombine.low %v435, %v436
        %v462 = vcombine.low %v437, %v438
        %463 = vrot.lane.b32.xlu0 %v455, 16
        %v464 = vpop.permute.xlu0 %463
        %465 = vrot.lane.b32.xlu0 %v456, 16
        %v466 = vpop.permute.xlu0 %465
        %467 = vrot.lane.b32.xlu0 %v457, 16
        %v468 = vpop.permute.xlu0 %467
        %469 = vrot.lane.b32.xlu0 %v458, 16
        %v470 = vpop.permute.xlu0 %469
        %471 = vrot.lane.b32.xlu0 %v459, 16
        %v472 = vpop.permute.xlu0 %471
        %473 = vrot.lane.b32.xlu0 %v460, 16
        %v474 = vpop.permute.xlu0 %473
        %475 = vrot.lane.b32.xlu0 %v461, 16
        %v476 = vpop.permute.xlu0 %475
        %477 = vrot.lane.b32.xlu0 %v462, 16
        %v478 = vpop.permute.xlu0 %477
        %vm487 = vcmask 195712
        %488 = vst.msk [vmem:[#allocation2] sm:$0xff] %vm487, %v464
        %489 = vst.msk [vmem:[#allocation2 + $0x8] sm:$0xff] %vm487, %v466
        %490 = vst.msk [vmem:[#allocation2 + $0x10] sm:$0xff] %vm487, %v468
        %491 = vst.msk [vmem:[#allocation2 + $0x18] sm:$0xff] %vm487, %v470
        %492 = vst.msk [vmem:[#allocation2 + $0x20] sm:$0xff] %vm487, %v472
        %493 = vst.msk [vmem:[#allocation2 + $0x28] sm:$0xff] %vm487, %v474
        %494 = vst.msk [vmem:[#allocation2 + $0x30] sm:$0xff] %vm487, %v476
        %495 = vst.msk [vmem:[#allocation2 + $0x38] sm:$0xff] %vm487, %v478
        %s496 = scalar_lea.vmem %s286, 320
        %v497 = vld [vmem:[%s496] sm:$0xf]
        %v498 = vld [vmem:[%s496 + $0x8] sm:$0xf]
        %v499 = vld [vmem:[%s496 + $0x10] sm:$0xf]
        %v500 = vld [vmem:[%s496 + $0x18] sm:$0xf]
        %v501 = vld [vmem:[%s496 + $0x28] sm:$0xf]
        %v502 = vld [vmem:[%s496 + $0x30] sm:$0xf]
        %v503 = vld [vmem:[%s496 + $0x38] sm:$0xf]
        %v504 = vld [vmem:[%s496 + $0x40] sm:$0xf]
        %v505 = vld [vmem:[%s496 + $0x50] sm:$0xf]
        %v506 = vld [vmem:[%s496 + $0x58] sm:$0xf]
        %v507 = vld [vmem:[%s496 + $0x60] sm:$0xf]
        %v508 = vld [vmem:[%s496 + $0x68] sm:$0xf]
        %v509 = vld [vmem:[%s496 + $0x78] sm:$0xf]
        %v510 = vld [vmem:[%s496 + $0x80] sm:$0xf]
        %v511 = vld [vmem:[%s496 + $0x88] sm:$0xf]
        %v512 = vld [vmem:[%s496 + $0x90] sm:$0xf]
        %v529 = vcombine.low %v497, %v498
        %v530 = vcombine.low %v499, %v500
        %v531 = vcombine.low %v501, %v502
        %v532 = vcombine.low %v503, %v504
        %v533 = vcombine.low %v505, %v506
        %v534 = vcombine.low %v507, %v508
        %v535 = vcombine.low %v509, %v510
        %v536 = vcombine.low %v511, %v512
        %537 = vrot.lane.b32.xlu0 %v529, 24
        %v538 = vpop.permute.xlu0 %537
        %539 = vrot.lane.b32.xlu0 %v530, 24
        %v540 = vpop.permute.xlu0 %539
        %541 = vrot.lane.b32.xlu0 %v531, 24
        %v542 = vpop.permute.xlu0 %541
        %543 = vrot.lane.b32.xlu0 %v532, 24
        %v544 = vpop.permute.xlu0 %543
        %545 = vrot.lane.b32.xlu0 %v533, 24
        %v546 = vpop.permute.xlu0 %545
        %547 = vrot.lane.b32.xlu0 %v534, 24
        %v548 = vpop.permute.xlu0 %547
        %549 = vrot.lane.b32.xlu0 %v535, 24
        %v550 = vpop.permute.xlu0 %549
        %551 = vrot.lane.b32.xlu0 %v536, 24
        %v552 = vpop.permute.xlu0 %551
        %vm561 = vcmask 261312
        %562 = vst.msk [vmem:[#allocation2] sm:$0xff] %vm561, %v538
        %563 = vst.msk [vmem:[#allocation2 + $0x8] sm:$0xff] %vm561, %v540
        %564 = vst.msk [vmem:[#allocation2 + $0x10] sm:$0xff] %vm561, %v542
        %565 = vst.msk [vmem:[#allocation2 + $0x18] sm:$0xff] %vm561, %v544
        %566 = vst.msk [vmem:[#allocation2 + $0x20] sm:$0xff] %vm561, %v546
        %567 = vst.msk [vmem:[#allocation2 + $0x28] sm:$0xff] %vm561, %v548
        %568 = vst.msk [vmem:[#allocation2 + $0x30] sm:$0xff] %vm561, %v550
        %569 = vst.msk [vmem:[#allocation2 + $0x38] sm:$0xff] %vm561, %v552
        %s570 = scalar_lea.vmem %s286, 480
        %v571 = vld [vmem:[%s570] sm:$0xf]
        %v572 = vld [vmem:[%s570 + $0x8] sm:$0xf]
        %v573 = vld [vmem:[%s570 + $0x10] sm:$0xf]
        %v574 = vld [vmem:[%s570 + $0x18] sm:$0xf]
        %v575 = vld [vmem:[%s570 + $0x28] sm:$0xf]
        %v576 = vld [vmem:[%s570 + $0x30] sm:$0xf]
        %v577 = vld [vmem:[%s570 + $0x38] sm:$0xf]
        %v578 = vld [vmem:[%s570 + $0x40] sm:$0xf]
        %v579 = vld [vmem:[%s570 + $0x50] sm:$0xf]
        %v580 = vld [vmem:[%s570 + $0x58] sm:$0xf]
        %v581 = vld [vmem:[%s570 + $0x60] sm:$0xf]
        %v582 = vld [vmem:[%s570 + $0x68] sm:$0xf]
        %v583 = vld [vmem:[%s570 + $0x78] sm:$0xf]
        %v584 = vld [vmem:[%s570 + $0x80] sm:$0xf]
        %v585 = vld [vmem:[%s570 + $0x88] sm:$0xf]
        %v586 = vld [vmem:[%s570 + $0x90] sm:$0xf]
        %v603 = vcombine.low %v571, %v572
        %v604 = vcombine.low %v573, %v574
        %v605 = vcombine.low %v575, %v576
        %v606 = vcombine.low %v577, %v578
        %v607 = vcombine.low %v579, %v580
        %v608 = vcombine.low %v581, %v582
        %v609 = vcombine.low %v583, %v584
        %v610 = vcombine.low %v585, %v586
        %611 = vrot.lane.b32.xlu0 %v603, 32
        %v612 = vpop.permute.xlu0 %611
        %613 = vrot.lane.b32.xlu0 %v604, 32
        %v614 = vpop.permute.xlu0 %613
        %615 = vrot.lane.b32.xlu0 %v605, 32
        %v616 = vpop.permute.xlu0 %615
        %617 = vrot.lane.b32.xlu0 %v606, 32
        %v618 = vpop.permute.xlu0 %617
        %619 = vrot.lane.b32.xlu0 %v607, 32
        %v620 = vpop.permute.xlu0 %619
        %621 = vrot.lane.b32.xlu0 %v608, 32
        %v622 = vpop.permute.xlu0 %621
        %623 = vrot.lane.b32.xlu0 %v609, 32
        %v624 = vpop.permute.xlu0 %623
        %625 = vrot.lane.b32.xlu0 %v610, 32
        %v626 = vpop.permute.xlu0 %625
        %vm635 = vcmask 326912
        %636 = vst.msk [vmem:[#allocation2] sm:$0xff] %vm635, %v612
        %637 = vst.msk [vmem:[#allocation2 + $0x8] sm:$0xff] %vm635, %v614
        %638 = vst.msk [vmem:[#allocation2 + $0x10] sm:$0xff] %vm635, %v616
        %639 = vst.msk [vmem:[#allocation2 + $0x18] sm:$0xff] %vm635, %v618
        %640 = vst.msk [vmem:[#allocation2 + $0x20] sm:$0xff] %vm635, %v620
        %641 = vst.msk [vmem:[#allocation2 + $0x28] sm:$0xff] %vm635, %v622
        %642 = vst.msk [vmem:[#allocation2 + $0x30] sm:$0xff] %vm635, %v624
        %643 = vst.msk [vmem:[#allocation2 + $0x38] sm:$0xff] %vm635, %v626
        %v644 = vld [vmem:[%s496 + $0x1] sm:$0xf]
        %v645 = vld [vmem:[%s496 + $0x9] sm:$0xf]
        %v646 = vld [vmem:[%s496 + $0x11] sm:$0xf]
        %v647 = vld [vmem:[%s496 + $0x19] sm:$0xf]
        %v648 = vld [vmem:[%s496 + $0x29] sm:$0xf]
        %v649 = vld [vmem:[%s496 + $0x31] sm:$0xf]
        %v650 = vld [vmem:[%s496 + $0x39] sm:$0xf]
        %v651 = vld [vmem:[%s496 + $0x41] sm:$0xf]
        %v652 = vld [vmem:[%s496 + $0x51] sm:$0xf]
        %v653 = vld [vmem:[%s496 + $0x59] sm:$0xf]
        %v654 = vld [vmem:[%s496 + $0x61] sm:$0xf]
        %v655 = vld [vmem:[%s496 + $0x69] sm:$0xf]
        %v656 = vld [vmem:[%s496 + $0x79] sm:$0xf]
        %v657 = vld [vmem:[%s496 + $0x81] sm:$0xf]
        %v658 = vld [vmem:[%s496 + $0x89] sm:$0xf]
        %v659 = vld [vmem:[%s496 + $0x91] sm:$0xf]
        %v676 = vcombine.low %v644, %v645
        %v677 = vcombine.low %v646, %v647
        %v678 = vcombine.low %v648, %v649
        %v679 = vcombine.low %v650, %v651
        %v680 = vcombine.low %v652, %v653
        %v681 = vcombine.low %v654, %v655
        %v682 = vcombine.low %v656, %v657
        %v683 = vcombine.low %v658, %v659
        %684 = vrot.lane.b32.xlu0 %v676, 40
        %v685 = vpop.permute.xlu0 %684
        %686 = vrot.lane.b32.xlu0 %v677, 40
        %v687 = vpop.permute.xlu0 %686
        %688 = vrot.lane.b32.xlu0 %v678, 40
        %v689 = vpop.permute.xlu0 %688
        %690 = vrot.lane.b32.xlu0 %v679, 40
        %v691 = vpop.permute.xlu0 %690
        %692 = vrot.lane.b32.xlu0 %v680, 40
        %v693 = vpop.permute.xlu0 %692
        %694 = vrot.lane.b32.xlu0 %v681, 40
        %v695 = vpop.permute.xlu0 %694
        %696 = vrot.lane.b32.xlu0 %v682, 40
        %v697 = vpop.permute.xlu0 %696
        %698 = vrot.lane.b32.xlu0 %v683, 40
        %v699 = vpop.permute.xlu0 %698
        %vm708 = vcmask 392512
        %709 = vst.msk [vmem:[#allocation2] sm:$0xff] %vm708, %v685
        %710 = vst.msk [vmem:[#allocation2 + $0x8] sm:$0xff] %vm708, %v687
        %711 = vst.msk [vmem:[#allocation2 + $0x10] sm:$0xff] %vm708, %v689
        %712 = vst.msk [vmem:[#allocation2 + $0x18] sm:$0xff] %vm708, %v691
        %713 = vst.msk [vmem:[#allocation2 + $0x20] sm:$0xff] %vm708, %v693
        %714 = vst.msk [vmem:[#allocation2 + $0x28] sm:$0xff] %vm708, %v695
        %715 = vst.msk [vmem:[#allocation2 + $0x30] sm:$0xff] %vm708, %v697
        %716 = vst.msk [vmem:[#allocation2 + $0x38] sm:$0xff] %vm708, %v699
        %s717 = scalar_lea.vmem %s286, 8
        %v718 = vld [vmem:[%s717] sm:$0xf]
        %v719 = vld [vmem:[%s717 + $0x8] sm:$0xf]
        %v720 = vld [vmem:[%s717 + $0x10] sm:$0xf]
        %v721 = vld [vmem:[%s717 + $0x18] sm:$0xf]
        %v722 = vld [vmem:[%s717 + $0x28] sm:$0xf]
        %v723 = vld [vmem:[%s717 + $0x30] sm:$0xf]
        %v724 = vld [vmem:[%s717 + $0x38] sm:$0xf]
        %v725 = vld [vmem:[%s717 + $0x40] sm:$0xf]
        %v726 = vld [vmem:[%s717 + $0x50] sm:$0xf]
        %v727 = vld [vmem:[%s717 + $0x58] sm:$0xf]
        %v728 = vld [vmem:[%s717 + $0x60] sm:$0xf]
        %v729 = vld [vmem:[%s717 + $0x68] sm:$0xf]
        %v730 = vld [vmem:[%s717 + $0x78] sm:$0xf]
        %v731 = vld [vmem:[%s717 + $0x80] sm:$0xf]
        %v732 = vld [vmem:[%s717 + $0x88] sm:$0xf]
        %v733 = vld [vmem:[%s717 + $0x90] sm:$0xf]
        %v750 = vcombine.low %v718, %v719
        %v751 = vcombine.low %v720, %v721
        %v752 = vcombine.low %v722, %v723
        %v753 = vcombine.low %v724, %v725
        %v754 = vcombine.low %v726, %v727
        %v755 = vcombine.low %v728, %v729
        %v756 = vcombine.low %v730, %v731
        %v757 = vcombine.low %v732, %v733
        %758 = vrot.lane.b32.xlu0 %v750, 48
        %v759 = vpop.permute.xlu0 %758
        %760 = vrot.lane.b32.xlu0 %v751, 48
        %v761 = vpop.permute.xlu0 %760
        %762 = vrot.lane.b32.xlu0 %v752, 48
        %v763 = vpop.permute.xlu0 %762
        %764 = vrot.lane.b32.xlu0 %v753, 48
        %v765 = vpop.permute.xlu0 %764
        %766 = vrot.lane.b32.xlu0 %v754, 48
        %v767 = vpop.permute.xlu0 %766
        %768 = vrot.lane.b32.xlu0 %v755, 48
        %v769 = vpop.permute.xlu0 %768
        %770 = vrot.lane.b32.xlu0 %v756, 48
        %v771 = vpop.permute.xlu0 %770
        %772 = vrot.lane.b32.xlu0 %v757, 48
        %v773 = vpop.permute.xlu0 %772
        %vm782 = vcmask 458112
        %783 = vst.msk [vmem:[#allocation2] sm:$0xff] %vm782, %v759
        %784 = vst.msk [vmem:[#allocation2 + $0x8] sm:$0xff] %vm782, %v761
        %785 = vst.msk [vmem:[#allocation2 + $0x10] sm:$0xff] %vm782, %v763
        %786 = vst.msk [vmem:[#allocation2 + $0x18] sm:$0xff] %vm782, %v765
        %787 = vst.msk [vmem:[#allocation2 + $0x20] sm:$0xff] %vm782, %v767
        %788 = vst.msk [vmem:[#allocation2 + $0x28] sm:$0xff] %vm782, %v769
        %789 = vst.msk [vmem:[#allocation2 + $0x30] sm:$0xff] %vm782, %v771
        %790 = vst.msk [vmem:[#allocation2 + $0x38] sm:$0xff] %vm782, %v773
        %s791 = scalar_lea.vmem %s286, 168
        %v792 = vld [vmem:[%s791] sm:$0xf]
        %v793 = vld [vmem:[%s791 + $0x8] sm:$0xf]
        %v794 = vld [vmem:[%s791 + $0x10] sm:$0xf]
        %v795 = vld [vmem:[%s791 + $0x18] sm:$0xf]
        %v796 = vld [vmem:[%s791 + $0x28] sm:$0xf]
        %v797 = vld [vmem:[%s791 + $0x30] sm:$0xf]
        %v798 = vld [vmem:[%s791 + $0x38] sm:$0xf]
        %v799 = vld [vmem:[%s791 + $0x40] sm:$0xf]
        %v800 = vld [vmem:[%s791 + $0x50] sm:$0xf]
        %v801 = vld [vmem:[%s791 + $0x58] sm:$0xf]
        %v802 = vld [vmem:[%s791 + $0x60] sm:$0xf]
        %v803 = vld [vmem:[%s791 + $0x68] sm:$0xf]
        %v804 = vld [vmem:[%s791 + $0x78] sm:$0xf]
        %v805 = vld [vmem:[%s791 + $0x80] sm:$0xf]
        %v806 = vld [vmem:[%s791 + $0x88] sm:$0xf]
        %v807 = vld [vmem:[%s791 + $0x90] sm:$0xf]
        %v824 = vcombine.low %v792, %v793
        %v825 = vcombine.low %v794, %v795
        %v826 = vcombine.low %v796, %v797
        %v827 = vcombine.low %v798, %v799
        %v828 = vcombine.low %v800, %v801
        %v829 = vcombine.low %v802, %v803
        %v830 = vcombine.low %v804, %v805
        %v831 = vcombine.low %v806, %v807
        %832 = vrot.lane.b32.xlu0 %v824, 56
        %v833 = vpop.permute.xlu0 %832
        %834 = vrot.lane.b32.xlu0 %v825, 56
        %v835 = vpop.permute.xlu0 %834
        %836 = vrot.lane.b32.xlu0 %v826, 56
        %v837 = vpop.permute.xlu0 %836
        %838 = vrot.lane.b32.xlu0 %v827, 56
        %v839 = vpop.permute.xlu0 %838
        %840 = vrot.lane.b32.xlu0 %v828, 56
        %v841 = vpop.permute.xlu0 %840
        %842 = vrot.lane.b32.xlu0 %v829, 56
        %v843 = vpop.permute.xlu0 %842
        %844 = vrot.lane.b32.xlu0 %v830, 56
        %v845 = vpop.permute.xlu0 %844
        %846 = vrot.lane.b32.xlu0 %v831, 56
        %v847 = vpop.permute.xlu0 %846
        %vm856 = vcmask 523712
        %857 = vst.msk [vmem:[#allocation2] sm:$0xff] %vm856, %v833
        %858 = vst.msk [vmem:[#allocation2 + $0x8] sm:$0xff] %vm856, %v835
        %859 = vst.msk [vmem:[#allocation2 + $0x10] sm:$0xff] %vm856, %v837
        %860 = vst.msk [vmem:[#allocation2 + $0x18] sm:$0xff] %vm856, %v839
        %861 = vst.msk [vmem:[#allocation2 + $0x20] sm:$0xff] %vm856, %v841
        %862 = vst.msk [vmem:[#allocation2 + $0x28] sm:$0xff] %vm856, %v843
        %863 = vst.msk [vmem:[#allocation2 + $0x30] sm:$0xff] %vm856, %v845
        %864 = vst.msk [vmem:[#allocation2 + $0x38] sm:$0xff] %vm856, %v847
        %v865 = vld [vmem:[%s717 + $0x1] sm:$0xf]
        %v866 = vld [vmem:[%s717 + $0x9] sm:$0xf]
        %v867 = vld [vmem:[%s717 + $0x11] sm:$0xf]
        %v868 = vld [vmem:[%s717 + $0x19] sm:$0xf]
        %v869 = vld [vmem:[%s717 + $0x29] sm:$0xf]
        %v870 = vld [vmem:[%s717 + $0x31] sm:$0xf]
        %v871 = vld [vmem:[%s717 + $0x39] sm:$0xf]
        %v872 = vld [vmem:[%s717 + $0x41] sm:$0xf]
        %v873 = vld [vmem:[%s717 + $0x51] sm:$0xf]
        %v874 = vld [vmem:[%s717 + $0x59] sm:$0xf]
        %v875 = vld [vmem:[%s717 + $0x61] sm:$0xf]
        %v876 = vld [vmem:[%s717 + $0x69] sm:$0xf]
        %v877 = vld [vmem:[%s717 + $0x79] sm:$0xf]
        %v878 = vld [vmem:[%s717 + $0x81] sm:$0xf]
        %v879 = vld [vmem:[%s717 + $0x89] sm:$0xf]
        %v880 = vld [vmem:[%s717 + $0x91] sm:$0xf]
        %v897 = vcombine.low %v865, %v866
        %v898 = vcombine.low %v867, %v868
        %v899 = vcombine.low %v869, %v870
        %v900 = vcombine.low %v871, %v872
        %v901 = vcombine.low %v873, %v874
        %v902 = vcombine.low %v875, %v876
        %v903 = vcombine.low %v877, %v878
        %v904 = vcombine.low %v879, %v880
        %905 = vrot.lane.b32.xlu0 %v897, 64
        %v906 = vpop.permute.xlu0 %905
        %907 = vrot.lane.b32.xlu0 %v898, 64
        %v908 = vpop.permute.xlu0 %907
        %909 = vrot.lane.b32.xlu0 %v899, 64
        %v910 = vpop.permute.xlu0 %909
        %911 = vrot.lane.b32.xlu0 %v900, 64
        %v912 = vpop.permute.xlu0 %911
        %913 = vrot.lane.b32.xlu0 %v901, 64
        %v914 = vpop.permute.xlu0 %913
        %915 = vrot.lane.b32.xlu0 %v902, 64
        %v916 = vpop.permute.xlu0 %915
        %917 = vrot.lane.b32.xlu0 %v903, 64
        %v918 = vpop.permute.xlu0 %917
        %919 = vrot.lane.b32.xlu0 %v904, 64
        %v920 = vpop.permute.xlu0 %919
        %vm929 = vcmask 589312
        %930 = vst.msk [vmem:[#allocation2] sm:$0xff] %vm929, %v906
        %931 = vst.msk [vmem:[#allocation2 + $0x8] sm:$0xff] %vm929, %v908
        %932 = vst.msk [vmem:[#allocation2 + $0x10] sm:$0xff] %vm929, %v910
        %933 = vst.msk [vmem:[#allocation2 + $0x18] sm:$0xff] %vm929, %v912
        %934 = vst.msk [vmem:[#allocation2 + $0x20] sm:$0xff] %vm929, %v914
        %935 = vst.msk [vmem:[#allocation2 + $0x28] sm:$0xff] %vm929, %v916
        %936 = vst.msk [vmem:[#allocation2 + $0x30] sm:$0xff] %vm929, %v918
        %937 = vst.msk [vmem:[#allocation2 + $0x38] sm:$0xff] %vm929, %v920
        %v938 = vld [vmem:[#allocation2] sm:$0xff]
        %v939 = vld [vmem:[#allocation2 + $0x8] sm:$0xff]
        %v940 = vld [vmem:[#allocation2 + $0x10] sm:$0xff]
        %v941 = vld [vmem:[#allocation2 + $0x18] sm:$0xff]
        %v942 = vld [vmem:[#allocation2 + $0x20] sm:$0xff]
        %v943 = vld [vmem:[#allocation2 + $0x28] sm:$0xff]
        %v944 = vld [vmem:[#allocation2 + $0x30] sm:$0xff]
        %v945 = vld [vmem:[#allocation2 + $0x38] sm:$0xff]
        %v946 = vld [vmem:[%s1] sm:$0xff]
        %v947 = vld [vmem:[%s1 + $0x8] sm:$0xff]
        %v948 = vld [vmem:[%s1 + $0x10] sm:$0xff]
        %v949 = vld [vmem:[%s1 + $0x18] sm:$0xff]
        %v950 = vld [vmem:[%s1 + $0x20] sm:$0xff]
        %v951 = vld [vmem:[%s1 + $0x28] sm:$0xff]
        %v952 = vld [vmem:[%s1 + $0x30] sm:$0xff]
        %v953 = vld [vmem:[%s1 + $0x38] sm:$0xff]
        %v954 = vld [vmem:[%s1 + $0x40] sm:$0xff]
        %v955 = vld [vmem:[%s2] sm:$0x1]
        %v957 = vlaneseq
        %v958 = vshrl.u32 %v957, 7
        %v959 = vsub.s32 0, %v958
        %v960 = vrot.slane %v955, %v959
        %vm962 = vcmask 588800
        %v964 = vsel %vm962, %v938, 0
        %v967 = vsel %vm962, %v939, 0
        %v970 = vsel %vm962, %v940, 0
        %v973 = vsel %vm962, %v941, 0
        %v976 = vsel %vm962, %v942, 0
        %v979 = vsel %vm962, %v943, 0
        %v982 = vsel %vm962, %v944, 0
        %v985 = vsel %vm962, %v945, 0
        %987 = vmatprep.subr.mxu0 0.0
        %988 = vmatpush1.msra.mxu0 %v946
        %989 = vmatprep.subr.mxu0 0.0
        %990 = vmatpush1.msra.mxu0 %v947
        %991 = vmatprep.subr.mxu0 0.0
        %992 = vmatpush1.msra.mxu0 %v948
        %993 = vmatprep.subr.mxu0 0.0
        %994 = vmatpush1.msra.mxu0 %v949
        %995 = vmatprep.subr.mxu0 0.0
        %996 = vmatpush1.msra.mxu0 %v950
        %997 = vmatprep.subr.mxu0 0.0
        %998 = vmatpush1.msra.mxu0 %v951
        %999 = vmatprep.subr.mxu0 0.0
        %1000 = vmatpush1.msra.mxu0 %v952
        %1001 = vmatprep.subr.mxu0 0.0
        %1002 = vmatpush1.msra.mxu0 %v953
        %1003 = vmatprep.subr.mxu0 0.0
        %1004 = vmatpush1.msra.mxu0 %v954
        %1005 = vmatprep.subr.mxu0 0.0
        %1006 = vmatpush1.msra.mxu0 0.0
        %1007 = vmatprep.subr.mxu0 0.0
        %1008 = vmatpush1.msra.mxu0 0.0
        %1009 = vmatprep.subr.mxu0 0.0
        %1010 = vmatpush1.msra.mxu0 0.0
        %1011 = vmatprep.subr.mxu0 0.0
        %1012 = vmatpush1.msra.mxu0 0.0
        %1013 = vmatprep.subr.mxu0 0.0
        %1014 = vmatpush1.msra.mxu0 0.0
        %1015 = vmatprep.subr.mxu0 0.0
        %1016 = vmatpush1.msra.mxu0 0.0
        %1017 = vmatprep.subr.mxu0 0.0
        %1018 = vmatpush1.msra.mxu0 0.0
        %1019 = vmatprep.subr.mxu0 0.0
        %1020 = vmatpush1.msra.mxu0 0.0
        %1021 = vmatprep.subr.mxu0 0.0
        %1022 = vmatpush1.msra.mxu0 0.0
        %1023 = vmatprep.subr.mxu0 0.0
        %1024 = vmatpush1.msra.mxu0 0.0
        %1025 = vmatprep.subr.mxu0 0.0
        %1026 = vmatpush1.msra.mxu0 0.0
        %1027 = vmatprep.subr.mxu0 0.0
        %1028 = vmatpush1.msra.mxu0 0.0
        %1029 = vmatprep.subr.mxu0 0.0
        %1030 = vmatpush1.msra.mxu0 0.0
        %1031 = vmatprep.subr.mxu0 0.0
        %1032 = vmatpush1.msra.mxu0 0.0
        %1033 = vmatprep.subr.mxu0 0.0
        %1034 = vmatpush1.msra.mxu0 0.0
        %1035 = vmatprep.subr.mxu0 0.0
        %1036 = vmatpush1.msra.mxu0 0.0
        %1037 = vmatprep.subr.mxu0 0.0
        %1038 = vmatpush1.msra.mxu0 0.0
        %1039 = vmatprep.subr.mxu0 0.0
        %1040 = vmatpush1.msra.mxu0 0.0
        %1041 = vmatprep.subr.mxu0 0.0
        %1042 = vmatpush1.msra.mxu0 0.0
        %1043 = vmatprep.subr.mxu0 0.0
        %1044 = vmatpush1.msra.mxu0 0.0
        %1045 = vmatprep.subr.mxu0 0.0
        %1046 = vmatpush1.msra.mxu0 0.0
        %1047 = vmatprep.subr.mxu0 0.0
        %1048 = vmatpush1.msra.mxu0 0.0
        %1049 = vmatprep.subr.mxu0 0.0
        %1050 = vmatpush1.msra.mxu0 0.0
        %1051 = vmatprep.mubr.f32.mxu0 0.0
        %1052 = vmatmul.mubr.f32.gmra.mrb[0].mxu0 %v964
        %v1053 = vpop.f32.mrb[0].mxu0
        %v1054 = vadd.f32 %v960, %v1053
        %v1055 = vpop.f32.mrb[0].mxu0
        %1056 = vmatprep.mubr.f32.mxu0 0.0
        %1057 = vmatmul.mubr.f32.gmra.mrb[0].mxu0 %v967
        %v1058 = vpop.f32.mrb[0].mxu0
        %v1059 = vadd.f32 %v960, %v1058
        %v1060 = vpop.f32.mrb[0].mxu0
        %1061 = vmatprep.mubr.f32.mxu0 0.0
        %1062 = vmatmul.mubr.f32.gmra.mrb[0].mxu0 %v970
        %v1063 = vpop.f32.mrb[0].mxu0
        %v1064 = vadd.f32 %v960, %v1063
        %v1065 = vpop.f32.mrb[0].mxu0
        %1066 = vmatprep.mubr.f32.mxu0 0.0
        %1067 = vmatmul.mubr.f32.gmra.mrb[0].mxu0 %v973
        %v1068 = vpop.f32.mrb[0].mxu0
        %v1069 = vadd.f32 %v960, %v1068
        %v1070 = vpop.f32.mrb[0].mxu0
        %1071 = vmatprep.mubr.f32.mxu0 0.0
        %1072 = vmatmul.mubr.f32.gmra.mrb[0].mxu0 %v976
        %v1073 = vpop.f32.mrb[0].mxu0
        %v1074 = vadd.f32 %v960, %v1073
        %v1075 = vpop.f32.mrb[0].mxu0
        %1076 = vmatprep.mubr.f32.mxu0 0.0
        %1077 = vmatmul.mubr.f32.gmra.mrb[0].mxu0 %v979
        %v1078 = vpop.f32.mrb[0].mxu0
        %v1079 = vadd.f32 %v960, %v1078
        %v1080 = vpop.f32.mrb[0].mxu0
        %1081 = vmatprep.mubr.f32.mxu0 0.0
        %1082 = vmatmul.mubr.f32.gmra.mrb[0].mxu0 %v982
        %v1083 = vpop.f32.mrb[0].mxu0
        %v1084 = vadd.f32 %v960, %v1083
        %v1085 = vpop.f32.mrb[0].mxu0
        %1086 = vmatprep.mubr.f32.mxu0 0.0
        %1087 = vmatmul.mubr.f32.gmra.mrb[0].mxu0 %v985
        %v1088 = vpop.f32.mrb[0].mxu0
        %v1089 = vadd.f32 %v960, %v1088
        %v1090 = vpop.f32.mrb[0].mxu0
        %1091 = vdwg.mxu0
        %vm1092 = vcmask 130048
        %v1093 = vsel %vm1092, %v1054, 0.0
        %v1094 = vsel %vm1092, %v1059, 0.0
        %v1095 = vadd.f32 %v1093, %v1094
        %v1096 = vsel %vm1092, %v1064, 0.0
        %v1097 = vadd.f32 %v1095, %v1096
        %v1098 = vsel %vm1092, %v1069, 0.0
        %v1099 = vadd.f32 %v1097, %v1098
        %v1100 = vsel %vm1092, %v1074, 0.0
        %v1101 = vadd.f32 %v1099, %v1100
        %v1102 = vsel %vm1092, %v1079, 0.0
        %v1103 = vadd.f32 %v1101, %v1102
        %v1104 = vsel %vm1092, %v1084, 0.0
        %v1105 = vadd.f32 %v1103, %v1104
        %v1106 = vsel %vm1092, %v1089, 0.0
        %v1107 = vadd.f32 %v1105, %v1106
        %v1108 = vrot.slane %v1107, 4
        %v1109 = vadd.f32 %v1107, %v1108
        %v1110 = vrot.slane %v1109, 2
        %v1111 = vadd.f32 %v1109, %v1110
        %v1112 = vrot.slane %v1111, 1
        %v1113 = vadd.f32 %v1111, %v1112
        %v1114 = vmul.f32 %v1054, %v1054
        %v1115 = vmul.f32 %v1059, %v1059
        %v1116 = vmul.f32 %v1064, %v1064
        %v1117 = vmul.f32 %v1069, %v1069
        %v1118 = vmul.f32 %v1074, %v1074
        %v1119 = vmul.f32 %v1079, %v1079
        %v1120 = vmul.f32 %v1084, %v1084
        %v1121 = vmul.f32 %v1089, %v1089
        %v1122 = vsel %vm1092, %v1114, 0.0
        %v1123 = vsel %vm1092, %v1115, 0.0
        %v1124 = vadd.f32 %v1122, %v1123
        %v1125 = vsel %vm1092, %v1116, 0.0
        %v1126 = vadd.f32 %v1124, %v1125
        %v1127 = vsel %vm1092, %v1117, 0.0
        %v1128 = vadd.f32 %v1126, %v1127
        %v1129 = vsel %vm1092, %v1118, 0.0
        %v1130 = vadd.f32 %v1128, %v1129
        %v1131 = vsel %vm1092, %v1119, 0.0
        %v1132 = vadd.f32 %v1130, %v1131
        %v1133 = vsel %vm1092, %v1120, 0.0
        %v1134 = vadd.f32 %v1132, %v1133
        %v1135 = vsel %vm1092, %v1121, 0.0
        %v1136 = vadd.f32 %v1134, %v1135
        %v1137 = vrot.slane %v1136, 4
        %v1138 = vadd.f32 %v1136, %v1137
        %v1139 = vrot.slane %v1138, 2
        %v1140 = vadd.f32 %v1138, %v1139
        %v1141 = vrot.slane %v1140, 1
        %v1142 = vadd.f32 %v1140, %v1141
        %v1143 = vmul.f32 %v1113, 0.015625
        %v1144 = vmul.f32 %v1142, 0.015625
        %v1145 = vmul.f32 %v1143, %v1143
        %v1146 = vsub.f32 %v1144, %v1145
        %v1147 = vsub.f32 %v1054, %v1143
        %v1148 = vsub.f32 %v1059, %v1143
        %v1149 = vsub.f32 %v1064, %v1143
        %v1150 = vsub.f32 %v1069, %v1143
        %v1151 = vsub.f32 %v1074, %v1143
        %v1152 = vsub.f32 %v1079, %v1143
        %v1153 = vsub.f32 %v1084, %v1143
        %v1154 = vsub.f32 %v1089, %v1143
        %v1155 = vadd.f32 %v1146, 1e-05
        %v1156 = vrsqrt.pop %v1155
        %v1157 = vmul.f32 %v1147, %v1156
        %v1158 = vmul.f32 %v1148, %v1156
        %v1159 = vmul.f32 %v1149, %v1156
        %v1160 = vmul.f32 %v1150, %v1156
        %v1161 = vmul.f32 %v1151, %v1156
        %v1162 = vmul.f32 %v1152, %v1156
        %v1163 = vmul.f32 %v1153, %v1156
        %v1164 = vmul.f32 %v1154, %v1156
        %vm1165 = vcmp.ge.f32.partialorder %v1157, 0.0
        %vm1166 = vcmp.ge.f32.partialorder %v1158, 0.0
        %vm1167 = vcmp.ge.f32.partialorder %v1159, 0.0
        %vm1168 = vcmp.ge.f32.partialorder %v1160, 0.0
        %vm1169 = vcmp.ge.f32.partialorder %v1161, 0.0
        %vm1170 = vcmp.ge.f32.partialorder %v1162, 0.0
        %vm1171 = vcmp.ge.f32.partialorder %v1163, 0.0
        %vm1172 = vcmp.ge.f32.partialorder %v1164, 0.0
        %v1173 = vmul.f32 %v1157, 0.2
        %v1174 = vmul.f32 %v1158, 0.2
        %v1175 = vmul.f32 %v1159, 0.2
        %v1176 = vmul.f32 %v1160, 0.2
        %v1177 = vmul.f32 %v1161, 0.2
        %v1178 = vmul.f32 %v1162, 0.2
        %v1179 = vmul.f32 %v1163, 0.2
        %v1180 = vmul.f32 %v1164, 0.2
        %v1181 = vsel %vm1165, %v1157, %v1173
        %v1182 = vsel %vm1166, %v1158, %v1174
        %v1183 = vsel %vm1167, %v1159, %v1175
        %v1184 = vsel %vm1168, %v1160, %v1176
        %v1185 = vsel %vm1169, %v1161, %v1177
        %v1186 = vsel %vm1170, %v1162, %v1178
        %v1187 = vsel %vm1171, %v1163, %v1179
        %v1188 = vsel %vm1172, %v1164, %v1180
        %1189 = vst.msk [vmem:[%s274] sm:$0xff] %vm1092, %v1181
        %1190 = vst.msk [vmem:[%s274 + $0x8] sm:$0xff] %vm1092, %v1182
        %1191 = vst.msk [vmem:[%s274 + $0x10] sm:$0xff] %vm1092, %v1183
        %1192 = vst.msk [vmem:[%s274 + $0x18] sm:$0xff] %vm1092, %v1184
        %1193 = vst.msk [vmem:[%s274 + $0x20] sm:$0xff] %vm1092, %v1185
        %1194 = vst.msk [vmem:[%s274 + $0x28] sm:$0xff] %vm1092, %v1186
        %1195 = vst.msk [vmem:[%s274 + $0x30] sm:$0xff] %vm1092, %v1187
        %1196 = vst.msk [vmem:[%s274 + $0x38] sm:$0xff] %vm1092, %v1188
        %1197 = vst.msk [vmem:[#allocation3] sm:$0xff] %vm1092, 0.0
        %1198 = vst.msk [vmem:[#allocation3 + $0x8] sm:$0xff] %vm1092, 0.0
        %1199 = vst.msk [vmem:[#allocation3 + $0x10] sm:$0xff] %vm1092, 0.0
        %1200 = vst.msk [vmem:[#allocation3 + $0x18] sm:$0xff] %vm1092, 0.0
        %1201 = vst.msk [vmem:[#allocation3 + $0x20] sm:$0xff] %vm1092, 0.0
        %1202 = vst.msk [vmem:[#allocation3 + $0x28] sm:$0xff] %vm1092, 0.0
        %1203 = vst.msk [vmem:[#allocation3 + $0x30] sm:$0xff] %vm1092, 0.0
        %1204 = vst.msk [vmem:[#allocation3 + $0x38] sm:$0xff] %vm1092, 0.0
        %1205 = vst.msk [vmem:[#allocation3 + $0x40] sm:$0xff] %vm1092, 0.0
        %vm1206 = vcmask 123904
        %1207 = vst.msk [vmem:[#allocation3 + $0x48] sm:$0x3] %vm1206, 0.0
        %1208 = vst.msk [vmem:[#allocation3 + $0x5] sm:$0xff] %vm1092, %v1181
        %1209 = vst.msk [vmem:[#allocation3 + $0xd] sm:$0xff] %vm1092, %v1182
        %1210 = vst.msk [vmem:[#allocation3 + $0x15] sm:$0xff] %vm1092, %v1183
        %1211 = vst.msk [vmem:[#allocation3 + $0x1d] sm:$0xff] %vm1092, %v1184
        %1212 = vst.msk [vmem:[#allocation3 + $0x25] sm:$0xff] %vm1092, %v1185
        %1213 = vst.msk [vmem:[#allocation3 + $0x2d] sm:$0xff] %vm1092, %v1186
        %1214 = vst.msk [vmem:[#allocation3 + $0x35] sm:$0xff] %vm1092, %v1187
        %1215 = vst.msk [vmem:[#allocation3 + $0x3d] sm:$0xff] %vm1092, %v1188
        %v1216 = vld [vmem:[#allocation3] sm:$0xff]
        %v1217 = vld [vmem:[#allocation3 + $0x8] sm:$0xff]
        %v1218 = vld [vmem:[#allocation3 + $0x10] sm:$0xff]
        %v1219 = vld [vmem:[#allocation3 + $0x18] sm:$0xff]
        %v1220 = vld [vmem:[#allocation3 + $0x20] sm:$0xff]
        %v1221 = vld [vmem:[#allocation3 + $0x28] sm:$0xff]
        %v1222 = vld [vmem:[#allocation3 + $0x30] sm:$0xff]
        %v1223 = vld [vmem:[#allocation3 + $0x38] sm:$0xff]
        %v1224 = vld [vmem:[%s5] sm:$0xff]
        %v1225 = vld [vmem:[%s5 + $0x8] sm:$0xff]
        %v1226 = vld [vmem:[%s5 + $0x10] sm:$0xff]
        %v1227 = vld [vmem:[%s5 + $0x18] sm:$0xff]
        %v1228 = vld [vmem:[%s5 + $0x20] sm:$0xff]
        %v1229 = vld [vmem:[%s5 + $0x28] sm:$0xff]
        %v1230 = vld [vmem:[%s5 + $0x30] sm:$0xff]
        %v1231 = vld [vmem:[%s5 + $0x38] sm:$0xff]
        %1233 = vset.pattern.permute.xlu0 0
        %1234 = vperm.xlu0 %1233, %v1224
        %v1235 = vpop.permute.xlu0 %1234
        %1238 = vset.pattern.permute.xlu0 0
        %1239 = vperm.xlu0 %1238, %v1225
        %v1240 = vpop.permute.xlu0 %1239
        %1243 = vset.pattern.permute.xlu0 0
        %1244 = vperm.xlu0 %1243, %v1226
        %v1245 = vpop.permute.xlu0 %1244
        %1248 = vset.pattern.permute.xlu0 0
        %1249 = vperm.xlu0 %1248, %v1227
        %v1250 = vpop.permute.xlu0 %1249
        %1253 = vset.pattern.permute.xlu0 0
        %1254 = vperm.xlu0 %1253, %v1228
        %v1255 = vpop.permute.xlu0 %1254
        %1258 = vset.pattern.permute.xlu0 0
        %1259 = vperm.xlu0 %1258, %v1229
        %v1260 = vpop.permute.xlu0 %1259
        %1263 = vset.pattern.permute.xlu0 0
        %1264 = vperm.xlu0 %1263, %v1230
        %v1265 = vpop.permute.xlu0 %1264
        %1268 = vset.pattern.permute.xlu0 0
        %1269 = vperm.xlu0 %1268, %v1231
        %v1270 = vpop.permute.xlu0 %1269
        %v1272 = vmul.f32 %v1216, %v1235
        %v1273 = vmul.f32 %v1217, %v1240
        %v1274 = vmul.f32 %v1218, %v1245
        %v1275 = vmul.f32 %v1219, %v1250
        %v1276 = vmul.f32 %v1220, %v1255
        %v1277 = vmul.f32 %v1221, %v1260
        %v1278 = vmul.f32 %v1222, %v1265
        %v1279 = vmul.f32 %v1223, %v1270
        %1280 = vst.msk [vmem:[#allocation4] sm:$0xff] %vm1092, %v1272
        %1281 = vst.msk [vmem:[#allocation4 + $0x10] sm:$0xff] %vm1092, %v1273
        %1282 = vst.msk [vmem:[#allocation4 + $0x20] sm:$0xff] %vm1092, %v1274
        %1283 = vst.msk [vmem:[#allocation4 + $0x30] sm:$0xff] %vm1092, %v1275
        %1284 = vst.msk [vmem:[#allocation4 + $0x40] sm:$0xff] %vm1092, %v1276
        %1285 = vst.msk [vmem:[#allocation4 + $0x50] sm:$0xff] %vm1092, %v1277
        %1286 = vst.msk [vmem:[#allocation4 + $0x60] sm:$0xff] %vm1092, %v1278
        %1287 = vst.msk [vmem:[#allocation4 + $0x70] sm:$0xff] %vm1092, %v1279
        %v1288 = vld [vmem:[#allocation3 + $0x1] sm:$0xff]
        %v1289 = vld [vmem:[#allocation3 + $0x9] sm:$0xff]
        %v1290 = vld [vmem:[#allocation3 + $0x11] sm:$0xff]
        %v1291 = vld [vmem:[#allocation3 + $0x19] sm:$0xff]
        %v1292 = vld [vmem:[#allocation3 + $0x21] sm:$0xff]
        %v1293 = vld [vmem:[#allocation3 + $0x29] sm:$0xff]
        %v1294 = vld [vmem:[#allocation3 + $0x31] sm:$0xff]
        %v1295 = vld [vmem:[#allocation3 + $0x39] sm:$0xff]
        %v1296 = vld [vmem:[%s5] sm:$0xff]
        %v1297 = vld [vmem:[%s5 + $0x8] sm:$0xff]
        %v1298 = vld [vmem:[%s5 + $0x10] sm:$0xff]
        %v1299 = vld [vmem:[%s5 + $0x18] sm:$0xff]
        %v1300 = vld [vmem:[%s5 + $0x20] sm:$0xff]
        %v1301 = vld [vmem:[%s5 + $0x28] sm:$0xff]
        %v1302 = vld [vmem:[%s5 + $0x30] sm:$0xff]
        %v1303 = vld [vmem:[%s5 + $0x38] sm:$0xff]
        %1305 = vset.pattern.permute.xlu0 1
        %1306 = vperm.xlu0 %1305, %v1296
        %v1307 = vpop.permute.xlu0 %1306
        %1310 = vset.pattern.permute.xlu0 1
        %1311 = vperm.xlu0 %1310, %v1297
        %v1312 = vpop.permute.xlu0 %1311
        %1315 = vset.pattern.permute.xlu0 1
        %1316 = vperm.xlu0 %1315, %v1298
        %v1317 = vpop.permute.xlu0 %1316
        %1320 = vset.pattern.permute.xlu0 1
        %1321 = vperm.xlu0 %1320, %v1299
        %v1322 = vpop.permute.xlu0 %1321
        %1325 = vset.pattern.permute.xlu0 1
        %1326 = vperm.xlu0 %1325, %v1300
        %v1327 = vpop.permute.xlu0 %1326
        %1330 = vset.pattern.permute.xlu0 1
        %1331 = vperm.xlu0 %1330, %v1301
        %v1332 = vpop.permute.xlu0 %1331
        %1335 = vset.pattern.permute.xlu0 1
        %1336 = vperm.xlu0 %1335, %v1302
        %v1337 = vpop.permute.xlu0 %1336
        %1340 = vset.pattern.permute.xlu0 1
        %1341 = vperm.xlu0 %1340, %v1303
        %v1342 = vpop.permute.xlu0 %1341
        %v1344 = vmul.f32 %v1288, %v1307
        %v1345 = vmul.f32 %v1289, %v1312
        %v1346 = vmul.f32 %v1290, %v1317
        %v1347 = vmul.f32 %v1291, %v1322
        %v1348 = vmul.f32 %v1292, %v1327
        %v1349 = vmul.f32 %v1293, %v1332
        %v1350 = vmul.f32 %v1294, %v1337
        %v1351 = vmul.f32 %v1295, %v1342
        %1360 = vrot.lane.b32.xlu0 %v1344, 16
        %v1361 = vpop.permute.xlu0 %1360
        %1362 = vrot.lane.b32.xlu0 %v1345, 16
        %v1363 = vpop.permute.xlu0 %1362
        %1364 = vrot.lane.b32.xlu0 %v1346, 16
        %v1365 = vpop.permute.xlu0 %1364
        %1366 = vrot.lane.b32.xlu0 %v1347, 16
        %v1367 = vpop.permute.xlu0 %1366
        %1368 = vrot.lane.b32.xlu0 %v1348, 16
        %v1369 = vpop.permute.xlu0 %1368
        %1370 = vrot.lane.b32.xlu0 %v1349, 16
        %v1371 = vpop.permute.xlu0 %1370
        %1372 = vrot.lane.b32.xlu0 %v1350, 16
        %v1373 = vpop.permute.xlu0 %1372
        %1374 = vrot.lane.b32.xlu0 %v1351, 16
        %v1375 = vpop.permute.xlu0 %1374
        %vm1384 = vcmask 261248
        %1385 = vst.msk [vmem:[#allocation4] sm:$0xff] %vm1384, %v1361
        %1386 = vst.msk [vmem:[#allocation4 + $0x10] sm:$0xff] %vm1384, %v1363
        %1387 = vst.msk [vmem:[#allocation4 + $0x20] sm:$0xff] %vm1384, %v1365
        %1388 = vst.msk [vmem:[#allocation4 + $0x30] sm:$0xff] %vm1384, %v1367
        %1389 = vst.msk [vmem:[#allocation4 + $0x40] sm:$0xff] %vm1384, %v1369
        %1390 = vst.msk [vmem:[#allocation4 + $0x50] sm:$0xff] %vm1384, %v1371
        %1391 = vst.msk [vmem:[#allocation4 + $0x60] sm:$0xff] %vm1384, %v1373
        %1392 = vst.msk [vmem:[#allocation4 + $0x70] sm:$0xff] %vm1384, %v1375
        %v1393 = vld [vmem:[#allocation3 + $0x2] sm:$0xff]
        %v1394 = vld [vmem:[#allocation3 + $0xa] sm:$0xff]
        %v1395 = vld [vmem:[#allocation3 + $0x12] sm:$0xff]
        %v1396 = vld [vmem:[#allocation3 + $0x1a] sm:$0xff]
        %v1397 = vld [vmem:[#allocation3 + $0x22] sm:$0xff]
        %v1398 = vld [vmem:[#allocation3 + $0x2a] sm:$0xff]
        %v1399 = vld [vmem:[#allocation3 + $0x32] sm:$0xff]
        %v1400 = vld [vmem:[#allocation3 + $0x3a] sm:$0xff]
        %v1401 = vld [vmem:[%s5] sm:$0xff]
        %v1402 = vld [vmem:[%s5 + $0x8] sm:$0xff]
        %v1403 = vld [vmem:[%s5 + $0x10] sm:$0xff]
        %v1404 = vld [vmem:[%s5 + $0x18] sm:$0xff]
        %v1405 = vld [vmem:[%s5 + $0x20] sm:$0xff]
        %v1406 = vld [vmem:[%s5 + $0x28] sm:$0xff]
        %v1407 = vld [vmem:[%s5 + $0x30] sm:$0xff]
        %v1408 = vld [vmem:[%s5 + $0x38] sm:$0xff]
        %1410 = vset.pattern.permute.xlu0 2
        %1411 = vperm.xlu0 %1410, %v1401
        %v1412 = vpop.permute.xlu0 %1411
        %1415 = vset.pattern.permute.xlu0 2
        %1416 = vperm.xlu0 %1415, %v1402
        %v1417 = vpop.permute.xlu0 %1416
        %1420 = vset.pattern.permute.xlu0 2
        %1421 = vperm.xlu0 %1420, %v1403
        %v1422 = vpop.permute.xlu0 %1421
        %1425 = vset.pattern.permute.xlu0 2
        %1426 = vperm.xlu0 %1425, %v1404
        %v1427 = vpop.permute.xlu0 %1426
        %1430 = vset.pattern.permute.xlu0 2
        %1431 = vperm.xlu0 %1430, %v1405
        %v1432 = vpop.permute.xlu0 %1431
        %1435 = vset.pattern.permute.xlu0 2
        %1436 = vperm.xlu0 %1435, %v1406
        %v1437 = vpop.permute.xlu0 %1436
        %1440 = vset.pattern.permute.xlu0 2
        %1441 = vperm.xlu0 %1440, %v1407
        %v1442 = vpop.permute.xlu0 %1441
        %1445 = vset.pattern.permute.xlu0 2
        %1446 = vperm.xlu0 %1445, %v1408
        %v1447 = vpop.permute.xlu0 %1446
        %v1449 = vmul.f32 %v1393, %v1412
        %v1450 = vmul.f32 %v1394, %v1417
        %v1451 = vmul.f32 %v1395, %v1422
        %v1452 = vmul.f32 %v1396, %v1427
        %v1453 = vmul.f32 %v1397, %v1432
        %v1454 = vmul.f32 %v1398, %v1437
        %v1455 = vmul.f32 %v1399, %v1442
        %v1456 = vmul.f32 %v1400, %v1447
        %1465 = vrot.lane.b32.xlu0 %v1449, 32
        %v1466 = vpop.permute.xlu0 %1465
        %1467 = vrot.lane.b32.xlu0 %v1450, 32
        %v1468 = vpop.permute.xlu0 %1467
        %1469 = vrot.lane.b32.xlu0 %v1451, 32
        %v1470 = vpop.permute.xlu0 %1469
        %1471 = vrot.lane.b32.xlu0 %v1452, 32
        %v1472 = vpop.permute.xlu0 %1471
        %1473 = vrot.lane.b32.xlu0 %v1453, 32
        %v1474 = vpop.permute.xlu0 %1473
        %1475 = vrot.lane.b32.xlu0 %v1454, 32
        %v1476 = vpop.permute.xlu0 %1475
        %1477 = vrot.lane.b32.xlu0 %v1455, 32
        %v1478 = vpop.permute.xlu0 %1477
        %1479 = vrot.lane.b32.xlu0 %v1456, 32
        %v1480 = vpop.permute.xlu0 %1479
        %vm1489 = vcmask 392448
        %1490 = vst.msk [vmem:[#allocation4] sm:$0xff] %vm1489, %v1466
        %1491 = vst.msk [vmem:[#allocation4 + $0x10] sm:$0xff] %vm1489, %v1468
        %1492 = vst.msk [vmem:[#allocation4 + $0x20] sm:$0xff] %vm1489, %v1470
        %1493 = vst.msk [vmem:[#allocation4 + $0x30] sm:$0xff] %vm1489, %v1472
        %1494 = vst.msk [vmem:[#allocation4 + $0x40] sm:$0xff] %vm1489, %v1474
        %1495 = vst.msk [vmem:[#allocation4 + $0x50] sm:$0xff] %vm1489, %v1476
        %1496 = vst.msk [vmem:[#allocation4 + $0x60] sm:$0xff] %vm1489, %v1478
        %1497 = vst.msk [vmem:[#allocation4 + $0x70] sm:$0xff] %vm1489, %v1480
        %v1498 = vld [vmem:[#allocation3 + $0x4] sm:$0xff]
        %v1499 = vld [vmem:[#allocation3 + $0xc] sm:$0xff]
        %v1500 = vld [vmem:[#allocation3 + $0x14] sm:$0xff]
        %v1501 = vld [vmem:[#allocation3 + $0x1c] sm:$0xff]
        %v1502 = vld [vmem:[#allocation3 + $0x24] sm:$0xff]
        %v1503 = vld [vmem:[#allocation3 + $0x2c] sm:$0xff]
        %v1504 = vld [vmem:[#allocation3 + $0x34] sm:$0xff]
        %v1505 = vld [vmem:[#allocation3 + $0x3c] sm:$0xff]
        %v1506 = vld [vmem:[%s5] sm:$0xff]
        %v1507 = vld [vmem:[%s5 + $0x8] sm:$0xff]
        %v1508 = vld [vmem:[%s5 + $0x10] sm:$0xff]
        %v1509 = vld [vmem:[%s5 + $0x18] sm:$0xff]
        %v1510 = vld [vmem:[%s5 + $0x20] sm:$0xff]
        %v1511 = vld [vmem:[%s5 + $0x28] sm:$0xff]
        %v1512 = vld [vmem:[%s5 + $0x30] sm:$0xff]
        %v1513 = vld [vmem:[%s5 + $0x38] sm:$0xff]
        %1515 = vset.pattern.permute.xlu0 3
        %1516 = vperm.xlu0 %1515, %v1506
        %v1517 = vpop.permute.xlu0 %1516
        %1520 = vset.pattern.permute.xlu0 3
        %1521 = vperm.xlu0 %1520, %v1507
        %v1522 = vpop.permute.xlu0 %1521
        %1525 = vset.pattern.permute.xlu0 3
        %1526 = vperm.xlu0 %1525, %v1508
        %v1527 = vpop.permute.xlu0 %1526
        %1530 = vset.pattern.permute.xlu0 3
        %1531 = vperm.xlu0 %1530, %v1509
        %v1532 = vpop.permute.xlu0 %1531
        %1535 = vset.pattern.permute.xlu0 3
        %1536 = vperm.xlu0 %1535, %v1510
        %v1537 = vpop.permute.xlu0 %1536
        %1540 = vset.pattern.permute.xlu0 3
        %1541 = vperm.xlu0 %1540, %v1511
        %v1542 = vpop.permute.xlu0 %1541
        %1545 = vset.pattern.permute.xlu0 3
        %1546 = vperm.xlu0 %1545, %v1512
        %v1547 = vpop.permute.xlu0 %1546
        %1550 = vset.pattern.permute.xlu0 3
        %1551 = vperm.xlu0 %1550, %v1513
        %v1552 = vpop.permute.xlu0 %1551
        %v1554 = vmul.f32 %v1498, %v1517
        %v1555 = vmul.f32 %v1499, %v1522
        %v1556 = vmul.f32 %v1500, %v1527
        %v1557 = vmul.f32 %v1501, %v1532
        %v1558 = vmul.f32 %v1502, %v1537
        %v1559 = vmul.f32 %v1503, %v1542
        %v1560 = vmul.f32 %v1504, %v1547
        %v1561 = vmul.f32 %v1505, %v1552
        %1570 = vrot.lane.b32.xlu0 %v1554, 48
        %v1571 = vpop.permute.xlu0 %1570
        %1572 = vrot.lane.b32.xlu0 %v1555, 48
        %v1573 = vpop.permute.xlu0 %1572
        %1574 = vrot.lane.b32.xlu0 %v1556, 48
        %v1575 = vpop.permute.xlu0 %1574
        %1576 = vrot.lane.b32.xlu0 %v1557, 48
        %v1577 = vpop.permute.xlu0 %1576
        %1578 = vrot.lane.b32.xlu0 %v1558, 48
        %v1579 = vpop.permute.xlu0 %1578
        %1580 = vrot.lane.b32.xlu0 %v1559, 48
        %v1581 = vpop.permute.xlu0 %1580
        %1582 = vrot.lane.b32.xlu0 %v1560, 48
        %v1583 = vpop.permute.xlu0 %1582
        %1584 = vrot.lane.b32.xlu0 %v1561, 48
        %v1585 = vpop.permute.xlu0 %1584
        %vm1594 = vcmask 523648
        %1595 = vst.msk [vmem:[#allocation4] sm:$0xff] %vm1594, %v1571
        %1596 = vst.msk [vmem:[#allocation4 + $0x10] sm:$0xff] %vm1594, %v1573
        %1597 = vst.msk [vmem:[#allocation4 + $0x20] sm:$0xff] %vm1594, %v1575
        %1598 = vst.msk [vmem:[#allocation4 + $0x30] sm:$0xff] %vm1594, %v1577
        %1599 = vst.msk [vmem:[#allocation4 + $0x40] sm:$0xff] %vm1594, %v1579
        %1600 = vst.msk [vmem:[#allocation4 + $0x50] sm:$0xff] %vm1594, %v1581
        %1601 = vst.msk [vmem:[#allocation4 + $0x60] sm:$0xff] %vm1594, %v1583
        %1602 = vst.msk [vmem:[#allocation4 + $0x70] sm:$0xff] %vm1594, %v1585
        %v1603 = vld [vmem:[#allocation3 + $0x5] sm:$0xff]
        %v1604 = vld [vmem:[#allocation3 + $0xd] sm:$0xff]
        %v1605 = vld [vmem:[#allocation3 + $0x15] sm:$0xff]
        %v1606 = vld [vmem:[#allocation3 + $0x1d] sm:$0xff]
        %v1607 = vld [vmem:[#allocation3 + $0x25] sm:$0xff]
        %v1608 = vld [vmem:[#allocation3 + $0x2d] sm:$0xff]
        %v1609 = vld [vmem:[#allocation3 + $0x35] sm:$0xff]
        %v1610 = vld [vmem:[#allocation3 + $0x3d] sm:$0xff]
        %v1611 = vld [vmem:[%s5] sm:$0xff]
        %v1612 = vld [vmem:[%s5 + $0x8] sm:$0xff]
        %v1613 = vld [vmem:[%s5 + $0x10] sm:$0xff]
        %v1614 = vld [vmem:[%s5 + $0x18] sm:$0xff]
        %v1615 = vld [vmem:[%s5 + $0x20] sm:$0xff]
        %v1616 = vld [vmem:[%s5 + $0x28] sm:$0xff]
        %v1617 = vld [vmem:[%s5 + $0x30] sm:$0xff]
        %v1618 = vld [vmem:[%s5 + $0x38] sm:$0xff]
        %1620 = vset.pattern.permute.xlu0 4
        %1621 = vperm.xlu0 %1620, %v1611
        %v1622 = vpop.permute.xlu0 %1621
        %1625 = vset.pattern.permute.xlu0 4
        %1626 = vperm.xlu0 %1625, %v1612
        %v1627 = vpop.permute.xlu0 %1626
        %1630 = vset.pattern.permute.xlu0 4
        %1631 = vperm.xlu0 %1630, %v1613
        %v1632 = vpop.permute.xlu0 %1631
        %1635 = vset.pattern.permute.xlu0 4
        %1636 = vperm.xlu0 %1635, %v1614
        %v1637 = vpop.permute.xlu0 %1636
        %1640 = vset.pattern.permute.xlu0 4
        %1641 = vperm.xlu0 %1640, %v1615
        %v1642 = vpop.permute.xlu0 %1641
        %1645 = vset.pattern.permute.xlu0 4
        %1646 = vperm.xlu0 %1645, %v1616
        %v1647 = vpop.permute.xlu0 %1646
        %1650 = vset.pattern.permute.xlu0 4
        %1651 = vperm.xlu0 %1650, %v1617
        %v1652 = vpop.permute.xlu0 %1651
        %1655 = vset.pattern.permute.xlu0 4
        %1656 = vperm.xlu0 %1655, %v1618
        %v1657 = vpop.permute.xlu0 %1656
        %v1659 = vmul.f32 %v1603, %v1622
        %v1660 = vmul.f32 %v1604, %v1627
        %v1661 = vmul.f32 %v1605, %v1632
        %v1662 = vmul.f32 %v1606, %v1637
        %v1663 = vmul.f32 %v1607, %v1642
        %v1664 = vmul.f32 %v1608, %v1647
        %v1665 = vmul.f32 %v1609, %v1652
        %v1666 = vmul.f32 %v1610, %v1657
        %1675 = vrot.lane.b32.xlu0 %v1659, 64
        %v1676 = vpop.permute.xlu0 %1675
        %1677 = vrot.lane.b32.xlu0 %v1660, 64
        %v1678 = vpop.permute.xlu0 %1677
        %1679 = vrot.lane.b32.xlu0 %v1661, 64
        %v1680 = vpop.permute.xlu0 %1679
        %1681 = vrot.lane.b32.xlu0 %v1662, 64
        %v1682 = vpop.permute.xlu0 %1681
        %1683 = vrot.lane.b32.xlu0 %v1663, 64
        %v1684 = vpop.permute.xlu0 %1683
        %1685 = vrot.lane.b32.xlu0 %v1664, 64
        %v1686 = vpop.permute.xlu0 %1685
        %1687 = vrot.lane.b32.xlu0 %v1665, 64
        %v1688 = vpop.permute.xlu0 %1687
        %1689 = vrot.lane.b32.xlu0 %v1666, 64
        %v1690 = vpop.permute.xlu0 %1689
        %vm1699 = vcmask 654848
        %1700 = vst.msk [vmem:[#allocation4] sm:$0xff] %vm1699, %v1676
        %1701 = vst.msk [vmem:[#allocation4 + $0x10] sm:$0xff] %vm1699, %v1678
        %1702 = vst.msk [vmem:[#allocation4 + $0x20] sm:$0xff] %vm1699, %v1680
        %1703 = vst.msk [vmem:[#allocation4 + $0x30] sm:$0xff] %vm1699, %v1682
        %1704 = vst.msk [vmem:[#allocation4 + $0x40] sm:$0xff] %vm1699, %v1684
        %1705 = vst.msk [vmem:[#allocation4 + $0x50] sm:$0xff] %vm1699, %v1686
        %1706 = vst.msk [vmem:[#allocation4 + $0x60] sm:$0xff] %vm1699, %v1688
        %1707 = vst.msk [vmem:[#allocation4 + $0x70] sm:$0xff] %vm1699, %v1690
        %v1708 = vld [vmem:[#allocation3 + $0x6] sm:$0xff]
        %v1709 = vld [vmem:[#allocation3 + $0xe] sm:$0xff]
        %v1710 = vld [vmem:[#allocation3 + $0x16] sm:$0xff]
        %v1711 = vld [vmem:[#allocation3 + $0x1e] sm:$0xff]
        %v1712 = vld [vmem:[#allocation3 + $0x26] sm:$0xff]
        %v1713 = vld [vmem:[#allocation3 + $0x2e] sm:$0xff]
        %v1714 = vld [vmem:[#allocation3 + $0x36] sm:$0xff]
        %v1715 = vld [vmem:[#allocation3 + $0x3e] sm:$0xff]
        %v1716 = vld [vmem:[%s5] sm:$0xff]
        %v1717 = vld [vmem:[%s5 + $0x8] sm:$0xff]
        %v1718 = vld [vmem:[%s5 + $0x10] sm:$0xff]
        %v1719 = vld [vmem:[%s5 + $0x18] sm:$0xff]
        %v1720 = vld [vmem:[%s5 + $0x20] sm:$0xff]
        %v1721 = vld [vmem:[%s5 + $0x28] sm:$0xff]
        %v1722 = vld [vmem:[%s5 + $0x30] sm:$0xff]
        %v1723 = vld [vmem:[%s5 + $0x38] sm:$0xff]
        %1725 = vset.pattern.permute.xlu0 5
        %1726 = vperm.xlu0 %1725, %v1716
        %v1727 = vpop.permute.xlu0 %1726
        %1730 = vset.pattern.permute.xlu0 5
        %1731 = vperm.xlu0 %1730, %v1717
        %v1732 = vpop.permute.xlu0 %1731
        %1735 = vset.pattern.permute.xlu0 5
        %1736 = vperm.xlu0 %1735, %v1718
        %v1737 = vpop.permute.xlu0 %1736
        %1740 = vset.pattern.permute.xlu0 5
        %1741 = vperm.xlu0 %1740, %v1719
        %v1742 = vpop.permute.xlu0 %1741
        %1745 = vset.pattern.permute.xlu0 5
        %1746 = vperm.xlu0 %1745, %v1720
        %v1747 = vpop.permute.xlu0 %1746
        %1750 = vset.pattern.permute.xlu0 5
        %1751 = vperm.xlu0 %1750, %v1721
        %v1752 = vpop.permute.xlu0 %1751
        %1755 = vset.pattern.permute.xlu0 5
        %1756 = vperm.xlu0 %1755, %v1722
        %v1757 = vpop.permute.xlu0 %1756
        %1760 = vset.pattern.permute.xlu0 5
        %1761 = vperm.xlu0 %1760, %v1723
        %v1762 = vpop.permute.xlu0 %1761
        %v1764 = vmul.f32 %v1708, %v1727
        %v1765 = vmul.f32 %v1709, %v1732
        %v1766 = vmul.f32 %v1710, %v1737
        %v1767 = vmul.f32 %v1711, %v1742
        %v1768 = vmul.f32 %v1712, %v1747
        %v1769 = vmul.f32 %v1713, %v1752
        %v1770 = vmul.f32 %v1714, %v1757
        %v1771 = vmul.f32 %v1715, %v1762
        %1780 = vrot.lane.b32.xlu0 %v1764, 80
        %v1781 = vpop.permute.xlu0 %1780
        %1782 = vrot.lane.b32.xlu0 %v1765, 80
        %v1783 = vpop.permute.xlu0 %1782
        %1784 = vrot.lane.b32.xlu0 %v1766, 80
        %v1785 = vpop.permute.xlu0 %1784
        %1786 = vrot.lane.b32.xlu0 %v1767, 80
        %v1787 = vpop.permute.xlu0 %1786
        %1788 = vrot.lane.b32.xlu0 %v1768, 80
        %v1789 = vpop.permute.xlu0 %1788
        %1790 = vrot.lane.b32.xlu0 %v1769, 80
        %v1791 = vpop.permute.xlu0 %1790
        %1792 = vrot.lane.b32.xlu0 %v1770, 80
        %v1793 = vpop.permute.xlu0 %1792
        %1794 = vrot.lane.b32.xlu0 %v1771, 80
        %v1795 = vpop.permute.xlu0 %1794
        %vm1804 = vcmask 786048
        %1805 = vst.msk [vmem:[#allocation4] sm:$0xff] %vm1804, %v1781
        %1806 = vst.msk [vmem:[#allocation4 + $0x10] sm:$0xff] %vm1804, %v1783
        %1807 = vst.msk [vmem:[#allocation4 + $0x20] sm:$0xff] %vm1804, %v1785
        %1808 = vst.msk [vmem:[#allocation4 + $0x30] sm:$0xff] %vm1804, %v1787
        %1809 = vst.msk [vmem:[#allocation4 + $0x40] sm:$0xff] %vm1804, %v1789
        %1810 = vst.msk [vmem:[#allocation4 + $0x50] sm:$0xff] %vm1804, %v1791
        %1811 = vst.msk [vmem:[#allocation4 + $0x60] sm:$0xff] %vm1804, %v1793
        %1812 = vst.msk [vmem:[#allocation4 + $0x70] sm:$0xff] %vm1804, %v1795
        %v1813 = vld [vmem:[#allocation3 + $0x8] sm:$0xff]
        %v1814 = vld [vmem:[#allocation3 + $0x10] sm:$0xff]
        %v1815 = vld [vmem:[#allocation3 + $0x18] sm:$0xff]
        %v1816 = vld [vmem:[#allocation3 + $0x20] sm:$0xff]
        %v1817 = vld [vmem:[#allocation3 + $0x28] sm:$0xff]
        %v1818 = vld [vmem:[#allocation3 + $0x30] sm:$0xff]
        %v1819 = vld [vmem:[#allocation3 + $0x38] sm:$0xff]
        %v1820 = vld [vmem:[#allocation3 + $0x40] sm:$0xff]
        %v1821 = vld [vmem:[%s5] sm:$0xff]
        %v1822 = vld [vmem:[%s5 + $0x8] sm:$0xff]
        %v1823 = vld [vmem:[%s5 + $0x10] sm:$0xff]
        %v1824 = vld [vmem:[%s5 + $0x18] sm:$0xff]
        %v1825 = vld [vmem:[%s5 + $0x20] sm:$0xff]
        %v1826 = vld [vmem:[%s5 + $0x28] sm:$0xff]
        %v1827 = vld [vmem:[%s5 + $0x30] sm:$0xff]
        %v1828 = vld [vmem:[%s5 + $0x38] sm:$0xff]
        %1830 = vset.pattern.permute.xlu0 6
        %1831 = vperm.xlu0 %1830, %v1821
        %v1832 = vpop.permute.xlu0 %1831
        %1835 = vset.pattern.permute.xlu0 6
        %1836 = vperm.xlu0 %1835, %v1822
        %v1837 = vpop.permute.xlu0 %1836
        %1840 = vset.pattern.permute.xlu0 6
        %1841 = vperm.xlu0 %1840, %v1823
        %v1842 = vpop.permute.xlu0 %1841
        %1845 = vset.pattern.permute.xlu0 6
        %1846 = vperm.xlu0 %1845, %v1824
        %v1847 = vpop.permute.xlu0 %1846
        %1850 = vset.pattern.permute.xlu0 6
        %1851 = vperm.xlu0 %1850, %v1825
        %v1852 = vpop.permute.xlu0 %1851
        %1855 = vset.pattern.permute.xlu0 6
        %1856 = vperm.xlu0 %1855, %v1826
        %v1857 = vpop.permute.xlu0 %1856
        %1860 = vset.pattern.permute.xlu0 6
        %1861 = vperm.xlu0 %1860, %v1827
        %v1862 = vpop.permute.xlu0 %1861
        %1865 = vset.pattern.permute.xlu0 6
        %1866 = vperm.xlu0 %1865, %v1828
        %v1867 = vpop.permute.xlu0 %1866
        %v1869 = vmul.f32 %v1813, %v1832
        %v1870 = vmul.f32 %v1814, %v1837
        %v1871 = vmul.f32 %v1815, %v1842
        %v1872 = vmul.f32 %v1816, %v1847
        %v1873 = vmul.f32 %v1817, %v1852
        %v1874 = vmul.f32 %v1818, %v1857
        %v1875 = vmul.f32 %v1819, %v1862
        %v1876 = vmul.f32 %v1820, %v1867
        %1885 = vrot.lane.b32.xlu0 %v1869, 96
        %v1886 = vpop.permute.xlu0 %1885
        %1887 = vrot.lane.b32.xlu0 %v1870, 96
        %v1888 = vpop.permute.xlu0 %1887
        %1889 = vrot.lane.b32.xlu0 %v1871, 96
        %v1890 = vpop.permute.xlu0 %1889
        %1891 = vrot.lane.b32.xlu0 %v1872, 96
        %v1892 = vpop.permute.xlu0 %1891
        %1893 = vrot.lane.b32.xlu0 %v1873, 96
        %v1894 = vpop.permute.xlu0 %1893
        %1895 = vrot.lane.b32.xlu0 %v1874, 96
        %v1896 = vpop.permute.xlu0 %1895
        %1897 = vrot.lane.b32.xlu0 %v1875, 96
        %v1898 = vpop.permute.xlu0 %1897
        %1899 = vrot.lane.b32.xlu0 %v1876, 96
        %v1900 = vpop.permute.xlu0 %1899
        %vm1909 = vcmask 917248
        %1910 = vst.msk [vmem:[#allocation4] sm:$0xff] %vm1909, %v1886
        %1911 = vst.msk [vmem:[#allocation4 + $0x10] sm:$0xff] %vm1909, %v1888
        %1912 = vst.msk [vmem:[#allocation4 + $0x20] sm:$0xff] %vm1909, %v1890
        %1913 = vst.msk [vmem:[#allocation4 + $0x30] sm:$0xff] %vm1909, %v1892
        %1914 = vst.msk [vmem:[#allocation4 + $0x40] sm:$0xff] %vm1909, %v1894
        %1915 = vst.msk [vmem:[#allocation4 + $0x50] sm:$0xff] %vm1909, %v1896
        %1916 = vst.msk [vmem:[#allocation4 + $0x60] sm:$0xff] %vm1909, %v1898
        %1917 = vst.msk [vmem:[#allocation4 + $0x70] sm:$0xff] %vm1909, %v1900
        %v1918 = vld [vmem:[#allocation3 + $0x9] sm:$0xff]
        %v1919 = vld [vmem:[#allocation3 + $0x11] sm:$0xff]
        %v1920 = vld [vmem:[#allocation3 + $0x19] sm:$0xff]
        %v1921 = vld [vmem:[#allocation3 + $0x21] sm:$0xff]
        %v1922 = vld [vmem:[#allocation3 + $0x29] sm:$0xff]
        %v1923 = vld [vmem:[#allocation3 + $0x31] sm:$0xff]
        %v1924 = vld [vmem:[#allocation3 + $0x39] sm:$0xff]
        %v1925 = vld [vmem:[#allocation3 + $0x41] sm:$0xff]
        %v1926 = vld [vmem:[%s5] sm:$0xff]
        %v1927 = vld [vmem:[%s5 + $0x8] sm:$0xff]
        %v1928 = vld [vmem:[%s5 + $0x10] sm:$0xff]
        %v1929 = vld [vmem:[%s5 + $0x18] sm:$0xff]
        %v1930 = vld [vmem:[%s5 + $0x20] sm:$0xff]
        %v1931 = vld [vmem:[%s5 + $0x28] sm:$0xff]
        %v1932 = vld [vmem:[%s5 + $0x30] sm:$0xff]
        %v1933 = vld [vmem:[%s5 + $0x38] sm:$0xff]
        %1935 = vset.pattern.permute.xlu0 7
        %1936 = vperm.xlu0 %1935, %v1926
        %v1937 = vpop.permute.xlu0 %1936
        %1940 = vset.pattern.permute.xlu0 7
        %1941 = vperm.xlu0 %1940, %v1927
        %v1942 = vpop.permute.xlu0 %1941
        %1945 = vset.pattern.permute.xlu0 7
        %1946 = vperm.xlu0 %1945, %v1928
        %v1947 = vpop.permute.xlu0 %1946
        %1950 = vset.pattern.permute.xlu0 7
        %1951 = vperm.xlu0 %1950, %v1929
        %v1952 = vpop.permute.xlu0 %1951
        %1955 = vset.pattern.permute.xlu0 7
        %1956 = vperm.xlu0 %1955, %v1930
        %v1957 = vpop.permute.xlu0 %1956
        %1960 = vset.pattern.permute.xlu0 7
        %1961 = vperm.xlu0 %1960, %v1931
        %v1962 = vpop.permute.xlu0 %1961
        %1965 = vset.pattern.permute.xlu0 7
        %1966 = vperm.xlu0 %1965, %v1932
        %v1967 = vpop.permute.xlu0 %1966
        %1970 = vset.pattern.permute.xlu0 7
        %1971 = vperm.xlu0 %1970, %v1933
        %v1972 = vpop.permute.xlu0 %1971
        %v1974 = vmul.f32 %v1918, %v1937
        %v1975 = vmul.f32 %v1919, %v1942
        %v1976 = vmul.f32 %v1920, %v1947
        %v1977 = vmul.f32 %v1921, %v1952
        %v1978 = vmul.f32 %v1922, %v1957
        %v1979 = vmul.f32 %v1923, %v1962
        %v1980 = vmul.f32 %v1924, %v1967
        %v1981 = vmul.f32 %v1925, %v1972
        %1990 = vrot.lane.b32.xlu0 %v1974, 112
        %v1991 = vpop.permute.xlu0 %1990
        %1992 = vrot.lane.b32.xlu0 %v1975, 112
        %v1993 = vpop.permute.xlu0 %1992
        %1994 = vrot.lane.b32.xlu0 %v1976, 112
        %v1995 = vpop.permute.xlu0 %1994
        %1996 = vrot.lane.b32.xlu0 %v1977, 112
        %v1997 = vpop.permute.xlu0 %1996
        %1998 = vrot.lane.b32.xlu0 %v1978, 112
        %v1999 = vpop.permute.xlu0 %1998
        %2000 = vrot.lane.b32.xlu0 %v1979, 112
        %v2001 = vpop.permute.xlu0 %2000
        %2002 = vrot.lane.b32.xlu0 %v1980, 112
        %v2003 = vpop.permute.xlu0 %2002
        %2004 = vrot.lane.b32.xlu0 %v1981, 112
        %v2005 = vpop.permute.xlu0 %2004
        %vm2014 = vcmask 1048448
        %2015 = vst.msk [vmem:[#allocation4] sm:$0xff] %vm2014, %v1991
        %2016 = vst.msk [vmem:[#allocation4 + $0x10] sm:$0xff] %vm2014, %v1993
        %2017 = vst.msk [vmem:[#allocation4 + $0x20] sm:$0xff] %vm2014, %v1995
        %2018 = vst.msk [vmem:[#allocation4 + $0x30] sm:$0xff] %vm2014, %v1997
        %2019 = vst.msk [vmem:[#allocation4 + $0x40] sm:$0xff] %vm2014, %v1999
        %2020 = vst.msk [vmem:[#allocation4 + $0x50] sm:$0xff] %vm2014, %v2001
        %2021 = vst.msk [vmem:[#allocation4 + $0x60] sm:$0xff] %vm2014, %v2003
        %2022 = vst.msk [vmem:[#allocation4 + $0x70] sm:$0xff] %vm2014, %v2005
        %v2023 = vld [vmem:[#allocation3 + $0xa] sm:$0xff]
        %v2024 = vld [vmem:[#allocation3 + $0x12] sm:$0xff]
        %v2025 = vld [vmem:[#allocation3 + $0x1a] sm:$0xff]
        %v2026 = vld [vmem:[#allocation3 + $0x22] sm:$0xff]
        %v2027 = vld [vmem:[#allocation3 + $0x2a] sm:$0xff]
        %v2028 = vld [vmem:[#allocation3 + $0x32] sm:$0xff]
        %v2029 = vld [vmem:[#allocation3 + $0x3a] sm:$0xff]
        %v2030 = vld [vmem:[#allocation3 + $0x42] sm:$0xff]
        %v2031 = vld [vmem:[%s5] sm:$0xff]
        %v2032 = vld [vmem:[%s5 + $0x8] sm:$0xff]
        %v2033 = vld [vmem:[%s5 + $0x10] sm:$0xff]
        %v2034 = vld [vmem:[%s5 + $0x18] sm:$0xff]
        %v2035 = vld [vmem:[%s5 + $0x20] sm:$0xff]
        %v2036 = vld [vmem:[%s5 + $0x28] sm:$0xff]
        %v2037 = vld [vmem:[%s5 + $0x30] sm:$0xff]
        %v2038 = vld [vmem:[%s5 + $0x38] sm:$0xff]
        %2040 = vset.pattern.permute.xlu0 8
        %2041 = vperm.xlu0 %2040, %v2031
        %v2042 = vpop.permute.xlu0 %2041
        %2045 = vset.pattern.permute.xlu0 8
        %2046 = vperm.xlu0 %2045, %v2032
        %v2047 = vpop.permute.xlu0 %2046
        %2050 = vset.pattern.permute.xlu0 8
        %2051 = vperm.xlu0 %2050, %v2033
        %v2052 = vpop.permute.xlu0 %2051
        %2055 = vset.pattern.permute.xlu0 8
        %2056 = vperm.xlu0 %2055, %v2034
        %v2057 = vpop.permute.xlu0 %2056
        %2060 = vset.pattern.permute.xlu0 8
        %2061 = vperm.xlu0 %2060, %v2035
        %v2062 = vpop.permute.xlu0 %2061
        %2065 = vset.pattern.permute.xlu0 8
        %2066 = vperm.xlu0 %2065, %v2036
        %v2067 = vpop.permute.xlu0 %2066
        %2070 = vset.pattern.permute.xlu0 8
        %2071 = vperm.xlu0 %2070, %v2037
        %v2072 = vpop.permute.xlu0 %2071
        %2075 = vset.pattern.permute.xlu0 8
        %2076 = vperm.xlu0 %2075, %v2038
        %v2077 = vpop.permute.xlu0 %2076
        %v2079 = vmul.f32 %v2023, %v2042
        %v2080 = vmul.f32 %v2024, %v2047
        %v2081 = vmul.f32 %v2025, %v2052
        %v2082 = vmul.f32 %v2026, %v2057
        %v2083 = vmul.f32 %v2027, %v2062
        %v2084 = vmul.f32 %v2028, %v2067
        %v2085 = vmul.f32 %v2029, %v2072
        %v2086 = vmul.f32 %v2030, %v2077
        %2087 = vst.msk [vmem:[#allocation4 + $0x8] sm:$0xff] %vm1092, %v2079
        %2088 = vst.msk [vmem:[#allocation4 + $0x18] sm:$0xff] %vm1092, %v2080
        %2089 = vst.msk [vmem:[#allocation4 + $0x28] sm:$0xff] %vm1092, %v2081
        %2090 = vst.msk [vmem:[#allocation4 + $0x38] sm:$0xff] %vm1092, %v2082
        %2091 = vst.msk [vmem:[#allocation4 + $0x48] sm:$0xff] %vm1092, %v2083
        %2092 = vst.msk [vmem:[#allocation4 + $0x58] sm:$0xff] %vm1092, %v2084
        %2093 = vst.msk [vmem:[#allocation4 + $0x68] sm:$0xff] %vm1092, %v2085
        %2094 = vst.msk [vmem:[#allocation4 + $0x78] sm:$0xff] %vm1092, %v2086
        %v2095 = vld [vmem:[#allocation4] sm:$0xff]
        %v2096 = vld [vmem:[#allocation4 + $0x8] sm:$0xff]
        %v2097 = vld [vmem:[#allocation4 + $0x10] sm:$0xff]
        %v2098 = vld [vmem:[#allocation4 + $0x18] sm:$0xff]
        %v2099 = vld [vmem:[#allocation4 + $0x20] sm:$0xff]
        %v2100 = vld [vmem:[#allocation4 + $0x28] sm:$0xff]
        %v2101 = vld [vmem:[#allocation4 + $0x30] sm:$0xff]
        %v2102 = vld [vmem:[#allocation4 + $0x38] sm:$0xff]
        %v2103 = vld [vmem:[#allocation4 + $0x40] sm:$0xff]
        %v2104 = vld [vmem:[#allocation4 + $0x48] sm:$0xff]
        %v2105 = vld [vmem:[#allocation4 + $0x50] sm:$0xff]
        %v2106 = vld [vmem:[#allocation4 + $0x58] sm:$0xff]
        %v2107 = vld [vmem:[#allocation4 + $0x60] sm:$0xff]
        %v2108 = vld [vmem:[#allocation4 + $0x68] sm:$0xff]
        %v2109 = vld [vmem:[#allocation4 + $0x70] sm:$0xff]
        %v2110 = vld [vmem:[#allocation4 + $0x78] sm:$0xff]
        %v2111 = vld [vmem:[%s3] sm:$0x3]
        %v2113 = vlaneseq
        %v2114 = vshrl.u32 %v2113, 7
        %v2115 = vsub.s32 0, %v2114
        %v2116 = vrot.slane %v2111, %v2115
        %v2117 = vlaneseq
        %v2118 = vshrl.u32 %v2117, 7
        %v2119 = vsub.s32 1, %v2118
        %v2120 = vrot.slane %v2111, %v2119
        %v2123 = vmul.f32 %v2095, %v2116
        %v2124 = vmul.f32 %v2096, %v2120
        %v2125 = vmul.f32 %v2097, %v2116
        %v2126 = vmul.f32 %v2098, %v2120
        %v2127 = vmul.f32 %v2099, %v2116
        %v2128 = vmul.f32 %v2100, %v2120
        %v2129 = vmul.f32 %v2101, %v2116
        %v2130 = vmul.f32 %v2102, %v2120
        %v2131 = vmul.f32 %v2103, %v2116
        %v2132 = vmul.f32 %v2104, %v2120
        %v2133 = vmul.f32 %v2105, %v2116
        %v2134 = vmul.f32 %v2106, %v2120
        %v2135 = vmul.f32 %v2107, %v2116
        %v2136 = vmul.f32 %v2108, %v2120
        %v2137 = vmul.f32 %v2109, %v2116
        %v2138 = vmul.f32 %v2110, %v2120
        %v2139 = vsel %vm1092, %v2124, 0.0
        %v2140 = vadd.f32 %v2123, %v2139
        %2141 = vadd.xlane.f32.xlu0 %v2140
        %v2142 = vpop.xlane.xlu0 %2141
        %v2143 = vsel %vm1092, %v2126, 0.0
        %v2144 = vadd.f32 %v2125, %v2143
        %2145 = vadd.xlane.f32.xlu0 %v2144
        %v2146 = vpop.xlane.xlu0 %2145
        %v2147 = vsel %vm1092, %v2128, 0.0
        %v2148 = vadd.f32 %v2127, %v2147
        %2149 = vadd.xlane.f32.xlu0 %v2148
        %v2150 = vpop.xlane.xlu0 %2149
        %v2151 = vsel %vm1092, %v2130, 0.0
        %v2152 = vadd.f32 %v2129, %v2151
        %2153 = vadd.xlane.f32.xlu0 %v2152
        %v2154 = vpop.xlane.xlu0 %2153
        %v2155 = vsel %vm1092, %v2132, 0.0
        %v2156 = vadd.f32 %v2131, %v2155
        %2157 = vadd.xlane.f32.xlu0 %v2156
        %v2158 = vpop.xlane.xlu0 %2157
        %v2159 = vsel %vm1092, %v2134, 0.0
        %v2160 = vadd.f32 %v2133, %v2159
        %2161 = vadd.xlane.f32.xlu0 %v2160
        %v2162 = vpop.xlane.xlu0 %2161
        %v2163 = vsel %vm1092, %v2136, 0.0
        %v2164 = vadd.f32 %v2135, %v2163
        %2165 = vadd.xlane.f32.xlu0 %v2164
        %v2166 = vpop.xlane.xlu0 %2165
        %v2167 = vsel %vm1092, %v2138, 0.0
        %v2168 = vadd.f32 %v2137, %v2167
        %2169 = vadd.xlane.f32.xlu0 %v2168
        %v2170 = vpop.xlane.xlu0 %2169
        %v2171 = vld [vmem:[#allocation5] sm:$0x1]
        %v2173 = vlaneseq
        %v2174 = vshrl.u32 %v2173, 7
        %v2175 = vsub.s32 0, %v2174
        %v2176 = vrot.slane %v2171, %v2175
        %v2178 = vadd.f32 %v2142, %v2176
        %v2179 = vadd.f32 %v2146, %v2176
        %v2180 = vadd.f32 %v2150, %v2176
        %v2181 = vadd.f32 %v2154, %v2176
        %v2182 = vadd.f32 %v2158, %v2176
        %v2183 = vadd.f32 %v2162, %v2176
        %v2184 = vadd.f32 %v2166, %v2176
        %v2185 = vadd.f32 %v2170, %v2176
        %vm2186 = vcmask 7168
        %2187 = vst.msk [vmem:[%s291] sm:$0xff] %vm2186, %v2178
        %2188 = vst.msk [vmem:[%s291 + $0x8] sm:$0xff] %vm2186, %v2179
        %2189 = vst.msk [vmem:[%s291 + $0x10] sm:$0xff] %vm2186, %v2180
        %2190 = vst.msk [vmem:[%s291 + $0x18] sm:$0xff] %vm2186, %v2181
        %2191 = vst.msk [vmem:[%s291 + $0x20] sm:$0xff] %vm2186, %v2182
        %2192 = vst.msk [vmem:[%s291 + $0x28] sm:$0xff] %vm2186, %v2183
        %2193 = vst.msk [vmem:[%s291 + $0x30] sm:$0xff] %vm2186, %v2184
        %2194 = vst.msk [vmem:[%s291 + $0x38] sm:$0xff] %vm2186, %v2185
        %s2195 = sand.u32 %s163, 1
        %s2196 = scalar_lea.sflag [#allocation7], %s2195
        %s2197 = sand.u32 %s163, 1
        %s2198 = smul.addr %s2197, 64
        %s2199 = scalar_lea.vmem [#allocation6], %s2198
        %p2200 = scmp.lt.s32.totalorder %s24, 1
        %s2201 = scalar_select %p2200, %s24, 1
        %s2202 = smul.addr %s2201, 8
        %s2203 = smul.addr %s2202, 8
        %s2204 = scalar_lea.vmem %s7, %s2203
        // Predicated region
        $region45: #{_lambda_.3} parent=43 // pred_check
          %p2205 = pneg %p173
        $region46: #{_lambda_.3} parent=43 // pred_check_branch
          %2207 = sbr.rel (%p2205) target = $region48
        $region47: #{_lambda_.3} parent=43 // pred_region
          %s2209 = ssub.s32 1024, 1024
          %2210 = vsyncadd %s2196, %s2209
          %s2211 = smul.addr %s24, 8
          %s2212 = smul.addr %s2211, 128
          %s2213 = scalar_lea.hbm %s6, %s2212
          %s2214 = sshll.u32 %s2199, 4
          %s2215 = int_to_ptr.vmem [resolvable:$true] %s2214
          %2220 = dma.vmem_to_hbm [thread:$0]  %s2215, 1024, %s2213, %s2196, 128, 128, 8
        $region48: #{_lambda_.3} parent=43 // pred_fallthru
          _
        // Predicated region
        $region49: #{_lambda_.3} parent=43 // pred_check
          %p2221 = pneg %p199
        $region50: #{_lambda_.3} parent=43 // pred_check_branch
          %2223 = sbr.rel (%p2221) target = $region52
        $region51: #{_lambda_.3} parent=43 // pred_region
          _
        $region52: #{_lambda_.3} parent=43 // pred_fallthru
          _
      $region44: #{_lambda_.3} parent=5 // pred_fallthru
        _
      %p2224 = scmp.le.s32.totalorder 2, %s19
      // Predicated region
      $region53: #{_lambda_.3} parent=5 // pred_check
        %p2225 = pneg %p2224
      $region54: #{_lambda_.3} parent=5 // pred_check_branch
        %2227 = sbr.rel (%p2225) target = $region56
      $region55: #{_lambda_.3} parent=5 // pred_region
        %s2228 = ssub.s32 %s19, 2
        // Predicated region
        $region57: #{_lambda_.3} parent=55 // pred_check
          %p2229 = pneg %p179
        $region58: #{_lambda_.3} parent=55 // pred_check_branch
          %2231 = sbr.rel (%p2229) target = $region60
        $region59: #{_lambda_.3} parent=55 // pred_region
          %s2232 = sand.u32 %s164, 1
          %s2233 = scalar_lea.sflag [#allocation7], %s2232
          %s2234 = sand.u32 %s164, 1
          %s2235 = smul.addr %s2234, 64
          %s2236 = scalar_lea.vmem [#allocation6], %s2235
          %2237 = dma.done %s2233, 1024
        $region60: #{_lambda_.3} parent=55 // pred_fallthru
          _
        // Predicated region
        $region61: #{_lambda_.3} parent=55 // pred_check
          %p2238 = pneg %p205
        $region62: #{_lambda_.3} parent=55 // pred_check_branch
          %2240 = sbr.rel (%p2238) target = $region64
        $region63: #{_lambda_.3} parent=55 // pred_region
          %p2241 = scmp.lt.s32.totalorder %s25, 1
          %s2242 = scalar_select %p2241, %s25, 1
          %s2243 = smul.addr %s2242, 8
          %s2244 = smul.addr %s2243, 8
          %s2245 = scalar_lea.vmem %s7, %s2244
        $region64: #{_lambda_.3} parent=55 // pred_fallthru
          _
      $region56: #{_lambda_.3} parent=5 // pred_fallthru
        _
    $region6: #{_lambda_.3} parent=1 // loop_footer
      %s23 = sadd.s32 1, %s19
    $region7: #{_lambda_.3} parent=1 // loop_footer_branch
      %18 = sbr.rel target = $region3
    $region8: #{_lambda_.3} parent=1 // loop_exit
      _
    %2246 = vsyncpa [#allocation7], 1
    %s2247 = scalar_lea.sflag [#allocation7], 1
    %2248 = vsyncpa %s2247, 1

</llo_original>
